<compile_context>
chip_gen: v5e
topology: v5e:2x2
jax: 0.10.0
libtpu: 0.0.40
codegen_flags: <defaults>
</compile_context>

<pallas_src>
import jax
import jax.numpy as jnp
from jax import lax
from jax.experimental import pallas as pl
from jax.experimental.pallas import tpu as pltpu

NUM_LAYER = 2
HIDDEN = 32
C_IN = 31
C_OUT = 64
K = 9
PAD = 4
L = 120                    # forced by nn.Linear(7680, hidden): 7680 = 64 * 120
LP = L + 2 * PAD           # 128 -- exactly one vreg of lanes
C_IN_PAD = 32              # 31 input channels padded to a sublane multiple of 8
B = 2


# --------------------- fused conv stack (all layers, ReLU fused) ---------------------
def make_conv_stack_kernel(num_layer):
    """Kernel refs: x, (w, b) * num_layer, out, cols_scratch, hpad_scratch."""

    def kernel(*refs):
        x_ref = refs[0]
        layers = [(refs[1 + 2 * i], refs[2 + 2 * i]) for i in range(num_layer)]
        o_ref = refs[1 + 2 * num_layer]
        cols_ref = refs[2 + 2 * num_layer]     # (max K*cin_pad, LP) im2col workspace
        hpad_ref = refs[3 + 2 * num_layer]     # (C_OUT, LP) re-padded activation

        bsz = x_ref.shape[0]
        # Zero once: only [:, PAD:PAD+L] is ever overwritten afterwards, so the
        # halo lanes stay zero for every sample / layer ('same' conv padding).
        hpad_ref[...] = jnp.zeros_like(hpad_ref)

        for b in range(bsz):                      # B=2: static unroll
            h = x_ref[b]                          # (cin_pad0, LP)
            for li, (w_ref, b_ref) in enumerate(layers):
                cin = w_ref.shape[1] // K         # padded input channels (32 or 64)
                # im2col: rows [k*cin:(k+1)*cin] hold the k-shifted window.
                for k in range(K):
                    cols_ref[k * cin:(k + 1) * cin, 0:L] = h[:, k:k + L]
                acc = jnp.dot(w_ref[...], cols_ref[0:K * cin, 0:L],
                              preferred_element_type=jnp.float32)
                act = jnp.maximum(acc + b_ref[...], 0.0)     # (C_OUT, L)
                if li + 1 < num_layer:
                    hpad_ref[:, PAD:PAD + L] = act           # re-pad for next layer
                    h = hpad_ref[...]                        # (C_OUT, LP)
                else:
                    o_ref[b] = act

    return kernel


def conv_stack(xp, conv_params):
    """xp: (B, C_IN_PAD, LP) f32; conv_params: [(w_im2col (Cout, K*cin_pad), b (Cout,1)), ...]."""
    bsz = xp.shape[0]
    cout = conv_params[0][0].shape[0]
    args = [xp]
    for (w, b) in conv_params:
        args += [w, b]
    in_specs = [pl.BlockSpec(a.shape, lambda i, n=a.ndim: (0,) * n) for a in args]
    cols_rows = max(w.shape[1] for (w, _) in conv_params)
    return pl.pallas_call(
        make_conv_stack_kernel(len(conv_params)),
        out_shape=jax.ShapeDtypeStruct((bsz, cout, L), jnp.float32),
        grid=(1,),
        in_specs=in_specs,
        out_specs=pl.BlockSpec((bsz, cout, L), lambda i: (0, 0, 0)),
        scratch_shapes=[pltpu.VMEM((cols_rows, LP), jnp.float32),
                        pltpu.VMEM((cout, LP), jnp.float32)],
        compiler_params=pltpu.CompilerParams(dimension_semantics=("arbitrary",)),
    )(*args)


# --------------------- MLP head: l1 -> relu -> l2 -> tanh -> l3 ----------------------
def mlp_kernel(x_ref, w1_ref, b1_ref, w2t_ref, b2_ref, w3_ref, b3_ref, o_ref):
    # x: (B, 7680); w1: (HIDDEN, 7680) torch orientation -> contract dim 1 of both.
    h = lax.dot_general(x_ref[...], w1_ref[...],
                        dimension_numbers=(((1,), (1,)), ((), ())),
                        preferred_element_type=jnp.float32) + b1_ref[...]
    h = jnp.maximum(h, 0.0)
    h = jnp.dot(h, w2t_ref[...], preferred_element_type=jnp.float32) + b2_ref[...]
    h = jnp.tanh(h)
    # l3 has a single output feature: elementwise mul + lane reduction.
    o_ref[...] = jnp.sum(h * w3_ref[...], axis=-1, keepdims=True) + b3_ref[...]


def mlp_head(x_flat, w1, b1, w2t, b2, w3, b3):
    bsz = x_flat.shape[0]
    args = (x_flat, w1, b1, w2t, b2, w3, b3)
    in_specs = [pl.BlockSpec(a.shape, lambda i, n=a.ndim: (0,) * n) for a in args]
    return pl.pallas_call(
        mlp_kernel,
        out_shape=jax.ShapeDtypeStruct((bsz, 1), jnp.float32),
        grid=(1,),
        in_specs=in_specs,
        out_specs=pl.BlockSpec((bsz, 1), lambda i: (0, 0)),
        compiler_params=pltpu.CompilerParams(dimension_semantics=("arbitrary",)),
    )(*args)


# --------------------------------- full forward --------------------------------------
@jax.jit
def cnn_forward(x, prep):
    """x: (B, 31, 120) NCL float32; prep: output of prepare_params. Returns (out, x1)."""
    xp = jnp.pad(x, ((0, 0), (0, C_IN_PAD - C_IN), (PAD, PAD)))   # (B, 32, 128)
    x1 = conv_stack(xp, prep["convs"])                            # (B, 64, 120)
    flat = x1.reshape(x1.shape[0], C_OUT * L)                     # contiguous -> free reshape
    out = mlp_head(flat, prep["w1"], prep["b1"], prep["w2t"], prep["b2"],
                   prep["w3"], prep["b3"])
    return out, x1


# ------------------------- one-time weight re-layout (outside jit) --------------------
def prepare_params(params):
    convs = []
    for (w, b) in params["convs"]:
        cout, cin, k = w.shape
        cin_pad = -(-cin // 8) * 8                     # 31 -> 32, 64 -> 64
        wp = jnp.pad(w, ((0, 0), (0, cin_pad - cin), (0, 0)))
        # (Cout, Cin, K) -> (Cout, K, Cin) -> (Cout, K*Cin): k-major, cin-minor,
        # matching the in-kernel im2col row order.
        w_im = jnp.transpose(wp, (0, 2, 1)).reshape(cout, k * cin_pad)
        convs.append((w_im, b.reshape(cout, 1)))
    (w1, b1), (w2, b2), (w3, b3) = params["l1"], params["l2"], params["l3"]
    return {
        "convs": convs,
        "w1": w1,                       # torch (HIDDEN, 7680), lane-dense, no transpose
        "b1": b1.reshape(1, HIDDEN),
        "w2t": w2.T,                    # tiny (32, 32)
        "b2": b2.reshape(1, HIDDEN),
        "w3": w3.reshape(1, HIDDEN),
        "b3": b3.reshape(1, 1),
    }


# ----------------------------- deterministic init (xavier_normal, bias=0.01) ----------
def xavier_normal(key, shape, fan_in, fan_out):
    std = (2.0 / (fan_in + fan_out)) ** 0.5
    return std * jax.random.normal(key, shape, dtype=jnp.float32)


def init_params(key):
    keys = jax.random.split(key, NUM_LAYER + 3)
    convs = []
    w = xavier_normal(keys[0], (C_OUT, C_IN, K), fan_in=C_IN * K, fan_out=C_OUT * K)
    convs.append((w, jnp.full((C_OUT,), 0.01, jnp.float32)))
    for i in range(1, NUM_LAYER):
        w = xavier_normal(keys[i], (C_OUT, C_OUT, K), fan_in=C_OUT * K, fan_out=C_OUT * K)
        convs.append((w, jnp.full((C_OUT,), 0.01, jnp.float32)))
    d_flat = C_OUT * L  # 7680
    l1 = (xavier_normal(keys[NUM_LAYER + 0], (HIDDEN, d_flat), d_flat, HIDDEN),
          jnp.full((HIDDEN,), 0.01, jnp.float32))
    l2 = (xavier_normal(keys[NUM_LAYER + 1], (HIDDEN, HIDDEN), HIDDEN, HIDDEN),
          jnp.full((HIDDEN,), 0.01, jnp.float32))
    l3 = (xavier_normal(keys[NUM_LAYER + 2], (1, HIDDEN), HIDDEN, 1),
          jnp.full((1,), 0.01, jnp.float32))
    return {"convs": convs, "l1": l1, "l2": l2, "l3": l3}


# ----------------------------- pure-JAX reference (correctness check) -----------------
def reference_forward(x, params):
    h = x
    for (w, b) in params["convs"]:
        hp = jnp.pad(h, ((0, 0), (0, 0), (PAD, PAD)))
        taps = jnp.stack([hp[:, :, k:k + L] for k in range(K)], axis=2)   # (B, Cin, K, L)
        h = jnp.einsum("bckl,ock->bol", taps, w,
                       precision=lax.Precision.HIGHEST) + b[None, :, None]
        h = jnp.maximum(h, 0.0)
    x1 = h
    f = h.reshape(h.shape[0], -1)
    (w1, b1), (w2, b2), (w3, b3) = params["l1"], params["l2"], params["l3"]
    f = jnp.maximum(jnp.dot(f, w1.T, precision=lax.Precision.HIGHEST) + b1, 0.0)
    f = jnp.tanh(jnp.dot(f, w2.T, precision=lax.Precision.HIGHEST) + b2)
    f = jnp.dot(f, w3.T, precision=lax.Precision.HIGHEST) + b3
    return f, x1


if __name__ == "__main__":
    root = jax.random.PRNGKey(0)
    k_param, k_x = jax.random.split(root)
    params = init_params(k_param)
    prep = prepare_params(params)
    x = jax.random.normal(k_x, (B, C_IN, L), dtype=jnp.float32)   # NCL, like torch Conv1d

    out, x1 = cnn_forward(x, prep)
    jax.block_until_ready((out, x1))

    assert out.shape == (B, 1)
    assert x1.shape == (B, C_OUT, L)

    ref_out, ref_x1 = reference_forward(x, params)
    assert jnp.allclose(x1, ref_x1, rtol=5e-3, atol=5e-3), "conv stack mismatch"
    assert jnp.allclose(out, ref_out, rtol=5e-3, atol=5e-3), "mlp head mismatch"

    print("KERNEL_OK")
</pallas_src>

<mosaic_0001>
module attributes {stable_mosaic.version = 11 : i64} {
  func.func @kernel(%arg0: i32, %arg1: memref<2x32x128xf32, #tpu.memory_space<vmem>>, %arg2: memref<64x288xf32, #tpu.memory_space<vmem>>, %arg3: memref<64x1xf32, #tpu.memory_space<vmem>>, %arg4: memref<64x576xf32, #tpu.memory_space<vmem>>, %arg5: memref<64x1xf32, #tpu.memory_space<vmem>>, %arg6: memref<2x64x120xf32, #tpu.memory_space<vmem>>, %arg7: memref<576x128xf32, #tpu.memory_space<vmem>>, %arg8: memref<64x128xf32, #tpu.memory_space<vmem>>) attributes {dimension_semantics = [#tpu.dimension_semantics<arbitrary>], iteration_bounds = array<i64: 1>, scalar_prefetch = 0 : i64, scratch_operands = 2 : i64, tpu.core_type = #tpu.core_type<tc>, window_params = [{pipeline_mode = #tpu.pipeline_mode<synchronous>, transform_indices = @transform_0, window_bounds = array<i64: 2, 32, 128>}, {pipeline_mode = #tpu.pipeline_mode<synchronous>, transform_indices = @transform_1, window_bounds = array<i64: 64, 288>}, {pipeline_mode = #tpu.pipeline_mode<synchronous>, transform_indices = @transform_2, window_bounds = array<i64: 64, 1>}, {pipeline_mode = #tpu.pipeline_mode<synchronous>, transform_indices = @transform_3, window_bounds = array<i64: 64, 576>}, {pipeline_mode = #tpu.pipeline_mode<synchronous>, transform_indices = @transform_4, window_bounds = array<i64: 64, 1>}, {pipeline_mode = #tpu.pipeline_mode<synchronous>, transform_indices = @transform_5, window_bounds = array<i64: 2, 64, 120>}]} {
    %cst = arith.constant 0.000000e+00 : f32
    %0 = vector.broadcast %cst : f32 to vector<64x128xf32>
    %c0 = arith.constant 0 : index
    %c0_0 = arith.constant 0 : index
    %1 = vector.load %arg8[%c0, %c0_0] : memref<64x128xf32, #tpu.memory_space<vmem>>, vector<64x128xf32>
    tpu.vector_store %arg8[%c0, %c0_0], %0 {strides = array<i32>} : memref<64x128xf32, #tpu.memory_space<vmem>>, vector<64x128xf32>,
    %c0_1 = arith.constant 0 : index
    %c0_2 = arith.constant 0 : index
    %c0_3 = arith.constant 0 : index
    %2 = vector.load %arg1[%c0_1, %c0_2, %c0_3] : memref<2x32x128xf32, #tpu.memory_space<vmem>>, vector<1x32x128xf32>
    %3 = vector.shape_cast %2 : vector<1x32x128xf32> to vector<32x128xf32>
    %4 = vector.extract_strided_slice %3 {offsets = [0, 0], sizes = [32, 120], strides = [1, 1]} : vector<32x128xf32> to vector<32x120xf32>
    %c0_4 = arith.constant 0 : index
    %c0_5 = arith.constant 0 : index
    %5 = vector.load %arg7[%c0_4, %c0_5] : memref<576x128xf32, #tpu.memory_space<vmem>>, vector<32x120xf32>
    tpu.vector_store %arg7[%c0_4, %c0_5], %4 {strides = array<i32>} : memref<576x128xf32, #tpu.memory_space<vmem>>, vector<32x120xf32>,
    %6 = vector.extract_strided_slice %3 {offsets = [0, 1], sizes = [32, 120], strides = [1, 1]} : vector<32x128xf32> to vector<32x120xf32>
    %c32 = arith.constant 32 : index
    %c0_6 = arith.constant 0 : index
    %7 = vector.load %arg7[%c32, %c0_6] : memref<576x128xf32, #tpu.memory_space<vmem>>, vector<32x120xf32>
    tpu.vector_store %arg7[%c32, %c0_6], %6 {strides = array<i32>} : memref<576x128xf32, #tpu.memory_space<vmem>>, vector<32x120xf32>,
    %8 = vector.extract_strided_slice %3 {offsets = [0, 2], sizes = [32, 120], strides = [1, 1]} : vector<32x128xf32> to vector<32x120xf32>
    %c64 = arith.constant 64 : index
    %c0_7 = arith.constant 0 : index
    %9 = vector.load %arg7[%c64, %c0_7] : memref<576x128xf32, #tpu.memory_space<vmem>>, vector<32x120xf32>
    tpu.vector_store %arg7[%c64, %c0_7], %8 {strides = array<i32>} : memref<576x128xf32, #tpu.memory_space<vmem>>, vector<32x120xf32>,
    %10 = vector.extract_strided_slice %3 {offsets = [0, 3], sizes = [32, 120], strides = [1, 1]} : vector<32x128xf32> to vector<32x120xf32>
    %c96 = arith.constant 96 : index
    %c0_8 = arith.constant 0 : index
    %11 = vector.load %arg7[%c96, %c0_8] : memref<576x128xf32, #tpu.memory_space<vmem>>, vector<32x120xf32>
    tpu.vector_store %arg7[%c96, %c0_8], %10 {strides = array<i32>} : memref<576x128xf32, #tpu.memory_space<vmem>>, vector<32x120xf32>,
    %12 = vector.extract_strided_slice %3 {offsets = [0, 4], sizes = [32, 120], strides = [1, 1]} : vector<32x128xf32> to vector<32x120xf32>
    %c128 = arith.constant 128 : index
    %c0_9 = arith.constant 0 : index
    %13 = vector.load %arg7[%c128, %c0_9] : memref<576x128xf32, #tpu.memory_space<vmem>>, vector<32x120xf32>
    tpu.vector_store %arg7[%c128, %c0_9], %12 {strides = array<i32>} : memref<576x128xf32, #tpu.memory_space<vmem>>, vector<32x120xf32>,
    %14 = vector.extract_strided_slice %3 {offsets = [0, 5], sizes = [32, 120], strides = [1, 1]} : vector<32x128xf32> to vector<32x120xf32>
    %c160 = arith.constant 160 : index
    %c0_10 = arith.constant 0 : index
    %15 = vector.load %arg7[%c160, %c0_10] : memref<576x128xf32, #tpu.memory_space<vmem>>, vector<32x120xf32>
    tpu.vector_store %arg7[%c160, %c0_10], %14 {strides = array<i32>} : memref<576x128xf32, #tpu.memory_space<vmem>>, vector<32x120xf32>,
    %16 = vector.extract_strided_slice %3 {offsets = [0, 6], sizes = [32, 120], strides = [1, 1]} : vector<32x128xf32> to vector<32x120xf32>
    %c192 = arith.constant 192 : index
    %c0_11 = arith.constant 0 : index
    %17 = vector.load %arg7[%c192, %c0_11] : memref<576x128xf32, #tpu.memory_space<vmem>>, vector<32x120xf32>
    tpu.vector_store %arg7[%c192, %c0_11], %16 {strides = array<i32>} : memref<576x128xf32, #tpu.memory_space<vmem>>, vector<32x120xf32>,
    %18 = vector.extract_strided_slice %3 {offsets = [0, 7], sizes = [32, 120], strides = [1, 1]} : vector<32x128xf32> to vector<32x120xf32>
    %c224 = arith.constant 224 : index
    %c0_12 = arith.constant 0 : index
    %19 = vector.load %arg7[%c224, %c0_12] : memref<576x128xf32, #tpu.memory_space<vmem>>, vector<32x120xf32>
    tpu.vector_store %arg7[%c224, %c0_12], %18 {strides = array<i32>} : memref<576x128xf32, #tpu.memory_space<vmem>>, vector<32x120xf32>,
    %20 = vector.extract_strided_slice %3 {offsets = [0, 8], sizes = [32, 120], strides = [1, 1]} : vector<32x128xf32> to vector<32x120xf32>
    %c256 = arith.constant 256 : index
    %c0_13 = arith.constant 0 : index
    %21 = vector.load %arg7[%c256, %c0_13] : memref<576x128xf32, #tpu.memory_space<vmem>>, vector<32x120xf32>
    tpu.vector_store %arg7[%c256, %c0_13], %20 {strides = array<i32>} : memref<576x128xf32, #tpu.memory_space<vmem>>, vector<32x120xf32>,
    %c0_14 = arith.constant 0 : index
    %c0_15 = arith.constant 0 : index
    %22 = vector.load %arg2[%c0_14, %c0_15] : memref<64x288xf32, #tpu.memory_space<vmem>>, vector<64x288xf32>
    %c0_16 = arith.constant 0 : index
    %c0_17 = arith.constant 0 : index
    %23 = vector.load %arg7[%c0_16, %c0_17] : memref<576x128xf32, #tpu.memory_space<vmem>>, vector<288x120xf32>
    %cst_18 = arith.constant dense<0.000000e+00> : vector<64x120xf32>
    %24 = tpu.matmul %22, %23, %cst_18 {dimension_numbers = #tpu.dot_dimension_numbers<[1], [0], [0], [1], [0, 0, 1, 1], [], []>} : vector<64x288xf32>, vector<288x120xf32>, vector<64x120xf32> -> vector<64x120xf32>
    %c0_19 = arith.constant 0 : index
    %c0_20 = arith.constant 0 : index
    %25 = vector.load %arg3[%c0_19, %c0_20] : memref<64x1xf32, #tpu.memory_space<vmem>>, vector<64x1xf32>
    %26 = vector.broadcast %25 : vector<64x1xf32> to vector<64x120xf32>
    %27 = arith.addf %24, %26 : vector<64x120xf32>
    %cst_21 = arith.constant 0.000000e+00 : f32
    %28 = vector.broadcast %cst_21 : f32 to vector<64x120xf32>
    %29 = arith.maximumf %27, %28 : vector<64x120xf32>
    %c0_22 = arith.constant 0 : index
    %c4 = arith.constant 4 : index
    %30 = vector.load %arg8[%c0_22, %c4] : memref<64x128xf32, #tpu.memory_space<vmem>>, vector<64x120xf32>
    tpu.vector_store %arg8[%c0_22, %c4], %29 {strides = array<i32>} : memref<64x128xf32, #tpu.memory_space<vmem>>, vector<64x120xf32>,
    %c0_23 = arith.constant 0 : index
    %c0_24 = arith.constant 0 : index
    %31 = vector.load %arg8[%c0_23, %c0_24] : memref<64x128xf32, #tpu.memory_space<vmem>>, vector<64x128xf32>
    %32 = vector.extract_strided_slice %31 {offsets = [0, 0], sizes = [64, 120], strides = [1, 1]} : vector<64x128xf32> to vector<64x120xf32>
    %c0_25 = arith.constant 0 : index
    %c0_26 = arith.constant 0 : index
    %33 = vector.load %arg7[%c0_25, %c0_26] : memref<576x128xf32, #tpu.memory_space<vmem>>, vector<64x120xf32>
    tpu.vector_store %arg7[%c0_25, %c0_26], %32 {strides = array<i32>} : memref<576x128xf32, #tpu.memory_space<vmem>>, vector<64x120xf32>,
    %34 = vector.extract_strided_slice %31 {offsets = [0, 1], sizes = [64, 120], strides = [1, 1]} : vector<64x128xf32> to vector<64x120xf32>
    %c64_27 = arith.constant 64 : index
    %c0_28 = arith.constant 0 : index
    %35 = vector.load %arg7[%c64_27, %c0_28] : memref<576x128xf32, #tpu.memory_space<vmem>>, vector<64x120xf32>
    tpu.vector_store %arg7[%c64_27, %c0_28], %34 {strides = array<i32>} : memref<576x128xf32, #tpu.memory_space<vmem>>, vector<64x120xf32>,
    %36 = vector.extract_strided_slice %31 {offsets = [0, 2], sizes = [64, 120], strides = [1, 1]} : vector<64x128xf32> to vector<64x120xf32>
    %c128_29 = arith.constant 128 : index
    %c0_30 = arith.constant 0 : index
    %37 = vector.load %arg7[%c128_29, %c0_30] : memref<576x128xf32, #tpu.memory_space<vmem>>, vector<64x120xf32>
    tpu.vector_store %arg7[%c128_29, %c0_30], %36 {strides = array<i32>} : memref<576x128xf32, #tpu.memory_space<vmem>>, vector<64x120xf32>,
    %38 = vector.extract_strided_slice %31 {offsets = [0, 3], sizes = [64, 120], strides = [1, 1]} : vector<64x128xf32> to vector<64x120xf32>
    %c192_31 = arith.constant 192 : index
    %c0_32 = arith.constant 0 : index
    %39 = vector.load %arg7[%c192_31, %c0_32] : memref<576x128xf32, #tpu.memory_space<vmem>>, vector<64x120xf32>
    tpu.vector_store %arg7[%c192_31, %c0_32], %38 {strides = array<i32>} : memref<576x128xf32, #tpu.memory_space<vmem>>, vector<64x120xf32>,
    %40 = vector.extract_strided_slice %31 {offsets = [0, 4], sizes = [64, 120], strides = [1, 1]} : vector<64x128xf32> to vector<64x120xf32>
    %c256_33 = arith.constant 256 : index
    %c0_34 = arith.constant 0 : index
    %41 = vector.load %arg7[%c256_33, %c0_34] : memref<576x128xf32, #tpu.memory_space<vmem>>, vector<64x120xf32>
    tpu.vector_store %arg7[%c256_33, %c0_34], %40 {strides = array<i32>} : memref<576x128xf32, #tpu.memory_space<vmem>>, vector<64x120xf32>,
    %42 = vector.extract_strided_slice %31 {offsets = [0, 5], sizes = [64, 120], strides = [1, 1]} : vector<64x128xf32> to vector<64x120xf32>
    %c320 = arith.constant 320 : index
    %c0_35 = arith.constant 0 : index
    %43 = vector.load %arg7[%c320, %c0_35] : memref<576x128xf32, #tpu.memory_space<vmem>>, vector<64x120xf32>
    tpu.vector_store %arg7[%c320, %c0_35], %42 {strides = array<i32>} : memref<576x128xf32, #tpu.memory_space<vmem>>, vector<64x120xf32>,
    %44 = vector.extract_strided_slice %31 {offsets = [0, 6], sizes = [64, 120], strides = [1, 1]} : vector<64x128xf32> to vector<64x120xf32>
    %c384 = arith.constant 384 : index
    %c0_36 = arith.constant 0 : index
    %45 = vector.load %arg7[%c384, %c0_36] : memref<576x128xf32, #tpu.memory_space<vmem>>, vector<64x120xf32>
    tpu.vector_store %arg7[%c384, %c0_36], %44 {strides = array<i32>} : memref<576x128xf32, #tpu.memory_space<vmem>>, vector<64x120xf32>,
    %46 = vector.extract_strided_slice %31 {offsets = [0, 7], sizes = [64, 120], strides = [1, 1]} : vector<64x128xf32> to vector<64x120xf32>
    %c448 = arith.constant 448 : index
    %c0_37 = arith.constant 0 : index
    %47 = vector.load %arg7[%c448, %c0_37] : memref<576x128xf32, #tpu.memory_space<vmem>>, vector<64x120xf32>
    tpu.vector_store %arg7[%c448, %c0_37], %46 {strides = array<i32>} : memref<576x128xf32, #tpu.memory_space<vmem>>, vector<64x120xf32>,
    %48 = vector.extract_strided_slice %31 {offsets = [0, 8], sizes = [64, 120], strides = [1, 1]} : vector<64x128xf32> to vector<64x120xf32>
    %c512 = arith.constant 512 : index
    %c0_38 = arith.constant 0 : index
    %49 = vector.load %arg7[%c512, %c0_38] : memref<576x128xf32, #tpu.memory_space<vmem>>, vector<64x120xf32>
    tpu.vector_store %arg7[%c512, %c0_38], %48 {strides = array<i32>} : memref<576x128xf32, #tpu.memory_space<vmem>>, vector<64x120xf32>,
    %c0_39 = arith.constant 0 : index
    %c0_40 = arith.constant 0 : index
    %50 = vector.load %arg4[%c0_39, %c0_40] : memref<64x576xf32, #tpu.memory_space<vmem>>, vector<64x576xf32>
    %c0_41 = arith.constant 0 : index
    %c0_42 = arith.constant 0 : index
    %51 = vector.load %arg7[%c0_41, %c0_42] : memref<576x128xf32, #tpu.memory_space<vmem>>, vector<576x120xf32>
    %cst_43 = arith.constant dense<0.000000e+00> : vector<64x120xf32>
    %52 = tpu.matmul %50, %51, %cst_43 {dimension_numbers = #tpu.dot_dimension_numbers<[1], [0], [0], [1], [0, 0, 1, 1], [], []>} : vector<64x576xf32>, vector<576x120xf32>, vector<64x120xf32> -> vector<64x120xf32>
    %c0_44 = arith.constant 0 : index
    %c0_45 = arith.constant 0 : index
    %53 = vector.load %arg5[%c0_44, %c0_45] : memref<64x1xf32, #tpu.memory_space<vmem>>, vector<64x1xf32>
    %54 = vector.broadcast %53 : vector<64x1xf32> to vector<64x120xf32>
    %55 = arith.addf %52, %54 : vector<64x120xf32>
    %cst_46 = arith.constant 0.000000e+00 : f32
    %56 = vector.broadcast %cst_46 : f32 to vector<64x120xf32>
    %57 = arith.maximumf %55, %56 : vector<64x120xf32>
    %c0_47 = arith.constant 0 : index
    %c0_48 = arith.constant 0 : index
    %c0_49 = arith.constant 0 : index
    %58 = vector.load %arg6[%c0_47, %c0_48, %c0_49] : memref<2x64x120xf32, #tpu.memory_space<vmem>>, vector<1x64x120xf32>
    %59 = vector.shape_cast %58 : vector<1x64x120xf32> to vector<64x120xf32>
    %60 = vector.shape_cast %57 : vector<64x120xf32> to vector<1x64x120xf32>
    tpu.vector_store %arg6[%c0_47, %c0_48, %c0_49], %60 {strides = array<i32>} : memref<2x64x120xf32, #tpu.memory_space<vmem>>, vector<1x64x120xf32>,
    %c1 = arith.constant 1 : index
    %c0_50 = arith.constant 0 : index
    %c0_51 = arith.constant 0 : index
    %61 = vector.load %arg1[%c1, %c0_50, %c0_51] : memref<2x32x128xf32, #tpu.memory_space<vmem>>, vector<1x32x128xf32>
    %62 = vector.shape_cast %61 : vector<1x32x128xf32> to vector<32x128xf32>
    %63 = vector.extract_strided_slice %62 {offsets = [0, 0], sizes = [32, 120], strides = [1, 1]} : vector<32x128xf32> to vector<32x120xf32>
    %c0_52 = arith.constant 0 : index
    %c0_53 = arith.constant 0 : index
    %64 = vector.load %arg7[%c0_52, %c0_53] : memref<576x128xf32, #tpu.memory_space<vmem>>, vector<32x120xf32>
    tpu.vector_store %arg7[%c0_52, %c0_53], %63 {strides = array<i32>} : memref<576x128xf32, #tpu.memory_space<vmem>>, vector<32x120xf32>,
    %65 = vector.extract_strided_slice %62 {offsets = [0, 1], sizes = [32, 120], strides = [1, 1]} : vector<32x128xf32> to vector<32x120xf32>
    %c32_54 = arith.constant 32 : index
    %c0_55 = arith.constant 0 : index
    %66 = vector.load %arg7[%c32_54, %c0_55] : memref<576x128xf32, #tpu.memory_space<vmem>>, vector<32x120xf32>
    tpu.vector_store %arg7[%c32_54, %c0_55], %65 {strides = array<i32>} : memref<576x128xf32, #tpu.memory_space<vmem>>, vector<32x120xf32>,
    %67 = vector.extract_strided_slice %62 {offsets = [0, 2], sizes = [32, 120], strides = [1, 1]} : vector<32x128xf32> to vector<32x120xf32>
    %c64_56 = arith.constant 64 : index
    %c0_57 = arith.constant 0 : index
    %68 = vector.load %arg7[%c64_56, %c0_57] : memref<576x128xf32, #tpu.memory_space<vmem>>, vector<32x120xf32>
    tpu.vector_store %arg7[%c64_56, %c0_57], %67 {strides = array<i32>} : memref<576x128xf32, #tpu.memory_space<vmem>>, vector<32x120xf32>,
    %69 = vector.extract_strided_slice %62 {offsets = [0, 3], sizes = [32, 120], strides = [1, 1]} : vector<32x128xf32> to vector<32x120xf32>
    %c96_58 = arith.constant 96 : index
    %c0_59 = arith.constant 0 : index
    %70 = vector.load %arg7[%c96_58, %c0_59] : memref<576x128xf32, #tpu.memory_space<vmem>>, vector<32x120xf32>
    tpu.vector_store %arg7[%c96_58, %c0_59], %69 {strides = array<i32>} : memref<576x128xf32, #tpu.memory_space<vmem>>, vector<32x120xf32>,
    %71 = vector.extract_strided_slice %62 {offsets = [0, 4], sizes = [32, 120], strides = [1, 1]} : vector<32x128xf32> to vector<32x120xf32>
    %c128_60 = arith.constant 128 : index
    %c0_61 = arith.constant 0 : index
    %72 = vector.load %arg7[%c128_60, %c0_61] : memref<576x128xf32, #tpu.memory_space<vmem>>, vector<32x120xf32>
    tpu.vector_store %arg7[%c128_60, %c0_61], %71 {strides = array<i32>} : memref<576x128xf32, #tpu.memory_space<vmem>>, vector<32x120xf32>,
    %73 = vector.extract_strided_slice %62 {offsets = [0, 5], sizes = [32, 120], strides = [1, 1]} : vector<32x128xf32> to vector<32x120xf32>
    %c160_62 = arith.constant 160 : index
    %c0_63 = arith.constant 0 : index
    %74 = vector.load %arg7[%c160_62, %c0_63] : memref<576x128xf32, #tpu.memory_space<vmem>>, vector<32x120xf32>
    tpu.vector_store %arg7[%c160_62, %c0_63], %73 {strides = array<i32>} : memref<576x128xf32, #tpu.memory_space<vmem>>, vector<32x120xf32>,
    %75 = vector.extract_strided_slice %62 {offsets = [0, 6], sizes = [32, 120], strides = [1, 1]} : vector<32x128xf32> to vector<32x120xf32>
    %c192_64 = arith.constant 192 : index
    %c0_65 = arith.constant 0 : index
    %76 = vector.load %arg7[%c192_64, %c0_65] : memref<576x128xf32, #tpu.memory_space<vmem>>, vector<32x120xf32>
    tpu.vector_store %arg7[%c192_64, %c0_65], %75 {strides = array<i32>} : memref<576x128xf32, #tpu.memory_space<vmem>>, vector<32x120xf32>,
    %77 = vector.extract_strided_slice %62 {offsets = [0, 7], sizes = [32, 120], strides = [1, 1]} : vector<32x128xf32> to vector<32x120xf32>
    %c224_66 = arith.constant 224 : index
    %c0_67 = arith.constant 0 : index
    %78 = vector.load %arg7[%c224_66, %c0_67] : memref<576x128xf32, #tpu.memory_space<vmem>>, vector<32x120xf32>
    tpu.vector_store %arg7[%c224_66, %c0_67], %77 {strides = array<i32>} : memref<576x128xf32, #tpu.memory_space<vmem>>, vector<32x120xf32>,
    %79 = vector.extract_strided_slice %62 {offsets = [0, 8], sizes = [32, 120], strides = [1, 1]} : vector<32x128xf32> to vector<32x120xf32>
    %c256_68 = arith.constant 256 : index
    %c0_69 = arith.constant 0 : index
    %80 = vector.load %arg7[%c256_68, %c0_69] : memref<576x128xf32, #tpu.memory_space<vmem>>, vector<32x120xf32>
    tpu.vector_store %arg7[%c256_68, %c0_69], %79 {strides = array<i32>} : memref<576x128xf32, #tpu.memory_space<vmem>>, vector<32x120xf32>,
    %c0_70 = arith.constant 0 : index
    %c0_71 = arith.constant 0 : index
    %81 = vector.load %arg2[%c0_70, %c0_71] : memref<64x288xf32, #tpu.memory_space<vmem>>, vector<64x288xf32>
    %c0_72 = arith.constant 0 : index
    %c0_73 = arith.constant 0 : index
    %82 = vector.load %arg7[%c0_72, %c0_73] : memref<576x128xf32, #tpu.memory_space<vmem>>, vector<288x120xf32>
    %cst_74 = arith.constant dense<0.000000e+00> : vector<64x120xf32>
    %83 = tpu.matmul %81, %82, %cst_74 {dimension_numbers = #tpu.dot_dimension_numbers<[1], [0], [0], [1], [0, 0, 1, 1], [], []>} : vector<64x288xf32>, vector<288x120xf32>, vector<64x120xf32> -> vector<64x120xf32>
    %c0_75 = arith.constant 0 : index
    %c0_76 = arith.constant 0 : index
    %84 = vector.load %arg3[%c0_75, %c0_76] : memref<64x1xf32, #tpu.memory_space<vmem>>, vector<64x1xf32>
    %85 = vector.broadcast %84 : vector<64x1xf32> to vector<64x120xf32>
    %86 = arith.addf %83, %85 : vector<64x120xf32>
    %cst_77 = arith.constant 0.000000e+00 : f32
    %87 = vector.broadcast %cst_77 : f32 to vector<64x120xf32>
    %88 = arith.maximumf %86, %87 : vector<64x120xf32>
    %c0_78 = arith.constant 0 : index
    %c4_79 = arith.constant 4 : index
    %89 = vector.load %arg8[%c0_78, %c4_79] : memref<64x128xf32, #tpu.memory_space<vmem>>, vector<64x120xf32>
    tpu.vector_store %arg8[%c0_78, %c4_79], %88 {strides = array<i32>} : memref<64x128xf32, #tpu.memory_space<vmem>>, vector<64x120xf32>,
    %c0_80 = arith.constant 0 : index
    %c0_81 = arith.constant 0 : index
    %90 = vector.load %arg8[%c0_80, %c0_81] : memref<64x128xf32, #tpu.memory_space<vmem>>, vector<64x128xf32>
    %91 = vector.extract_strided_slice %90 {offsets = [0, 0], sizes = [64, 120], strides = [1, 1]} : vector<64x128xf32> to vector<64x120xf32>
    %c0_82 = arith.constant 0 : index
    %c0_83 = arith.constant 0 : index
    %92 = vector.load %arg7[%c0_82, %c0_83] : memref<576x128xf32, #tpu.memory_space<vmem>>, vector<64x120xf32>
    tpu.vector_store %arg7[%c0_82, %c0_83], %91 {strides = array<i32>} : memref<576x128xf32, #tpu.memory_space<vmem>>, vector<64x120xf32>,
    %93 = vector.extract_strided_slice %90 {offsets = [0, 1], sizes = [64, 120], strides = [1, 1]} : vector<64x128xf32> to vector<64x120xf32>
    %c64_84 = arith.constant 64 : index
    %c0_85 = arith.constant 0 : index
    %94 = vector.load %arg7[%c64_84, %c0_85] : memref<576x128xf32, #tpu.memory_space<vmem>>, vector<64x120xf32>
    tpu.vector_store %arg7[%c64_84, %c0_85], %93 {strides = array<i32>} : memref<576x128xf32, #tpu.memory_space<vmem>>, vector<64x120xf32>,
    %95 = vector.extract_strided_slice %90 {offsets = [0, 2], sizes = [64, 120], strides = [1, 1]} : vector<64x128xf32> to vector<64x120xf32>
    %c128_86 = arith.constant 128 : index
    %c0_87 = arith.constant 0 : index
    %96 = vector.load %arg7[%c128_86, %c0_87] : memref<576x128xf32, #tpu.memory_space<vmem>>, vector<64x120xf32>
    tpu.vector_store %arg7[%c128_86, %c0_87], %95 {strides = array<i32>} : memref<576x128xf32, #tpu.memory_space<vmem>>, vector<64x120xf32>,
    %97 = vector.extract_strided_slice %90 {offsets = [0, 3], sizes = [64, 120], strides = [1, 1]} : vector<64x128xf32> to vector<64x120xf32>
    %c192_88 = arith.constant 192 : index
    %c0_89 = arith.constant 0 : index
    %98 = vector.load %arg7[%c192_88, %c0_89] : memref<576x128xf32, #tpu.memory_space<vmem>>, vector<64x120xf32>
    tpu.vector_store %arg7[%c192_88, %c0_89], %97 {strides = array<i32>} : memref<576x128xf32, #tpu.memory_space<vmem>>, vector<64x120xf32>,
    %99 = vector.extract_strided_slice %90 {offsets = [0, 4], sizes = [64, 120], strides = [1, 1]} : vector<64x128xf32> to vector<64x120xf32>
    %c256_90 = arith.constant 256 : index
    %c0_91 = arith.constant 0 : index
    %100 = vector.load %arg7[%c256_90, %c0_91] : memref<576x128xf32, #tpu.memory_space<vmem>>, vector<64x120xf32>
    tpu.vector_store %arg7[%c256_90, %c0_91], %99 {strides = array<i32>} : memref<576x128xf32, #tpu.memory_space<vmem>>, vector<64x120xf32>,
    %101 = vector.extract_strided_slice %90 {offsets = [0, 5], sizes = [64, 120], strides = [1, 1]} : vector<64x128xf32> to vector<64x120xf32>
    %c320_92 = arith.constant 320 : index
    %c0_93 = arith.constant 0 : index
    %102 = vector.load %arg7[%c320_92, %c0_93] : memref<576x128xf32, #tpu.memory_space<vmem>>, vector<64x120xf32>
    tpu.vector_store %arg7[%c320_92, %c0_93], %101 {strides = array<i32>} : memref<576x128xf32, #tpu.memory_space<vmem>>, vector<64x120xf32>,
    %103 = vector.extract_strided_slice %90 {offsets = [0, 6], sizes = [64, 120], strides = [1, 1]} : vector<64x128xf32> to vector<64x120xf32>
    %c384_94 = arith.constant 384 : index
    %c0_95 = arith.constant 0 : index
    %104 = vector.load %arg7[%c384_94, %c0_95] : memref<576x128xf32, #tpu.memory_space<vmem>>, vector<64x120xf32>
    tpu.vector_store %arg7[%c384_94, %c0_95], %103 {strides = array<i32>} : memref<576x128xf32, #tpu.memory_space<vmem>>, vector<64x120xf32>,
    %105 = vector.extract_strided_slice %90 {offsets = [0, 7], sizes = [64, 120], strides = [1, 1]} : vector<64x128xf32> to vector<64x120xf32>
    %c448_96 = arith.constant 448 : index
    %c0_97 = arith.constant 0 : index
    %106 = vector.load %arg7[%c448_96, %c0_97] : memref<576x128xf32, #tpu.memory_space<vmem>>, vector<64x120xf32>
    tpu.vector_store %arg7[%c448_96, %c0_97], %105 {strides = array<i32>} : memref<576x128xf32, #tpu.memory_space<vmem>>, vector<64x120xf32>,
    %107 = vector.extract_strided_slice %90 {offsets = [0, 8], sizes = [64, 120], strides = [1, 1]} : vector<64x128xf32> to vector<64x120xf32>
    %c512_98 = arith.constant 512 : index
    %c0_99 = arith.constant 0 : index
    %108 = vector.load %arg7[%c512_98, %c0_99] : memref<576x128xf32, #tpu.memory_space<vmem>>, vector<64x120xf32>
    tpu.vector_store %arg7[%c512_98, %c0_99], %107 {strides = array<i32>} : memref<576x128xf32, #tpu.memory_space<vmem>>, vector<64x120xf32>,
    %c0_100 = arith.constant 0 : index
    %c0_101 = arith.constant 0 : index
    %109 = vector.load %arg4[%c0_100, %c0_101] : memref<64x576xf32, #tpu.memory_space<vmem>>, vector<64x576xf32>
    %c0_102 = arith.constant 0 : index
    %c0_103 = arith.constant 0 : index
    %110 = vector.load %arg7[%c0_102, %c0_103] : memref<576x128xf32, #tpu.memory_space<vmem>>, vector<576x120xf32>
    %cst_104 = arith.constant dense<0.000000e+00> : vector<64x120xf32>
    %111 = tpu.matmul %109, %110, %cst_104 {dimension_numbers = #tpu.dot_dimension_numbers<[1], [0], [0], [1], [0, 0, 1, 1], [], []>} : vector<64x576xf32>, vector<576x120xf32>, vector<64x120xf32> -> vector<64x120xf32>
    %c0_105 = arith.constant 0 : index
    %c0_106 = arith.constant 0 : index
    %112 = vector.load %arg5[%c0_105, %c0_106] : memref<64x1xf32, #tpu.memory_space<vmem>>, vector<64x1xf32>
    %113 = vector.broadcast %112 : vector<64x1xf32> to vector<64x120xf32>
    %114 = arith.addf %111, %113 : vector<64x120xf32>
    %cst_107 = arith.constant 0.000000e+00 : f32
    %115 = vector.broadcast %cst_107 : f32 to vector<64x120xf32>
    %116 = arith.maximumf %114, %115 : vector<64x120xf32>
    %c1_108 = arith.constant 1 : index
    %c0_109 = arith.constant 0 : index
    %c0_110 = arith.constant 0 : index
    %117 = vector.load %arg6[%c1_108, %c0_109, %c0_110] : memref<2x64x120xf32, #tpu.memory_space<vmem>>, vector<1x64x120xf32>
    %118 = vector.shape_cast %117 : vector<1x64x120xf32> to vector<64x120xf32>
    %119 = vector.shape_cast %116 : vector<64x120xf32> to vector<1x64x120xf32>
    tpu.vector_store %arg6[%c1_108, %c0_109, %c0_110], %119 {strides = array<i32>} : memref<2x64x120xf32, #tpu.memory_space<vmem>>, vector<1x64x120xf32>,
    return
  }
  func.func @transform_0(%arg0: i32) -> (i32, i32, i32) {
    %c0_i32 = arith.constant 0 : i32
    %c0_i32_0 = arith.constant 0 : i32
    %c0_i32_1 = arith.constant 0 : i32
    %c0_i32_2 = arith.constant 0 : i32
    return %c0_i32, %c0_i32_0, %c0_i32_1 : i32, i32, i32
  }
  func.func @transform_1(%arg0: i32) -> (i32, i32) {
    %c0_i32 = arith.constant 0 : i32
    %c0_i32_0 = arith.constant 0 : i32
    %c0_i32_1 = arith.constant 0 : i32
    return %c0_i32, %c0_i32_0 : i32, i32
  }
  func.func @transform_2(%arg0: i32) -> (i32, i32) {
    %c0_i32 = arith.constant 0 : i32
    %c0_i32_0 = arith.constant 0 : i32
    %c0_i32_1 = arith.constant 0 : i32
    return %c0_i32, %c0_i32_0 : i32, i32
  }
  func.func @transform_3(%arg0: i32) -> (i32, i32) {
    %c0_i32 = arith.constant 0 : i32
    %c0_i32_0 = arith.constant 0 : i32
    %c0_i32_1 = arith.constant 0 : i32
    return %c0_i32, %c0_i32_0 : i32, i32
  }
  func.func @transform_4(%arg0: i32) -> (i32, i32) {
    %c0_i32 = arith.constant 0 : i32
    %c0_i32_0 = arith.constant 0 : i32
    %c0_i32_1 = arith.constant 0 : i32
    return %c0_i32, %c0_i32_0 : i32, i32
  }
  func.func @transform_5(%arg0: i32) -> (i32, i32, i32) {
    %c0_i32 = arith.constant 0 : i32
    %c0_i32_0 = arith.constant 0 : i32
    %c0_i32_1 = arith.constant 0 : i32
    %c0_i32_2 = arith.constant 0 : i32
    return %c0_i32, %c0_i32_0, %c0_i32_1 : i32, i32, i32
  }
}

module attributes {stable_mosaic.version = 11 : i64} {
  func.func @mlp_kernel(%arg0: i32, %arg1: memref<2x7680xf32, #tpu.memory_space<vmem>>, %arg2: memref<32x7680xf32, #tpu.memory_space<vmem>>, %arg3: memref<1x32xf32, #tpu.memory_space<vmem>>, %arg4: memref<32x32xf32, #tpu.memory_space<vmem>>, %arg5: memref<1x32xf32, #tpu.memory_space<vmem>>, %arg6: memref<1x32xf32, #tpu.memory_space<vmem>>, %arg7: memref<1x1xf32, #tpu.memory_space<vmem>>, %arg8: memref<2x1xf32, #tpu.memory_space<vmem>>) attributes {dimension_semantics = [#tpu.dimension_semantics<arbitrary>], iteration_bounds = array<i64: 1>, scalar_prefetch = 0 : i64, scratch_operands = 0 : i64, tpu.core_type = #tpu.core_type<tc>, window_params = [{pipeline_mode = #tpu.pipeline_mode<synchronous>, transform_indices = @transform_0, window_bounds = array<i64: 2, 7680>}, {pipeline_mode = #tpu.pipeline_mode<synchronous>, transform_indices = @transform_1, window_bounds = array<i64: 32, 7680>}, {pipeline_mode = #tpu.pipeline_mode<synchronous>, transform_indices = @transform_2, window_bounds = array<i64: 1, 32>}, {pipeline_mode = #tpu.pipeline_mode<synchronous>, transform_indices = @transform_3, window_bounds = array<i64: 32, 32>}, {pipeline_mode = #tpu.pipeline_mode<synchronous>, transform_indices = @transform_4, window_bounds = array<i64: 1, 32>}, {pipeline_mode = #tpu.pipeline_mode<synchronous>, transform_indices = @transform_5, window_bounds = array<i64: 1, 32>}, {pipeline_mode = #tpu.pipeline_mode<synchronous>, transform_indices = @transform_6, window_bounds = array<i64: 1, 1>}, {pipeline_mode = #tpu.pipeline_mode<synchronous>, transform_indices = @transform_7, window_bounds = array<i64: 2, 1>}]} {
    %c0 = arith.constant 0 : index
    %c0_0 = arith.constant 0 : index
    %0 = vector.load %arg1[%c0, %c0_0] : memref<2x7680xf32, #tpu.memory_space<vmem>>, vector<2x7680xf32>
    %c0_1 = arith.constant 0 : index
    %c0_2 = arith.constant 0 : index
    %1 = vector.load %arg2[%c0_1, %c0_2] : memref<32x7680xf32, #tpu.memory_space<vmem>>, vector<32x7680xf32>
    %cst = arith.constant dense<0.000000e+00> : vector<2x32xf32>
    %2 = tpu.matmul %0, %1, %cst {dimension_numbers = #tpu.dot_dimension_numbers<[1], [1], [0], [0], [0, 0, 1, 0], [], []>} : vector<2x7680xf32>, vector<32x7680xf32>, vector<2x32xf32> -> vector<2x32xf32>
    %c0_3 = arith.constant 0 : index
    %c0_4 = arith.constant 0 : index
    %3 = vector.load %arg3[%c0_3, %c0_4] : memref<1x32xf32, #tpu.memory_space<vmem>>, vector<1x32xf32>
    %4 = vector.broadcast %3 : vector<1x32xf32> to vector<2x32xf32>
    %5 = arith.addf %2, %4 : vector<2x32xf32>
    %cst_5 = arith.constant 0.000000e+00 : f32
    %6 = vector.broadcast %cst_5 : f32 to vector<2x32xf32>
    %7 = arith.maximumf %5, %6 : vector<2x32xf32>
    %c0_6 = arith.constant 0 : index
    %c0_7 = arith.constant 0 : index
    %8 = vector.load %arg4[%c0_6, %c0_7] : memref<32x32xf32, #tpu.memory_space<vmem>>, vector<32x32xf32>
    %cst_8 = arith.constant dense<0.000000e+00> : vector<2x32xf32>
    %9 = tpu.matmul %7, %8, %cst_8 {dimension_numbers = #tpu.dot_dimension_numbers<[1], [0], [0], [1], [0, 0, 1, 1], [], []>} : vector<2x32xf32>, vector<32x32xf32>, vector<2x32xf32> -> vector<2x32xf32>
    %c0_9 = arith.constant 0 : index
    %c0_10 = arith.constant 0 : index
    %10 = vector.load %arg5[%c0_9, %c0_10] : memref<1x32xf32, #tpu.memory_space<vmem>>, vector<1x32xf32>
    %11 = vector.broadcast %10 : vector<1x32xf32> to vector<2x32xf32>
    %12 = arith.addf %9, %11 : vector<2x32xf32>
    %13 = math.tanh %12 : vector<2x32xf32>
    %c0_11 = arith.constant 0 : index
    %c0_12 = arith.constant 0 : index
    %14 = vector.load %arg6[%c0_11, %c0_12] : memref<1x32xf32, #tpu.memory_space<vmem>>, vector<1x32xf32>
    %15 = vector.broadcast %14 : vector<1x32xf32> to vector<2x32xf32>
    %16 = arith.mulf %13, %15 : vector<2x32xf32>
    %cst_13 = arith.constant dense<0.000000e+00> : vector<2xf32>
    %17 = vector.multi_reduction <add>, %16, %cst_13 [1] : vector<2x32xf32> to vector<2xf32>
    %18 = vector.shape_cast %17 : vector<2xf32> to vector<2x1xf32>
    %c0_14 = arith.constant 0 : index
    %c0_15 = arith.constant 0 : index
    %19 = vector.load %arg7[%c0_14, %c0_15] : memref<1x1xf32, #tpu.memory_space<vmem>>, vector<1x1xf32>
    %20 = vector.broadcast %19 : vector<1x1xf32> to vector<2x1xf32>
    %21 = arith.addf %18, %20 : vector<2x1xf32>
    %c0_16 = arith.constant 0 : index
    %c0_17 = arith.constant 0 : index
    %22 = vector.load %arg8[%c0_16, %c0_17] : memref<2x1xf32, #tpu.memory_space<vmem>>, vector<2x1xf32>
    tpu.vector_store %arg8[%c0_16, %c0_17], %21 {strides = array<i32>} : memref<2x1xf32, #tpu.memory_space<vmem>>, vector<2x1xf32>,
    return
  }
  func.func @transform_0(%arg0: i32) -> (i32, i32) {
    %c0_i32 = arith.constant 0 : i32
    %c0_i32_0 = arith.constant 0 : i32
    %c0_i32_1 = arith.constant 0 : i32
    return %c0_i32, %c0_i32_0 : i32, i32
  }
  func.func @transform_1(%arg0: i32) -> (i32, i32) {
    %c0_i32 = arith.constant 0 : i32
    %c0_i32_0 = arith.constant 0 : i32
    %c0_i32_1 = arith.constant 0 : i32
    return %c0_i32, %c0_i32_0 : i32, i32
  }
  func.func @transform_2(%arg0: i32) -> (i32, i32) {
    %c0_i32 = arith.constant 0 : i32
    %c0_i32_0 = arith.constant 0 : i32
    %c0_i32_1 = arith.constant 0 : i32
    return %c0_i32, %c0_i32_0 : i32, i32
  }
  func.func @transform_3(%arg0: i32) -> (i32, i32) {
    %c0_i32 = arith.constant 0 : i32
    %c0_i32_0 = arith.constant 0 : i32
    %c0_i32_1 = arith.constant 0 : i32
    return %c0_i32, %c0_i32_0 : i32, i32
  }
  func.func @transform_4(%arg0: i32) -> (i32, i32) {
    %c0_i32 = arith.constant 0 : i32
    %c0_i32_0 = arith.constant 0 : i32
    %c0_i32_1 = arith.constant 0 : i32
    return %c0_i32, %c0_i32_0 : i32, i32
  }
  func.func @transform_5(%arg0: i32) -> (i32, i32) {
    %c0_i32 = arith.constant 0 : i32
    %c0_i32_0 = arith.constant 0 : i32
    %c0_i32_1 = arith.constant 0 : i32
    return %c0_i32, %c0_i32_0 : i32, i32
  }
  func.func @transform_6(%arg0: i32) -> (i32, i32) {
    %c0_i32 = arith.constant 0 : i32
    %c0_i32_0 = arith.constant 0 : i32
    %c0_i32_1 = arith.constant 0 : i32
    return %c0_i32, %c0_i32_0 : i32, i32
  }
  func.func @transform_7(%arg0: i32) -> (i32, i32) {
    %c0_i32 = arith.constant 0 : i32
    %c0_i32_0 = arith.constant 0 : i32
    %c0_i32_1 = arith.constant 0 : i32
    return %c0_i32, %c0_i32_0 : i32, i32
  }
}

</mosaic_0001>

<llo_original>
// kernel: cnn_forward.3
$region0: #{cnn_forward.3}
  #allocation0 [shape = 'u32[]', space=smem, size = 0x4, offset = 0x4, fixed_abs, tag = 'smem constant byte address 0x4 - core index']
  #allocation1 [shape = 'u32[72,128]{1,0:T(1,128)}', space=vmem, size = 0x9000, scoped, tag = 'internal scratch']
  #allocation2 [shape = 'f32[1,1]{1,0:T(1,128)S(1)}', space=vmem, size = 0x200, scoped, tag = 'scoped memory for cnn_forward.3']
  %s0 = inlined_call_operand.vmem [shape: f32[2,7680], index: 0, kind: input, shape index: {}]
  %s1 = inlined_call_operand.hbm [shape: f32[32,7680], index: 1, kind: input, shape index: {}]
  %s2 = inlined_call_operand.vmem [shape: f32[1,32], index: 2, kind: input, shape index: {}]
  %s3 = inlined_call_operand.vmem [shape: f32[32,32], index: 3, kind: input, shape index: {}]
  %s4 = inlined_call_operand.vmem [shape: f32[1,32], index: 4, kind: input, shape index: {}]
  %s5 = inlined_call_operand.vmem [shape: f32[1,32], index: 5, kind: input, shape index: {}]
  %s6 = inlined_call_operand.<no memory space> [shape: f32[1,1], index: 6, kind: input, shape index: {}]
  %s7 = inlined_call_operand.vmem [shape: f32[2,1], index: 7, kind: output, shape index: {}]
  %s8 = sld [smem:[#allocation0]]
  $region42: #{cnn_forward.3} parent=0
    _
  %s10 = ssub.s32 1, %s8
  %s11 = scalar_select 0, %s10, %s8
  %v12 = vstv %s6
  %13 = vst [vmem:[#allocation2] sm:$0x1] %v12
  $region1: #{cnn_forward.3} parent=0
    #allocation3 [shape = 'u8[983040]{0}', space=vmem, size = 0xf0000, scoped, tag = 'input window, operand 1, single buffered']
    #allocation4 [shape = 's32[1]{0}', space=sflag, size = 0x4, scoped, tag = 'scoped memory for cnn_forward.3']
    %14 = vsyncpa [#allocation4], 0
    // Predicated region
    $region2: #{cnn_forward.3} parent=1 // pred_check
      _
    $region3: #{cnn_forward.3} parent=1 // pred_check_branch
      %16 = sbr.rel (0) target = $region5
    $region4: #{cnn_forward.3} parent=1 // pred_region
      _
    $region5: #{cnn_forward.3} parent=1 // pred_fallthru
      _
    // Predicated region
    $region6: #{cnn_forward.3} parent=1 // pred_check
      _
    $region7: #{cnn_forward.3} parent=1 // pred_check_branch
      %18 = sbr.rel (0) target = $region9
    $region8: #{cnn_forward.3} parent=1 // pred_region
      %20 = vsyncadd [#allocation4], 0
      %s21 = sshll.u32 %s1, 4
      %s22 = int_to_ptr.hbm [resolvable:$true] %s21
      %s23 = sshll.u32 [#allocation3], 4
      %s24 = int_to_ptr.vmem [resolvable:$true] %s23
      %29 = dma.hbm_to_vmem [thread:$0]  %s22, 30720, %s24, [#allocation4], 7680, 7680, 480
    $region9: #{cnn_forward.3} parent=1 // pred_fallthru
      _
    // Predicated region
    $region10: #{cnn_forward.3} parent=1 // pred_check
      _
    $region11: #{cnn_forward.3} parent=1 // pred_check_branch
      %31 = sbr.rel (0) target = $region13
    $region12: #{cnn_forward.3} parent=1 // pred_region
      _
    $region13: #{cnn_forward.3} parent=1 // pred_fallthru
      _
    // Predicated region
    $region14: #{cnn_forward.3} parent=1 // pred_check
      _
    $region15: #{cnn_forward.3} parent=1 // pred_check_branch
      %33 = sbr.rel (0) target = $region17
    $region16: #{cnn_forward.3} parent=1 // pred_region
      _
    $region17: #{cnn_forward.3} parent=1 // pred_fallthru
      _
    // Predicated region
    $region18: #{cnn_forward.3} parent=1 // pred_check
      _
    $region19: #{cnn_forward.3} parent=1 // pred_check_branch
      %35 = sbr.rel (0) target = $region21
    $region20: #{cnn_forward.3} parent=1 // pred_region
      _
    $region21: #{cnn_forward.3} parent=1 // pred_fallthru
      _
    // Predicated region
    $region22: #{cnn_forward.3} parent=1 // pred_check
      _
    $region23: #{cnn_forward.3} parent=1 // pred_check_branch
      %37 = sbr.rel (0) target = $region25
    $region24: #{cnn_forward.3} parent=1 // pred_region
      _
    $region25: #{cnn_forward.3} parent=1 // pred_fallthru
      _
    // Predicated region
    $region26: #{cnn_forward.3} parent=1 // pred_check
      _
    $region27: #{cnn_forward.3} parent=1 // pred_check_branch
      %39 = sbr.rel (0) target = $region29
    $region28: #{cnn_forward.3} parent=1 // pred_region
      _
    $region29: #{cnn_forward.3} parent=1 // pred_fallthru
      _
    // Predicated region
    $region30: #{cnn_forward.3} parent=1 // pred_check
      _
    $region31: #{cnn_forward.3} parent=1 // pred_check_branch
      %41 = sbr.rel (0) target = $region33
    $region32: #{cnn_forward.3} parent=1 // pred_region
      %43 = dma.done [#allocation4], 30720
    $region33: #{cnn_forward.3} parent=1 // pred_fallthru
      _
    %v44 = vld [vmem:[%s0] sm:$0xff]
    %v45 = vld [vmem:[%s0 + $0x8] sm:$0xff]
    %v46 = vld [vmem:[%s0 + $0x10] sm:$0xff]
    %v47 = vld [vmem:[%s0 + $0x18] sm:$0xff]
    %v48 = vld [vmem:[%s0 + $0x20] sm:$0xff]
    %v49 = vld [vmem:[%s0 + $0x28] sm:$0xff]
    %v50 = vld [vmem:[%s0 + $0x30] sm:$0xff]
    %v51 = vld [vmem:[%s0 + $0x38] sm:$0xff]
    %v52 = vld [vmem:[%s0 + $0x40] sm:$0xff]
    %v53 = vld [vmem:[%s0 + $0x48] sm:$0xff]
    %v54 = vld [vmem:[%s0 + $0x50] sm:$0xff]
    %v55 = vld [vmem:[%s0 + $0x58] sm:$0xff]
    %v56 = vld [vmem:[%s0 + $0x60] sm:$0xff]
    %v57 = vld [vmem:[%s0 + $0x68] sm:$0xff]
    %v58 = vld [vmem:[%s0 + $0x70] sm:$0xff]
    %v59 = vld [vmem:[#allocation3] sm:$0xff]
    %v60 = vld [vmem:[#allocation3 + $0x8] sm:$0xff]
    %v61 = vld [vmem:[#allocation3 + $0x10] sm:$0xff]
    %v62 = vld [vmem:[#allocation3 + $0x18] sm:$0xff]
    %v63 = vld [vmem:[#allocation3 + $0x20] sm:$0xff]
    %v64 = vld [vmem:[#allocation3 + $0x28] sm:$0xff]
    %v65 = vld [vmem:[#allocation3 + $0x30] sm:$0xff]
    %v66 = vld [vmem:[#allocation3 + $0x38] sm:$0xff]
    %v67 = vld [vmem:[#allocation3 + $0x40] sm:$0xff]
    %v68 = vld [vmem:[#allocation3 + $0x48] sm:$0xff]
    %v69 = vld [vmem:[#allocation3 + $0x50] sm:$0xff]
    %v70 = vld [vmem:[#allocation3 + $0x58] sm:$0xff]
    %v71 = vld [vmem:[#allocation3 + $0x60] sm:$0xff]
    %v72 = vld [vmem:[#allocation3 + $0x68] sm:$0xff]
    %v73 = vld [vmem:[#allocation3 + $0x70] sm:$0xff]
    %v74 = vld [vmem:[#allocation3 + $0x78] sm:$0xff]
    %v75 = vld [vmem:[#allocation3 + $0x80] sm:$0xff]
    %v76 = vld [vmem:[#allocation3 + $0x88] sm:$0xff]
    %v77 = vld [vmem:[#allocation3 + $0x90] sm:$0xff]
    %v78 = vld [vmem:[#allocation3 + $0x98] sm:$0xff]
    %v79 = vld [vmem:[#allocation3 + $0xa0] sm:$0xff]
    %v80 = vld [vmem:[#allocation3 + $0xa8] sm:$0xff]
    %v81 = vld [vmem:[#allocation3 + $0xb0] sm:$0xff]
    %v82 = vld [vmem:[#allocation3 + $0xb8] sm:$0xff]
    %v83 = vld [vmem:[#allocation3 + $0xc0] sm:$0xff]
    %v84 = vld [vmem:[#allocation3 + $0xc8] sm:$0xff]
    %v85 = vld [vmem:[#allocation3 + $0xd0] sm:$0xff]
    %v86 = vld [vmem:[#allocation3 + $0xd8] sm:$0xff]
    %v87 = vld [vmem:[#allocation3 + $0xe0] sm:$0xff]
    %v88 = vld [vmem:[#allocation3 + $0xe8] sm:$0xff]
    %v89 = vld [vmem:[#allocation3 + $0xf0] sm:$0xff]
    %v90 = vld [vmem:[#allocation3 + $0xf8] sm:$0xff]
    %v91 = vld [vmem:[#allocation3 + $0x100] sm:$0xff]
    %v92 = vld [vmem:[#allocation3 + $0x108] sm:$0xff]
    %v93 = vld [vmem:[#allocation3 + $0x110] sm:$0xff]
    %v94 = vld [vmem:[#allocation3 + $0x118] sm:$0xff]
    %v95 = vld [vmem:[#allocation3 + $0x120] sm:$0xff]
    %v96 = vld [vmem:[#allocation3 + $0x128] sm:$0xff]
    %v97 = vld [vmem:[#allocation3 + $0x130] sm:$0xff]
    %v98 = vld [vmem:[#allocation3 + $0x138] sm:$0xff]
    %v99 = vld [vmem:[#allocation3 + $0x140] sm:$0xff]
    %v100 = vld [vmem:[#allocation3 + $0x148] sm:$0xff]
    %v101 = vld [vmem:[#allocation3 + $0x150] sm:$0xff]
    %v102 = vld [vmem:[#allocation3 + $0x158] sm:$0xff]
    %v103 = vld [vmem:[#allocation3 + $0x160] sm:$0xff]
    %v104 = vld [vmem:[#allocation3 + $0x168] sm:$0xff]
    %v105 = vld [vmem:[#allocation3 + $0x170] sm:$0xff]
    %v106 = vld [vmem:[#allocation3 + $0x178] sm:$0xff]
    %v107 = vld [vmem:[#allocation3 + $0x180] sm:$0xff]
    %v108 = vld [vmem:[#allocation3 + $0x188] sm:$0xff]
    %v109 = vld [vmem:[#allocation3 + $0x190] sm:$0xff]
    %v110 = vld [vmem:[#allocation3 + $0x198] sm:$0xff]
    %v111 = vld [vmem:[#allocation3 + $0x1a0] sm:$0xff]
    %v112 = vld [vmem:[#allocation3 + $0x1a8] sm:$0xff]
    %v113 = vld [vmem:[#allocation3 + $0x1b0] sm:$0xff]
    %v114 = vld [vmem:[#allocation3 + $0x1b8] sm:$0xff]
    %v115 = vld [vmem:[#allocation3 + $0x1c0] sm:$0xff]
    %v116 = vld [vmem:[#allocation3 + $0x1c8] sm:$0xff]
    %v117 = vld [vmem:[#allocation3 + $0x1d0] sm:$0xff]
    %v118 = vld [vmem:[#allocation3 + $0x1d8] sm:$0xff]
    %v119 = vld [vmem:[#allocation3 + $0x1e0] sm:$0xff]
    %v120 = vld [vmem:[#allocation3 + $0x1e8] sm:$0xff]
    %v121 = vld [vmem:[#allocation3 + $0x1f0] sm:$0xff]
    %v122 = vld [vmem:[#allocation3 + $0x1f8] sm:$0xff]
    %v123 = vld [vmem:[#allocation3 + $0x200] sm:$0xff]
    %v124 = vld [vmem:[#allocation3 + $0x208] sm:$0xff]
    %v125 = vld [vmem:[#allocation3 + $0x210] sm:$0xff]
    %v126 = vld [vmem:[#allocation3 + $0x218] sm:$0xff]
    %v127 = vld [vmem:[#allocation3 + $0x220] sm:$0xff]
    %v128 = vld [vmem:[#allocation3 + $0x228] sm:$0xff]
    %v129 = vld [vmem:[#allocation3 + $0x230] sm:$0xff]
    %v130 = vld [vmem:[#allocation3 + $0x238] sm:$0xff]
    %v131 = vld [vmem:[#allocation3 + $0x240] sm:$0xff]
    %v132 = vld [vmem:[#allocation3 + $0x248] sm:$0xff]
    %v133 = vld [vmem:[#allocation3 + $0x250] sm:$0xff]
    %v134 = vld [vmem:[#allocation3 + $0x258] sm:$0xff]
    %v135 = vld [vmem:[#allocation3 + $0x260] sm:$0xff]
    %v136 = vld [vmem:[#allocation3 + $0x268] sm:$0xff]
    %v137 = vld [vmem:[#allocation3 + $0x270] sm:$0xff]
    %v138 = vld [vmem:[#allocation3 + $0x278] sm:$0xff]
    %v139 = vld [vmem:[#allocation3 + $0x280] sm:$0xff]
    %v140 = vld [vmem:[#allocation3 + $0x288] sm:$0xff]
    %v141 = vld [vmem:[#allocation3 + $0x290] sm:$0xff]
    %v142 = vld [vmem:[#allocation3 + $0x298] sm:$0xff]
    %v143 = vld [vmem:[#allocation3 + $0x2a0] sm:$0xff]
    %v144 = vld [vmem:[#allocation3 + $0x2a8] sm:$0xff]
    %v145 = vld [vmem:[#allocation3 + $0x2b0] sm:$0xff]
    %v146 = vld [vmem:[#allocation3 + $0x2b8] sm:$0xff]
    %v147 = vld [vmem:[#allocation3 + $0x2c0] sm:$0xff]
    %v148 = vld [vmem:[#allocation3 + $0x2c8] sm:$0xff]
    %v149 = vld [vmem:[#allocation3 + $0x2d0] sm:$0xff]
    %v150 = vld [vmem:[#allocation3 + $0x2d8] sm:$0xff]
    %v151 = vld [vmem:[#allocation3 + $0x2e0] sm:$0xff]
    %v152 = vld [vmem:[#allocation3 + $0x2e8] sm:$0xff]
    %v153 = vld [vmem:[#allocation3 + $0x2f0] sm:$0xff]
    %v154 = vld [vmem:[#allocation3 + $0x2f8] sm:$0xff]
    %v155 = vld [vmem:[#allocation3 + $0x300] sm:$0xff]
    %v156 = vld [vmem:[#allocation3 + $0x308] sm:$0xff]
    %v157 = vld [vmem:[#allocation3 + $0x310] sm:$0xff]
    %v158 = vld [vmem:[#allocation3 + $0x318] sm:$0xff]
    %v159 = vld [vmem:[#allocation3 + $0x320] sm:$0xff]
    %v160 = vld [vmem:[#allocation3 + $0x328] sm:$0xff]
    %v161 = vld [vmem:[#allocation3 + $0x330] sm:$0xff]
    %v162 = vld [vmem:[#allocation3 + $0x338] sm:$0xff]
    %v163 = vld [vmem:[#allocation3 + $0x340] sm:$0xff]
    %v164 = vld [vmem:[#allocation3 + $0x348] sm:$0xff]
    %v165 = vld [vmem:[#allocation3 + $0x350] sm:$0xff]
    %v166 = vld [vmem:[#allocation3 + $0x358] sm:$0xff]
    %v167 = vld [vmem:[#allocation3 + $0x360] sm:$0xff]
    %v168 = vld [vmem:[#allocation3 + $0x368] sm:$0xff]
    %v169 = vld [vmem:[#allocation3 + $0x370] sm:$0xff]
    %v170 = vld [vmem:[#allocation3 + $0x378] sm:$0xff]
    %v171 = vld [vmem:[#allocation3 + $0x380] sm:$0xff]
    %v172 = vld [vmem:[#allocation3 + $0x388] sm:$0xff]
    %v173 = vld [vmem:[#allocation3 + $0x390] sm:$0xff]
    %v174 = vld [vmem:[#allocation3 + $0x398] sm:$0xff]
    %v175 = vld [vmem:[#allocation3 + $0x3a0] sm:$0xff]
    %v176 = vld [vmem:[#allocation3 + $0x3a8] sm:$0xff]
    %v177 = vld [vmem:[#allocation3 + $0x3b0] sm:$0xff]
    %v178 = vld [vmem:[#allocation3 + $0x3b8] sm:$0xff]
    %v179 = vld [vmem:[#allocation3 + $0x3c0] sm:$0xff]
    %v180 = vld [vmem:[#allocation3 + $0x3c8] sm:$0xff]
    %v181 = vld [vmem:[#allocation3 + $0x3d0] sm:$0xff]
    %v182 = vld [vmem:[#allocation3 + $0x3d8] sm:$0xff]
    %v183 = vld [vmem:[#allocation3 + $0x3e0] sm:$0xff]
    %v184 = vld [vmem:[#allocation3 + $0x3e8] sm:$0xff]
    %v185 = vld [vmem:[#allocation3 + $0x3f0] sm:$0xff]
    %v186 = vld [vmem:[#allocation3 + $0x3f8] sm:$0xff]
    %v187 = vld [vmem:[#allocation3 + $0x400] sm:$0xff]
    %v188 = vld [vmem:[#allocation3 + $0x408] sm:$0xff]
    %v189 = vld [vmem:[#allocation3 + $0x410] sm:$0xff]
    %v190 = vld [vmem:[#allocation3 + $0x418] sm:$0xff]
    %v191 = vld [vmem:[#allocation3 + $0x420] sm:$0xff]
    %v192 = vld [vmem:[#allocation3 + $0x428] sm:$0xff]
    %v193 = vld [vmem:[#allocation3 + $0x430] sm:$0xff]
    %v194 = vld [vmem:[#allocation3 + $0x438] sm:$0xff]
    %v195 = vld [vmem:[#allocation3 + $0x440] sm:$0xff]
    %v196 = vld [vmem:[#allocation3 + $0x448] sm:$0xff]
    %v197 = vld [vmem:[#allocation3 + $0x450] sm:$0xff]
    %v198 = vld [vmem:[#allocation3 + $0x458] sm:$0xff]
    %v199 = vld [vmem:[#allocation3 + $0x460] sm:$0xff]
    %v200 = vld [vmem:[#allocation3 + $0x468] sm:$0xff]
    %v201 = vld [vmem:[#allocation3 + $0x470] sm:$0xff]
    %v202 = vld [vmem:[#allocation3 + $0x478] sm:$0xff]
    %v203 = vld [vmem:[#allocation3 + $0x480] sm:$0xff]
    %v204 = vld [vmem:[#allocation3 + $0x488] sm:$0xff]
    %v205 = vld [vmem:[#allocation3 + $0x490] sm:$0xff]
    %v206 = vld [vmem:[#allocation3 + $0x498] sm:$0xff]
    %v207 = vld [vmem:[#allocation3 + $0x4a0] sm:$0xff]
    %v208 = vld [vmem:[#allocation3 + $0x4a8] sm:$0xff]
    %v209 = vld [vmem:[#allocation3 + $0x4b0] sm:$0xff]
    %v210 = vld [vmem:[#allocation3 + $0x4b8] sm:$0xff]
    %v211 = vld [vmem:[#allocation3 + $0x4c0] sm:$0xff]
    %v212 = vld [vmem:[#allocation3 + $0x4c8] sm:$0xff]
    %v213 = vld [vmem:[#allocation3 + $0x4d0] sm:$0xff]
    %v214 = vld [vmem:[#allocation3 + $0x4d8] sm:$0xff]
    %v215 = vld [vmem:[#allocation3 + $0x4e0] sm:$0xff]
    %v216 = vld [vmem:[#allocation3 + $0x4e8] sm:$0xff]
    %v217 = vld [vmem:[#allocation3 + $0x4f0] sm:$0xff]
    %v218 = vld [vmem:[#allocation3 + $0x4f8] sm:$0xff]
    %v219 = vld [vmem:[#allocation3 + $0x500] sm:$0xff]
    %v220 = vld [vmem:[#allocation3 + $0x508] sm:$0xff]
    %v221 = vld [vmem:[#allocation3 + $0x510] sm:$0xff]
    %v222 = vld [vmem:[#allocation3 + $0x518] sm:$0xff]
    %v223 = vld [vmem:[#allocation3 + $0x520] sm:$0xff]
    %v224 = vld [vmem:[#allocation3 + $0x528] sm:$0xff]
    %v225 = vld [vmem:[#allocation3 + $0x530] sm:$0xff]
    %v226 = vld [vmem:[#allocation3 + $0x538] sm:$0xff]
    %v227 = vld [vmem:[#allocation3 + $0x540] sm:$0xff]
    %v228 = vld [vmem:[#allocation3 + $0x548] sm:$0xff]
    %v229 = vld [vmem:[#allocation3 + $0x550] sm:$0xff]
    %v230 = vld [vmem:[#allocation3 + $0x558] sm:$0xff]
    %v231 = vld [vmem:[#allocation3 + $0x560] sm:$0xff]
    %v232 = vld [vmem:[#allocation3 + $0x568] sm:$0xff]
    %v233 = vld [vmem:[#allocation3 + $0x570] sm:$0xff]
    %v234 = vld [vmem:[#allocation3 + $0x578] sm:$0xff]
    %v235 = vld [vmem:[#allocation3 + $0x580] sm:$0xff]
    %v236 = vld [vmem:[#allocation3 + $0x588] sm:$0xff]
    %v237 = vld [vmem:[#allocation3 + $0x590] sm:$0xff]
    %v238 = vld [vmem:[#allocation3 + $0x598] sm:$0xff]
    %v239 = vld [vmem:[#allocation3 + $0x5a0] sm:$0xff]
    %v240 = vld [vmem:[#allocation3 + $0x5a8] sm:$0xff]
    %v241 = vld [vmem:[#allocation3 + $0x5b0] sm:$0xff]
    %v242 = vld [vmem:[#allocation3 + $0x5b8] sm:$0xff]
    %v243 = vld [vmem:[#allocation3 + $0x5c0] sm:$0xff]
    %v244 = vld [vmem:[#allocation3 + $0x5c8] sm:$0xff]
    %v245 = vld [vmem:[#allocation3 + $0x5d0] sm:$0xff]
    %v246 = vld [vmem:[#allocation3 + $0x5d8] sm:$0xff]
    %v247 = vld [vmem:[#allocation3 + $0x5e0] sm:$0xff]
    %v248 = vld [vmem:[#allocation3 + $0x5e8] sm:$0xff]
    %v249 = vld [vmem:[#allocation3 + $0x5f0] sm:$0xff]
    %v250 = vld [vmem:[#allocation3 + $0x5f8] sm:$0xff]
    %v251 = vld [vmem:[#allocation3 + $0x600] sm:$0xff]
    %v252 = vld [vmem:[#allocation3 + $0x608] sm:$0xff]
    %v253 = vld [vmem:[#allocation3 + $0x610] sm:$0xff]
    %v254 = vld [vmem:[#allocation3 + $0x618] sm:$0xff]
    %v255 = vld [vmem:[#allocation3 + $0x620] sm:$0xff]
    %v256 = vld [vmem:[#allocation3 + $0x628] sm:$0xff]
    %v257 = vld [vmem:[#allocation3 + $0x630] sm:$0xff]
    %v258 = vld [vmem:[#allocation3 + $0x638] sm:$0xff]
    %v259 = vld [vmem:[#allocation3 + $0x640] sm:$0xff]
    %v260 = vld [vmem:[#allocation3 + $0x648] sm:$0xff]
    %v261 = vld [vmem:[#allocation3 + $0x650] sm:$0xff]
    %v262 = vld [vmem:[#allocation3 + $0x658] sm:$0xff]
    %v263 = vld [vmem:[#allocation3 + $0x660] sm:$0xff]
    %v264 = vld [vmem:[#allocation3 + $0x668] sm:$0xff]
    %v265 = vld [vmem:[#allocation3 + $0x670] sm:$0xff]
    %v266 = vld [vmem:[#allocation3 + $0x678] sm:$0xff]
    %v267 = vld [vmem:[#allocation3 + $0x680] sm:$0xff]
    %v268 = vld [vmem:[#allocation3 + $0x688] sm:$0xff]
    %v269 = vld [vmem:[#allocation3 + $0x690] sm:$0xff]
    %v270 = vld [vmem:[#allocation3 + $0x698] sm:$0xff]
    %v271 = vld [vmem:[#allocation3 + $0x6a0] sm:$0xff]
    %v272 = vld [vmem:[#allocation3 + $0x6a8] sm:$0xff]
    %v273 = vld [vmem:[#allocation3 + $0x6b0] sm:$0xff]
    %v274 = vld [vmem:[#allocation3 + $0x6b8] sm:$0xff]
    %v275 = vld [vmem:[#allocation3 + $0x6c0] sm:$0xff]
    %v276 = vld [vmem:[#allocation3 + $0x6c8] sm:$0xff]
    %v277 = vld [vmem:[#allocation3 + $0x6d0] sm:$0xff]
    %v278 = vld [vmem:[#allocation3 + $0x6d8] sm:$0xff]
    %v279 = vld [vmem:[#allocation3 + $0x6e0] sm:$0xff]
    %v280 = vld [vmem:[#allocation3 + $0x6e8] sm:$0xff]
    %v281 = vld [vmem:[#allocation3 + $0x6f0] sm:$0xff]
    %v282 = vld [vmem:[#allocation3 + $0x6f8] sm:$0xff]
    %v283 = vld [vmem:[#allocation3 + $0x700] sm:$0xff]
    %v284 = vld [vmem:[#allocation3 + $0x708] sm:$0xff]
    %v285 = vld [vmem:[#allocation3 + $0x710] sm:$0xff]
    %v286 = vld [vmem:[#allocation3 + $0x718] sm:$0xff]
    %v287 = vld [vmem:[#allocation3 + $0x720] sm:$0xff]
    %v288 = vld [vmem:[#allocation3 + $0x728] sm:$0xff]
    %v289 = vld [vmem:[#allocation3 + $0x730] sm:$0xff]
    %v290 = vld [vmem:[#allocation3 + $0x738] sm:$0xff]
    %v291 = vld [vmem:[#allocation3 + $0x740] sm:$0xff]
    %v292 = vld [vmem:[#allocation3 + $0x748] sm:$0xff]
    %v293 = vld [vmem:[#allocation3 + $0x750] sm:$0xff]
    %v294 = vld [vmem:[#allocation3 + $0x758] sm:$0xff]
    %v295 = vld [vmem:[#allocation3 + $0x760] sm:$0xff]
    %v296 = vld [vmem:[#allocation3 + $0x768] sm:$0xff]
    %v297 = vld [vmem:[#allocation3 + $0x770] sm:$0xff]
    %v298 = vld [vmem:[#allocation3 + $0x778] sm:$0xff]
    %v299 = vld [vmem:[%s2] sm:$0x1]
    %v301 = vperm.slane %v299, 0
    %318 = vst [vmem:[#allocation1] ss:$4 sm:$0xff] %v44
    %s319 = scalar_lea.vmem [#allocation1], 32
    %320 = vst [vmem:[%s319] ss:$4 sm:$0xff] %v45
    %v321 = vld.sshfl [vmem:[#allocation1] sm:$0xff pattern:$0x73625140]
    %v322 = vld.sshfl [vmem:[#allocation1 + $0x8] sm:$0xff pattern:$0x73625140]
    %v323 = vld.sshfl [vmem:[#allocation1 + $0x10] sm:$0xff pattern:$0x73625140]
    %v324 = vld.sshfl [vmem:[#allocation1 + $0x18] sm:$0xff pattern:$0x73625140]
    %v325 = vld.sshfl [vmem:[#allocation1 + $0x20] sm:$0xff pattern:$0x73625140]
    %v326 = vld.sshfl [vmem:[#allocation1 + $0x28] sm:$0xff pattern:$0x73625140]
    %v327 = vld.sshfl [vmem:[#allocation1 + $0x30] sm:$0xff pattern:$0x73625140]
    %v328 = vld.sshfl [vmem:[#allocation1 + $0x38] sm:$0xff pattern:$0x73625140]
    %329 = vst [vmem:[#allocation1] ss:$4 sm:$0xff] %v46
    %330 = vst [vmem:[%s319] ss:$4 sm:$0xff] %v47
    %v331 = vld.sshfl [vmem:[#allocation1] sm:$0xff pattern:$0x73625140]
    %v332 = vld.sshfl [vmem:[#allocation1 + $0x8] sm:$0xff pattern:$0x73625140]
    %v333 = vld.sshfl [vmem:[#allocation1 + $0x10] sm:$0xff pattern:$0x73625140]
    %v334 = vld.sshfl [vmem:[#allocation1 + $0x18] sm:$0xff pattern:$0x73625140]
    %v335 = vld.sshfl [vmem:[#allocation1 + $0x20] sm:$0xff pattern:$0x73625140]
    %v336 = vld.sshfl [vmem:[#allocation1 + $0x28] sm:$0xff pattern:$0x73625140]
    %v337 = vld.sshfl [vmem:[#allocation1 + $0x30] sm:$0xff pattern:$0x73625140]
    %v338 = vld.sshfl [vmem:[#allocation1 + $0x38] sm:$0xff pattern:$0x73625140]
    %339 = vst [vmem:[#allocation1] ss:$4 sm:$0xff] %v48
    %340 = vst [vmem:[%s319] ss:$4 sm:$0xff] %v49
    %v341 = vld.sshfl [vmem:[#allocation1] sm:$0xff pattern:$0x73625140]
    %v342 = vld.sshfl [vmem:[#allocation1 + $0x8] sm:$0xff pattern:$0x73625140]
    %v343 = vld.sshfl [vmem:[#allocation1 + $0x10] sm:$0xff pattern:$0x73625140]
    %v344 = vld.sshfl [vmem:[#allocation1 + $0x18] sm:$0xff pattern:$0x73625140]
    %v345 = vld.sshfl [vmem:[#allocation1 + $0x20] sm:$0xff pattern:$0x73625140]
    %v346 = vld.sshfl [vmem:[#allocation1 + $0x28] sm:$0xff pattern:$0x73625140]
    %v347 = vld.sshfl [vmem:[#allocation1 + $0x30] sm:$0xff pattern:$0x73625140]
    %v348 = vld.sshfl [vmem:[#allocation1 + $0x38] sm:$0xff pattern:$0x73625140]
    %349 = vst [vmem:[#allocation1] ss:$4 sm:$0xff] %v50
    %350 = vst [vmem:[%s319] ss:$4 sm:$0xff] %v51
    %v351 = vld.sshfl [vmem:[#allocation1] sm:$0xff pattern:$0x73625140]
    %v352 = vld.sshfl [vmem:[#allocation1 + $0x8] sm:$0xff pattern:$0x73625140]
    %v353 = vld.sshfl [vmem:[#allocation1 + $0x10] sm:$0xff pattern:$0x73625140]
    %v354 = vld.sshfl [vmem:[#allocation1 + $0x18] sm:$0xff pattern:$0x73625140]
    %v355 = vld.sshfl [vmem:[#allocation1 + $0x20] sm:$0xff pattern:$0x73625140]
    %v356 = vld.sshfl [vmem:[#allocation1 + $0x28] sm:$0xff pattern:$0x73625140]
    %v357 = vld.sshfl [vmem:[#allocation1 + $0x30] sm:$0xff pattern:$0x73625140]
    %v358 = vld.sshfl [vmem:[#allocation1 + $0x38] sm:$0xff pattern:$0x73625140]
    %359 = vst [vmem:[#allocation1] ss:$4 sm:$0xff] %v52
    %360 = vst [vmem:[%s319] ss:$4 sm:$0xff] %v53
    %v361 = vld.sshfl [vmem:[#allocation1] sm:$0xff pattern:$0x73625140]
    %v362 = vld.sshfl [vmem:[#allocation1 + $0x8] sm:$0xff pattern:$0x73625140]
    %v363 = vld.sshfl [vmem:[#allocation1 + $0x10] sm:$0xff pattern:$0x73625140]
    %v364 = vld.sshfl [vmem:[#allocation1 + $0x18] sm:$0xff pattern:$0x73625140]
    %v365 = vld.sshfl [vmem:[#allocation1 + $0x20] sm:$0xff pattern:$0x73625140]
    %v366 = vld.sshfl [vmem:[#allocation1 + $0x28] sm:$0xff pattern:$0x73625140]
    %v367 = vld.sshfl [vmem:[#allocation1 + $0x30] sm:$0xff pattern:$0x73625140]
    %v368 = vld.sshfl [vmem:[#allocation1 + $0x38] sm:$0xff pattern:$0x73625140]
    %369 = vst [vmem:[#allocation1] ss:$4 sm:$0xff] %v54
    %370 = vst [vmem:[%s319] ss:$4 sm:$0xff] %v55
    %v371 = vld.sshfl [vmem:[#allocation1] sm:$0xff pattern:$0x73625140]
    %v372 = vld.sshfl [vmem:[#allocation1 + $0x8] sm:$0xff pattern:$0x73625140]
    %v373 = vld.sshfl [vmem:[#allocation1 + $0x10] sm:$0xff pattern:$0x73625140]
    %v374 = vld.sshfl [vmem:[#allocation1 + $0x18] sm:$0xff pattern:$0x73625140]
    %v375 = vld.sshfl [vmem:[#allocation1 + $0x20] sm:$0xff pattern:$0x73625140]
    %v376 = vld.sshfl [vmem:[#allocation1 + $0x28] sm:$0xff pattern:$0x73625140]
    %v377 = vld.sshfl [vmem:[#allocation1 + $0x30] sm:$0xff pattern:$0x73625140]
    %v378 = vld.sshfl [vmem:[#allocation1 + $0x38] sm:$0xff pattern:$0x73625140]
    %379 = vst [vmem:[#allocation1] ss:$4 sm:$0xff] %v56
    %380 = vst [vmem:[%s319] ss:$4 sm:$0xff] %v57
    %v381 = vld.sshfl [vmem:[#allocation1] sm:$0xff pattern:$0x73625140]
    %v382 = vld.sshfl [vmem:[#allocation1 + $0x8] sm:$0xff pattern:$0x73625140]
    %v383 = vld.sshfl [vmem:[#allocation1 + $0x10] sm:$0xff pattern:$0x73625140]
    %v384 = vld.sshfl [vmem:[#allocation1 + $0x18] sm:$0xff pattern:$0x73625140]
    %v385 = vld.sshfl [vmem:[#allocation1 + $0x20] sm:$0xff pattern:$0x73625140]
    %v386 = vld.sshfl [vmem:[#allocation1 + $0x28] sm:$0xff pattern:$0x73625140]
    %v387 = vld.sshfl [vmem:[#allocation1 + $0x30] sm:$0xff pattern:$0x73625140]
    %v388 = vld.sshfl [vmem:[#allocation1 + $0x38] sm:$0xff pattern:$0x73625140]
    %389 = vst [vmem:[#allocation1] ss:$4 sm:$0xff] %v58
    %v390 = vld.sshfl [vmem:[#allocation1] sm:$0xff pattern:$0x73625140]
    %v391 = vld.sshfl [vmem:[#allocation1 + $0x8] sm:$0xff pattern:$0x73625140]
    %v392 = vld.sshfl [vmem:[#allocation1 + $0x10] sm:$0xff pattern:$0x73625140]
    %v393 = vld.sshfl [vmem:[#allocation1 + $0x18] sm:$0xff pattern:$0x73625140]
    %454 = vmatpush.xpose.msra.mxu0 0.0
    %455 = vmatpush.xpose.msra.mxu0 0.0
    %456 = vmatpush.xpose.msra.mxu0 0.0
    %457 = vmatpush.xpose.msra.mxu0 0.0
    %458 = vmatpush.xpose.msra.mxu0 0.0
    %459 = vmatpush.xpose.msra.mxu0 0.0
    %460 = vmatpush.xpose.msra.mxu0 0.0
    %461 = vmatpush.xpose.msra.mxu0 0.0
    %462 = vmatpush.xpose.msra.mxu0 0.0
    %463 = vmatpush.xpose.msra.mxu0 0.0
    %464 = vmatpush.xpose.msra.mxu0 0.0
    %465 = vmatpush.xpose.msra.mxu0 0.0
    %466 = vmatpush.xpose.msra.mxu0 %v239
    %467 = vmatpush.xpose.msra.mxu0 %v179
    %468 = vmatpush.xpose.msra.mxu0 %v119
    %469 = vmatpush.xpose.msra.mxu0 %v59
    %470 = vmatmul.f32.gmra.mxu0 %v321
    %v471 = vpop.f32.mrf.mxu0
    %v472 = vadd.f32 %v301, %v471
    %473 = vdwg.mxu0
    %474 = vmatpush.xpose.msra.mxu0 0.0
    %475 = vmatpush.xpose.msra.mxu0 0.0
    %476 = vmatpush.xpose.msra.mxu0 0.0
    %477 = vmatpush.xpose.msra.mxu0 0.0
    %478 = vmatpush.xpose.msra.mxu0 0.0
    %479 = vmatpush.xpose.msra.mxu0 0.0
    %480 = vmatpush.xpose.msra.mxu0 0.0
    %481 = vmatpush.xpose.msra.mxu0 0.0
    %482 = vmatpush.xpose.msra.mxu0 0.0
    %483 = vmatpush.xpose.msra.mxu0 0.0
    %484 = vmatpush.xpose.msra.mxu0 0.0
    %485 = vmatpush.xpose.msra.mxu0 0.0
    %486 = vmatpush.xpose.msra.mxu0 %v240
    %487 = vmatpush.xpose.msra.mxu0 %v180
    %488 = vmatpush.xpose.msra.mxu0 %v120
    %489 = vmatpush.xpose.msra.mxu0 %v60
    %490 = vmatmul.f32.gmra.mxu0 %v322
    %v491 = vpop.f32.mrf.mxu0
    %v492 = vadd.f32 %v472, %v491
    %493 = vdwg.mxu0
    %494 = vmatpush.xpose.msra.mxu0 0.0
    %495 = vmatpush.xpose.msra.mxu0 0.0
    %496 = vmatpush.xpose.msra.mxu0 0.0
    %497 = vmatpush.xpose.msra.mxu0 0.0
    %498 = vmatpush.xpose.msra.mxu0 0.0
    %499 = vmatpush.xpose.msra.mxu0 0.0
    %500 = vmatpush.xpose.msra.mxu0 0.0
    %501 = vmatpush.xpose.msra.mxu0 0.0
    %502 = vmatpush.xpose.msra.mxu0 0.0
    %503 = vmatpush.xpose.msra.mxu0 0.0
    %504 = vmatpush.xpose.msra.mxu0 0.0
    %505 = vmatpush.xpose.msra.mxu0 0.0
    %506 = vmatpush.xpose.msra.mxu0 %v241
    %507 = vmatpush.xpose.msra.mxu0 %v181
    %508 = vmatpush.xpose.msra.mxu0 %v121
    %509 = vmatpush.xpose.msra.mxu0 %v61
    %510 = vmatmul.f32.gmra.mxu0 %v323
    %v511 = vpop.f32.mrf.mxu0
    %v512 = vadd.f32 %v492, %v511
    %513 = vdwg.mxu0
    %514 = vmatpush.xpose.msra.mxu0 0.0
    %515 = vmatpush.xpose.msra.mxu0 0.0
    %516 = vmatpush.xpose.msra.mxu0 0.0
    %517 = vmatpush.xpose.msra.mxu0 0.0
    %518 = vmatpush.xpose.msra.mxu0 0.0
    %519 = vmatpush.xpose.msra.mxu0 0.0
    %520 = vmatpush.xpose.msra.mxu0 0.0
    %521 = vmatpush.xpose.msra.mxu0 0.0
    %522 = vmatpush.xpose.msra.mxu0 0.0
    %523 = vmatpush.xpose.msra.mxu0 0.0
    %524 = vmatpush.xpose.msra.mxu0 0.0
    %525 = vmatpush.xpose.msra.mxu0 0.0
    %526 = vmatpush.xpose.msra.mxu0 %v242
    %527 = vmatpush.xpose.msra.mxu0 %v182
    %528 = vmatpush.xpose.msra.mxu0 %v122
    %529 = vmatpush.xpose.msra.mxu0 %v62
    %530 = vmatmul.f32.gmra.mxu0 %v324
    %v531 = vpop.f32.mrf.mxu0
    %v532 = vadd.f32 %v512, %v531
    %533 = vdwg.mxu0
    %534 = vmatpush.xpose.msra.mxu0 0.0
    %535 = vmatpush.xpose.msra.mxu0 0.0
    %536 = vmatpush.xpose.msra.mxu0 0.0
    %537 = vmatpush.xpose.msra.mxu0 0.0
    %538 = vmatpush.xpose.msra.mxu0 0.0
    %539 = vmatpush.xpose.msra.mxu0 0.0
    %540 = vmatpush.xpose.msra.mxu0 0.0
    %541 = vmatpush.xpose.msra.mxu0 0.0
    %542 = vmatpush.xpose.msra.mxu0 0.0
    %543 = vmatpush.xpose.msra.mxu0 0.0
    %544 = vmatpush.xpose.msra.mxu0 0.0
    %545 = vmatpush.xpose.msra.mxu0 0.0
    %546 = vmatpush.xpose.msra.mxu0 %v243
    %547 = vmatpush.xpose.msra.mxu0 %v183
    %548 = vmatpush.xpose.msra.mxu0 %v123
    %549 = vmatpush.xpose.msra.mxu0 %v63
    %550 = vmatmul.f32.gmra.mxu0 %v325
    %v551 = vpop.f32.mrf.mxu0
    %v552 = vadd.f32 %v532, %v551
    %553 = vdwg.mxu0
    %554 = vmatpush.xpose.msra.mxu0 0.0
    %555 = vmatpush.xpose.msra.mxu0 0.0
    %556 = vmatpush.xpose.msra.mxu0 0.0
    %557 = vmatpush.xpose.msra.mxu0 0.0
    %558 = vmatpush.xpose.msra.mxu0 0.0
    %559 = vmatpush.xpose.msra.mxu0 0.0
    %560 = vmatpush.xpose.msra.mxu0 0.0
    %561 = vmatpush.xpose.msra.mxu0 0.0
    %562 = vmatpush.xpose.msra.mxu0 0.0
    %563 = vmatpush.xpose.msra.mxu0 0.0
    %564 = vmatpush.xpose.msra.mxu0 0.0
    %565 = vmatpush.xpose.msra.mxu0 0.0
    %566 = vmatpush.xpose.msra.mxu0 %v244
    %567 = vmatpush.xpose.msra.mxu0 %v184
    %568 = vmatpush.xpose.msra.mxu0 %v124
    %569 = vmatpush.xpose.msra.mxu0 %v64
    %570 = vmatmul.f32.gmra.mxu0 %v326
    %v571 = vpop.f32.mrf.mxu0
    %v572 = vadd.f32 %v552, %v571
    %573 = vdwg.mxu0
    %574 = vmatpush.xpose.msra.mxu0 0.0
    %575 = vmatpush.xpose.msra.mxu0 0.0
    %576 = vmatpush.xpose.msra.mxu0 0.0
    %577 = vmatpush.xpose.msra.mxu0 0.0
    %578 = vmatpush.xpose.msra.mxu0 0.0
    %579 = vmatpush.xpose.msra.mxu0 0.0
    %580 = vmatpush.xpose.msra.mxu0 0.0
    %581 = vmatpush.xpose.msra.mxu0 0.0
    %582 = vmatpush.xpose.msra.mxu0 0.0
    %583 = vmatpush.xpose.msra.mxu0 0.0
    %584 = vmatpush.xpose.msra.mxu0 0.0
    %585 = vmatpush.xpose.msra.mxu0 0.0
    %586 = vmatpush.xpose.msra.mxu0 %v245
    %587 = vmatpush.xpose.msra.mxu0 %v185
    %588 = vmatpush.xpose.msra.mxu0 %v125
    %589 = vmatpush.xpose.msra.mxu0 %v65
    %590 = vmatmul.f32.gmra.mxu0 %v327
    %v591 = vpop.f32.mrf.mxu0
    %v592 = vadd.f32 %v572, %v591
    %593 = vdwg.mxu0
    %594 = vmatpush.xpose.msra.mxu0 0.0
    %595 = vmatpush.xpose.msra.mxu0 0.0
    %596 = vmatpush.xpose.msra.mxu0 0.0
    %597 = vmatpush.xpose.msra.mxu0 0.0
    %598 = vmatpush.xpose.msra.mxu0 0.0
    %599 = vmatpush.xpose.msra.mxu0 0.0
    %600 = vmatpush.xpose.msra.mxu0 0.0
    %601 = vmatpush.xpose.msra.mxu0 0.0
    %602 = vmatpush.xpose.msra.mxu0 0.0
    %603 = vmatpush.xpose.msra.mxu0 0.0
    %604 = vmatpush.xpose.msra.mxu0 0.0
    %605 = vmatpush.xpose.msra.mxu0 0.0
    %606 = vmatpush.xpose.msra.mxu0 %v246
    %607 = vmatpush.xpose.msra.mxu0 %v186
    %608 = vmatpush.xpose.msra.mxu0 %v126
    %609 = vmatpush.xpose.msra.mxu0 %v66
    %610 = vmatmul.f32.gmra.mxu0 %v328
    %v611 = vpop.f32.mrf.mxu0
    %v612 = vadd.f32 %v592, %v611
    %613 = vdwg.mxu0
    %614 = vmatpush.xpose.msra.mxu0 0.0
    %615 = vmatpush.xpose.msra.mxu0 0.0
    %616 = vmatpush.xpose.msra.mxu0 0.0
    %617 = vmatpush.xpose.msra.mxu0 0.0
    %618 = vmatpush.xpose.msra.mxu0 0.0
    %619 = vmatpush.xpose.msra.mxu0 0.0
    %620 = vmatpush.xpose.msra.mxu0 0.0
    %621 = vmatpush.xpose.msra.mxu0 0.0
    %622 = vmatpush.xpose.msra.mxu0 0.0
    %623 = vmatpush.xpose.msra.mxu0 0.0
    %624 = vmatpush.xpose.msra.mxu0 0.0
    %625 = vmatpush.xpose.msra.mxu0 0.0
    %626 = vmatpush.xpose.msra.mxu0 %v247
    %627 = vmatpush.xpose.msra.mxu0 %v187
    %628 = vmatpush.xpose.msra.mxu0 %v127
    %629 = vmatpush.xpose.msra.mxu0 %v67
    %630 = vmatmul.f32.gmra.mxu0 %v331
    %v631 = vpop.f32.mrf.mxu0
    %v632 = vadd.f32 %v612, %v631
    %633 = vdwg.mxu0
    %634 = vmatpush.xpose.msra.mxu0 0.0
    %635 = vmatpush.xpose.msra.mxu0 0.0
    %636 = vmatpush.xpose.msra.mxu0 0.0
    %637 = vmatpush.xpose.msra.mxu0 0.0
    %638 = vmatpush.xpose.msra.mxu0 0.0
    %639 = vmatpush.xpose.msra.mxu0 0.0
    %640 = vmatpush.xpose.msra.mxu0 0.0
    %641 = vmatpush.xpose.msra.mxu0 0.0
    %642 = vmatpush.xpose.msra.mxu0 0.0
    %643 = vmatpush.xpose.msra.mxu0 0.0
    %644 = vmatpush.xpose.msra.mxu0 0.0
    %645 = vmatpush.xpose.msra.mxu0 0.0
    %646 = vmatpush.xpose.msra.mxu0 %v248
    %647 = vmatpush.xpose.msra.mxu0 %v188
    %648 = vmatpush.xpose.msra.mxu0 %v128
    %649 = vmatpush.xpose.msra.mxu0 %v68
    %650 = vmatmul.f32.gmra.mxu0 %v332
    %v651 = vpop.f32.mrf.mxu0
    %v652 = vadd.f32 %v632, %v651
    %653 = vdwg.mxu0
    %654 = vmatpush.xpose.msra.mxu0 0.0
    %655 = vmatpush.xpose.msra.mxu0 0.0
    %656 = vmatpush.xpose.msra.mxu0 0.0
    %657 = vmatpush.xpose.msra.mxu0 0.0
    %658 = vmatpush.xpose.msra.mxu0 0.0
    %659 = vmatpush.xpose.msra.mxu0 0.0
    %660 = vmatpush.xpose.msra.mxu0 0.0
    %661 = vmatpush.xpose.msra.mxu0 0.0
    %662 = vmatpush.xpose.msra.mxu0 0.0
    %663 = vmatpush.xpose.msra.mxu0 0.0
    %664 = vmatpush.xpose.msra.mxu0 0.0
    %665 = vmatpush.xpose.msra.mxu0 0.0
    %666 = vmatpush.xpose.msra.mxu0 %v249
    %667 = vmatpush.xpose.msra.mxu0 %v189
    %668 = vmatpush.xpose.msra.mxu0 %v129
    %669 = vmatpush.xpose.msra.mxu0 %v69
    %670 = vmatmul.f32.gmra.mxu0 %v333
    %v671 = vpop.f32.mrf.mxu0
    %v672 = vadd.f32 %v652, %v671
    %673 = vdwg.mxu0
    %674 = vmatpush.xpose.msra.mxu0 0.0
    %675 = vmatpush.xpose.msra.mxu0 0.0
    %676 = vmatpush.xpose.msra.mxu0 0.0
    %677 = vmatpush.xpose.msra.mxu0 0.0
    %678 = vmatpush.xpose.msra.mxu0 0.0
    %679 = vmatpush.xpose.msra.mxu0 0.0
    %680 = vmatpush.xpose.msra.mxu0 0.0
    %681 = vmatpush.xpose.msra.mxu0 0.0
    %682 = vmatpush.xpose.msra.mxu0 0.0
    %683 = vmatpush.xpose.msra.mxu0 0.0
    %684 = vmatpush.xpose.msra.mxu0 0.0
    %685 = vmatpush.xpose.msra.mxu0 0.0
    %686 = vmatpush.xpose.msra.mxu0 %v250
    %687 = vmatpush.xpose.msra.mxu0 %v190
    %688 = vmatpush.xpose.msra.mxu0 %v130
    %689 = vmatpush.xpose.msra.mxu0 %v70
    %690 = vmatmul.f32.gmra.mxu0 %v334
    %v691 = vpop.f32.mrf.mxu0
    %v692 = vadd.f32 %v672, %v691
    %693 = vdwg.mxu0
    %694 = vmatpush.xpose.msra.mxu0 0.0
    %695 = vmatpush.xpose.msra.mxu0 0.0
    %696 = vmatpush.xpose.msra.mxu0 0.0
    %697 = vmatpush.xpose.msra.mxu0 0.0
    %698 = vmatpush.xpose.msra.mxu0 0.0
    %699 = vmatpush.xpose.msra.mxu0 0.0
    %700 = vmatpush.xpose.msra.mxu0 0.0
    %701 = vmatpush.xpose.msra.mxu0 0.0
    %702 = vmatpush.xpose.msra.mxu0 0.0
    %703 = vmatpush.xpose.msra.mxu0 0.0
    %704 = vmatpush.xpose.msra.mxu0 0.0
    %705 = vmatpush.xpose.msra.mxu0 0.0
    %706 = vmatpush.xpose.msra.mxu0 %v251
    %707 = vmatpush.xpose.msra.mxu0 %v191
    %708 = vmatpush.xpose.msra.mxu0 %v131
    %709 = vmatpush.xpose.msra.mxu0 %v71
    %710 = vmatmul.f32.gmra.mxu0 %v335
    %v711 = vpop.f32.mrf.mxu0
    %v712 = vadd.f32 %v692, %v711
    %713 = vdwg.mxu0
    %714 = vmatpush.xpose.msra.mxu0 0.0
    %715 = vmatpush.xpose.msra.mxu0 0.0
    %716 = vmatpush.xpose.msra.mxu0 0.0
    %717 = vmatpush.xpose.msra.mxu0 0.0
    %718 = vmatpush.xpose.msra.mxu0 0.0
    %719 = vmatpush.xpose.msra.mxu0 0.0
    %720 = vmatpush.xpose.msra.mxu0 0.0
    %721 = vmatpush.xpose.msra.mxu0 0.0
    %722 = vmatpush.xpose.msra.mxu0 0.0
    %723 = vmatpush.xpose.msra.mxu0 0.0
    %724 = vmatpush.xpose.msra.mxu0 0.0
    %725 = vmatpush.xpose.msra.mxu0 0.0
    %726 = vmatpush.xpose.msra.mxu0 %v252
    %727 = vmatpush.xpose.msra.mxu0 %v192
    %728 = vmatpush.xpose.msra.mxu0 %v132
    %729 = vmatpush.xpose.msra.mxu0 %v72
    %730 = vmatmul.f32.gmra.mxu0 %v336
    %v731 = vpop.f32.mrf.mxu0
    %v732 = vadd.f32 %v712, %v731
    %733 = vdwg.mxu0
    %734 = vmatpush.xpose.msra.mxu0 0.0
    %735 = vmatpush.xpose.msra.mxu0 0.0
    %736 = vmatpush.xpose.msra.mxu0 0.0
    %737 = vmatpush.xpose.msra.mxu0 0.0
    %738 = vmatpush.xpose.msra.mxu0 0.0
    %739 = vmatpush.xpose.msra.mxu0 0.0
    %740 = vmatpush.xpose.msra.mxu0 0.0
    %741 = vmatpush.xpose.msra.mxu0 0.0
    %742 = vmatpush.xpose.msra.mxu0 0.0
    %743 = vmatpush.xpose.msra.mxu0 0.0
    %744 = vmatpush.xpose.msra.mxu0 0.0
    %745 = vmatpush.xpose.msra.mxu0 0.0
    %746 = vmatpush.xpose.msra.mxu0 %v253
    %747 = vmatpush.xpose.msra.mxu0 %v193
    %748 = vmatpush.xpose.msra.mxu0 %v133
    %749 = vmatpush.xpose.msra.mxu0 %v73
    %750 = vmatmul.f32.gmra.mxu0 %v337
    %v751 = vpop.f32.mrf.mxu0
    %v752 = vadd.f32 %v732, %v751
    %753 = vdwg.mxu0
    %754 = vmatpush.xpose.msra.mxu0 0.0
    %755 = vmatpush.xpose.msra.mxu0 0.0
    %756 = vmatpush.xpose.msra.mxu0 0.0
    %757 = vmatpush.xpose.msra.mxu0 0.0
    %758 = vmatpush.xpose.msra.mxu0 0.0
    %759 = vmatpush.xpose.msra.mxu0 0.0
    %760 = vmatpush.xpose.msra.mxu0 0.0
    %761 = vmatpush.xpose.msra.mxu0 0.0
    %762 = vmatpush.xpose.msra.mxu0 0.0
    %763 = vmatpush.xpose.msra.mxu0 0.0
    %764 = vmatpush.xpose.msra.mxu0 0.0
    %765 = vmatpush.xpose.msra.mxu0 0.0
    %766 = vmatpush.xpose.msra.mxu0 %v254
    %767 = vmatpush.xpose.msra.mxu0 %v194
    %768 = vmatpush.xpose.msra.mxu0 %v134
    %769 = vmatpush.xpose.msra.mxu0 %v74
    %770 = vmatmul.f32.gmra.mxu0 %v338
    %v771 = vpop.f32.mrf.mxu0
    %v772 = vadd.f32 %v752, %v771
    %773 = vdwg.mxu0
    %774 = vmatpush.xpose.msra.mxu0 0.0
    %775 = vmatpush.xpose.msra.mxu0 0.0
    %776 = vmatpush.xpose.msra.mxu0 0.0
    %777 = vmatpush.xpose.msra.mxu0 0.0
    %778 = vmatpush.xpose.msra.mxu0 0.0
    %779 = vmatpush.xpose.msra.mxu0 0.0
    %780 = vmatpush.xpose.msra.mxu0 0.0
    %781 = vmatpush.xpose.msra.mxu0 0.0
    %782 = vmatpush.xpose.msra.mxu0 0.0
    %783 = vmatpush.xpose.msra.mxu0 0.0
    %784 = vmatpush.xpose.msra.mxu0 0.0
    %785 = vmatpush.xpose.msra.mxu0 0.0
    %786 = vmatpush.xpose.msra.mxu0 %v255
    %787 = vmatpush.xpose.msra.mxu0 %v195
    %788 = vmatpush.xpose.msra.mxu0 %v135
    %789 = vmatpush.xpose.msra.mxu0 %v75
    %790 = vmatmul.f32.gmra.mxu0 %v341
    %v791 = vpop.f32.mrf.mxu0
    %v792 = vadd.f32 %v772, %v791
    %793 = vdwg.mxu0
    %794 = vmatpush.xpose.msra.mxu0 0.0
    %795 = vmatpush.xpose.msra.mxu0 0.0
    %796 = vmatpush.xpose.msra.mxu0 0.0
    %797 = vmatpush.xpose.msra.mxu0 0.0
    %798 = vmatpush.xpose.msra.mxu0 0.0
    %799 = vmatpush.xpose.msra.mxu0 0.0
    %800 = vmatpush.xpose.msra.mxu0 0.0
    %801 = vmatpush.xpose.msra.mxu0 0.0
    %802 = vmatpush.xpose.msra.mxu0 0.0
    %803 = vmatpush.xpose.msra.mxu0 0.0
    %804 = vmatpush.xpose.msra.mxu0 0.0
    %805 = vmatpush.xpose.msra.mxu0 0.0
    %806 = vmatpush.xpose.msra.mxu0 %v256
    %807 = vmatpush.xpose.msra.mxu0 %v196
    %808 = vmatpush.xpose.msra.mxu0 %v136
    %809 = vmatpush.xpose.msra.mxu0 %v76
    %810 = vmatmul.f32.gmra.mxu0 %v342
    %v811 = vpop.f32.mrf.mxu0
    %v812 = vadd.f32 %v792, %v811
    %813 = vdwg.mxu0
    %814 = vmatpush.xpose.msra.mxu0 0.0
    %815 = vmatpush.xpose.msra.mxu0 0.0
    %816 = vmatpush.xpose.msra.mxu0 0.0
    %817 = vmatpush.xpose.msra.mxu0 0.0
    %818 = vmatpush.xpose.msra.mxu0 0.0
    %819 = vmatpush.xpose.msra.mxu0 0.0
    %820 = vmatpush.xpose.msra.mxu0 0.0
    %821 = vmatpush.xpose.msra.mxu0 0.0
    %822 = vmatpush.xpose.msra.mxu0 0.0
    %823 = vmatpush.xpose.msra.mxu0 0.0
    %824 = vmatpush.xpose.msra.mxu0 0.0
    %825 = vmatpush.xpose.msra.mxu0 0.0
    %826 = vmatpush.xpose.msra.mxu0 %v257
    %827 = vmatpush.xpose.msra.mxu0 %v197
    %828 = vmatpush.xpose.msra.mxu0 %v137
    %829 = vmatpush.xpose.msra.mxu0 %v77
    %830 = vmatmul.f32.gmra.mxu0 %v343
    %v831 = vpop.f32.mrf.mxu0
    %v832 = vadd.f32 %v812, %v831
    %833 = vdwg.mxu0
    %834 = vmatpush.xpose.msra.mxu0 0.0
    %835 = vmatpush.xpose.msra.mxu0 0.0
    %836 = vmatpush.xpose.msra.mxu0 0.0
    %837 = vmatpush.xpose.msra.mxu0 0.0
    %838 = vmatpush.xpose.msra.mxu0 0.0
    %839 = vmatpush.xpose.msra.mxu0 0.0
    %840 = vmatpush.xpose.msra.mxu0 0.0
    %841 = vmatpush.xpose.msra.mxu0 0.0
    %842 = vmatpush.xpose.msra.mxu0 0.0
    %843 = vmatpush.xpose.msra.mxu0 0.0
    %844 = vmatpush.xpose.msra.mxu0 0.0
    %845 = vmatpush.xpose.msra.mxu0 0.0
    %846 = vmatpush.xpose.msra.mxu0 %v258
    %847 = vmatpush.xpose.msra.mxu0 %v198
    %848 = vmatpush.xpose.msra.mxu0 %v138
    %849 = vmatpush.xpose.msra.mxu0 %v78
    %850 = vmatmul.f32.gmra.mxu0 %v344
    %v851 = vpop.f32.mrf.mxu0
    %v852 = vadd.f32 %v832, %v851
    %853 = vdwg.mxu0
    %854 = vmatpush.xpose.msra.mxu0 0.0
    %855 = vmatpush.xpose.msra.mxu0 0.0
    %856 = vmatpush.xpose.msra.mxu0 0.0
    %857 = vmatpush.xpose.msra.mxu0 0.0
    %858 = vmatpush.xpose.msra.mxu0 0.0
    %859 = vmatpush.xpose.msra.mxu0 0.0
    %860 = vmatpush.xpose.msra.mxu0 0.0
    %861 = vmatpush.xpose.msra.mxu0 0.0
    %862 = vmatpush.xpose.msra.mxu0 0.0
    %863 = vmatpush.xpose.msra.mxu0 0.0
    %864 = vmatpush.xpose.msra.mxu0 0.0
    %865 = vmatpush.xpose.msra.mxu0 0.0
    %866 = vmatpush.xpose.msra.mxu0 %v259
    %867 = vmatpush.xpose.msra.mxu0 %v199
    %868 = vmatpush.xpose.msra.mxu0 %v139
    %869 = vmatpush.xpose.msra.mxu0 %v79
    %870 = vmatmul.f32.gmra.mxu0 %v345
    %v871 = vpop.f32.mrf.mxu0
    %v872 = vadd.f32 %v852, %v871
    %873 = vdwg.mxu0
    %874 = vmatpush.xpose.msra.mxu0 0.0
    %875 = vmatpush.xpose.msra.mxu0 0.0
    %876 = vmatpush.xpose.msra.mxu0 0.0
    %877 = vmatpush.xpose.msra.mxu0 0.0
    %878 = vmatpush.xpose.msra.mxu0 0.0
    %879 = vmatpush.xpose.msra.mxu0 0.0
    %880 = vmatpush.xpose.msra.mxu0 0.0
    %881 = vmatpush.xpose.msra.mxu0 0.0
    %882 = vmatpush.xpose.msra.mxu0 0.0
    %883 = vmatpush.xpose.msra.mxu0 0.0
    %884 = vmatpush.xpose.msra.mxu0 0.0
    %885 = vmatpush.xpose.msra.mxu0 0.0
    %886 = vmatpush.xpose.msra.mxu0 %v260
    %887 = vmatpush.xpose.msra.mxu0 %v200
    %888 = vmatpush.xpose.msra.mxu0 %v140
    %889 = vmatpush.xpose.msra.mxu0 %v80
    %890 = vmatmul.f32.gmra.mxu0 %v346
    %v891 = vpop.f32.mrf.mxu0
    %v892 = vadd.f32 %v872, %v891
    %893 = vdwg.mxu0
    %894 = vmatpush.xpose.msra.mxu0 0.0
    %895 = vmatpush.xpose.msra.mxu0 0.0
    %896 = vmatpush.xpose.msra.mxu0 0.0
    %897 = vmatpush.xpose.msra.mxu0 0.0
    %898 = vmatpush.xpose.msra.mxu0 0.0
    %899 = vmatpush.xpose.msra.mxu0 0.0
    %900 = vmatpush.xpose.msra.mxu0 0.0
    %901 = vmatpush.xpose.msra.mxu0 0.0
    %902 = vmatpush.xpose.msra.mxu0 0.0
    %903 = vmatpush.xpose.msra.mxu0 0.0
    %904 = vmatpush.xpose.msra.mxu0 0.0
    %905 = vmatpush.xpose.msra.mxu0 0.0
    %906 = vmatpush.xpose.msra.mxu0 %v261
    %907 = vmatpush.xpose.msra.mxu0 %v201
    %908 = vmatpush.xpose.msra.mxu0 %v141
    %909 = vmatpush.xpose.msra.mxu0 %v81
    %910 = vmatmul.f32.gmra.mxu0 %v347
    %v911 = vpop.f32.mrf.mxu0
    %v912 = vadd.f32 %v892, %v911
    %913 = vdwg.mxu0
    %914 = vmatpush.xpose.msra.mxu0 0.0
    %915 = vmatpush.xpose.msra.mxu0 0.0
    %916 = vmatpush.xpose.msra.mxu0 0.0
    %917 = vmatpush.xpose.msra.mxu0 0.0
    %918 = vmatpush.xpose.msra.mxu0 0.0
    %919 = vmatpush.xpose.msra.mxu0 0.0
    %920 = vmatpush.xpose.msra.mxu0 0.0
    %921 = vmatpush.xpose.msra.mxu0 0.0
    %922 = vmatpush.xpose.msra.mxu0 0.0
    %923 = vmatpush.xpose.msra.mxu0 0.0
    %924 = vmatpush.xpose.msra.mxu0 0.0
    %925 = vmatpush.xpose.msra.mxu0 0.0
    %926 = vmatpush.xpose.msra.mxu0 %v262
    %927 = vmatpush.xpose.msra.mxu0 %v202
    %928 = vmatpush.xpose.msra.mxu0 %v142
    %929 = vmatpush.xpose.msra.mxu0 %v82
    %930 = vmatmul.f32.gmra.mxu0 %v348
    %v931 = vpop.f32.mrf.mxu0
    %v932 = vadd.f32 %v912, %v931
    %933 = vdwg.mxu0
    %934 = vmatpush.xpose.msra.mxu0 0.0
    %935 = vmatpush.xpose.msra.mxu0 0.0
    %936 = vmatpush.xpose.msra.mxu0 0.0
    %937 = vmatpush.xpose.msra.mxu0 0.0
    %938 = vmatpush.xpose.msra.mxu0 0.0
    %939 = vmatpush.xpose.msra.mxu0 0.0
    %940 = vmatpush.xpose.msra.mxu0 0.0
    %941 = vmatpush.xpose.msra.mxu0 0.0
    %942 = vmatpush.xpose.msra.mxu0 0.0
    %943 = vmatpush.xpose.msra.mxu0 0.0
    %944 = vmatpush.xpose.msra.mxu0 0.0
    %945 = vmatpush.xpose.msra.mxu0 0.0
    %946 = vmatpush.xpose.msra.mxu0 %v263
    %947 = vmatpush.xpose.msra.mxu0 %v203
    %948 = vmatpush.xpose.msra.mxu0 %v143
    %949 = vmatpush.xpose.msra.mxu0 %v83
    %950 = vmatmul.f32.gmra.mxu0 %v351
    %v951 = vpop.f32.mrf.mxu0
    %v952 = vadd.f32 %v932, %v951
    %953 = vdwg.mxu0
    %954 = vmatpush.xpose.msra.mxu0 0.0
    %955 = vmatpush.xpose.msra.mxu0 0.0
    %956 = vmatpush.xpose.msra.mxu0 0.0
    %957 = vmatpush.xpose.msra.mxu0 0.0
    %958 = vmatpush.xpose.msra.mxu0 0.0
    %959 = vmatpush.xpose.msra.mxu0 0.0
    %960 = vmatpush.xpose.msra.mxu0 0.0
    %961 = vmatpush.xpose.msra.mxu0 0.0
    %962 = vmatpush.xpose.msra.mxu0 0.0
    %963 = vmatpush.xpose.msra.mxu0 0.0
    %964 = vmatpush.xpose.msra.mxu0 0.0
    %965 = vmatpush.xpose.msra.mxu0 0.0
    %966 = vmatpush.xpose.msra.mxu0 %v264
    %967 = vmatpush.xpose.msra.mxu0 %v204
    %968 = vmatpush.xpose.msra.mxu0 %v144
    %969 = vmatpush.xpose.msra.mxu0 %v84
    %970 = vmatmul.f32.gmra.mxu0 %v352
    %v971 = vpop.f32.mrf.mxu0
    %v972 = vadd.f32 %v952, %v971
    %973 = vdwg.mxu0
    %974 = vmatpush.xpose.msra.mxu0 0.0
    %975 = vmatpush.xpose.msra.mxu0 0.0
    %976 = vmatpush.xpose.msra.mxu0 0.0
    %977 = vmatpush.xpose.msra.mxu0 0.0
    %978 = vmatpush.xpose.msra.mxu0 0.0
    %979 = vmatpush.xpose.msra.mxu0 0.0
    %980 = vmatpush.xpose.msra.mxu0 0.0
    %981 = vmatpush.xpose.msra.mxu0 0.0
    %982 = vmatpush.xpose.msra.mxu0 0.0
    %983 = vmatpush.xpose.msra.mxu0 0.0
    %984 = vmatpush.xpose.msra.mxu0 0.0
    %985 = vmatpush.xpose.msra.mxu0 0.0
    %986 = vmatpush.xpose.msra.mxu0 %v265
    %987 = vmatpush.xpose.msra.mxu0 %v205
    %988 = vmatpush.xpose.msra.mxu0 %v145
    %989 = vmatpush.xpose.msra.mxu0 %v85
    %990 = vmatmul.f32.gmra.mxu0 %v353
    %v991 = vpop.f32.mrf.mxu0
    %v992 = vadd.f32 %v972, %v991
    %993 = vdwg.mxu0
    %994 = vmatpush.xpose.msra.mxu0 0.0
    %995 = vmatpush.xpose.msra.mxu0 0.0
    %996 = vmatpush.xpose.msra.mxu0 0.0
    %997 = vmatpush.xpose.msra.mxu0 0.0
    %998 = vmatpush.xpose.msra.mxu0 0.0
    %999 = vmatpush.xpose.msra.mxu0 0.0
    %1000 = vmatpush.xpose.msra.mxu0 0.0
    %1001 = vmatpush.xpose.msra.mxu0 0.0
    %1002 = vmatpush.xpose.msra.mxu0 0.0
    %1003 = vmatpush.xpose.msra.mxu0 0.0
    %1004 = vmatpush.xpose.msra.mxu0 0.0
    %1005 = vmatpush.xpose.msra.mxu0 0.0
    %1006 = vmatpush.xpose.msra.mxu0 %v266
    %1007 = vmatpush.xpose.msra.mxu0 %v206
    %1008 = vmatpush.xpose.msra.mxu0 %v146
    %1009 = vmatpush.xpose.msra.mxu0 %v86
    %1010 = vmatmul.f32.gmra.mxu0 %v354
    %v1011 = vpop.f32.mrf.mxu0
    %v1012 = vadd.f32 %v992, %v1011
    %1013 = vdwg.mxu0
    %1014 = vmatpush.xpose.msra.mxu0 0.0
    %1015 = vmatpush.xpose.msra.mxu0 0.0
    %1016 = vmatpush.xpose.msra.mxu0 0.0
    %1017 = vmatpush.xpose.msra.mxu0 0.0
    %1018 = vmatpush.xpose.msra.mxu0 0.0
    %1019 = vmatpush.xpose.msra.mxu0 0.0
    %1020 = vmatpush.xpose.msra.mxu0 0.0
    %1021 = vmatpush.xpose.msra.mxu0 0.0
    %1022 = vmatpush.xpose.msra.mxu0 0.0
    %1023 = vmatpush.xpose.msra.mxu0 0.0
    %1024 = vmatpush.xpose.msra.mxu0 0.0
    %1025 = vmatpush.xpose.msra.mxu0 0.0
    %1026 = vmatpush.xpose.msra.mxu0 %v267
    %1027 = vmatpush.xpose.msra.mxu0 %v207
    %1028 = vmatpush.xpose.msra.mxu0 %v147
    %1029 = vmatpush.xpose.msra.mxu0 %v87
    %1030 = vmatmul.f32.gmra.mxu0 %v355
    %v1031 = vpop.f32.mrf.mxu0
    %v1032 = vadd.f32 %v1012, %v1031
    %1033 = vdwg.mxu0
    %1034 = vmatpush.xpose.msra.mxu0 0.0
    %1035 = vmatpush.xpose.msra.mxu0 0.0
    %1036 = vmatpush.xpose.msra.mxu0 0.0
    %1037 = vmatpush.xpose.msra.mxu0 0.0
    %1038 = vmatpush.xpose.msra.mxu0 0.0
    %1039 = vmatpush.xpose.msra.mxu0 0.0
    %1040 = vmatpush.xpose.msra.mxu0 0.0
    %1041 = vmatpush.xpose.msra.mxu0 0.0
    %1042 = vmatpush.xpose.msra.mxu0 0.0
    %1043 = vmatpush.xpose.msra.mxu0 0.0
    %1044 = vmatpush.xpose.msra.mxu0 0.0
    %1045 = vmatpush.xpose.msra.mxu0 0.0
    %1046 = vmatpush.xpose.msra.mxu0 %v268
    %1047 = vmatpush.xpose.msra.mxu0 %v208
    %1048 = vmatpush.xpose.msra.mxu0 %v148
    %1049 = vmatpush.xpose.msra.mxu0 %v88
    %1050 = vmatmul.f32.gmra.mxu0 %v356
    %v1051 = vpop.f32.mrf.mxu0
    %v1052 = vadd.f32 %v1032, %v1051
    %1053 = vdwg.mxu0
    %1054 = vmatpush.xpose.msra.mxu0 0.0
    %1055 = vmatpush.xpose.msra.mxu0 0.0
    %1056 = vmatpush.xpose.msra.mxu0 0.0
    %1057 = vmatpush.xpose.msra.mxu0 0.0
    %1058 = vmatpush.xpose.msra.mxu0 0.0
    %1059 = vmatpush.xpose.msra.mxu0 0.0
    %1060 = vmatpush.xpose.msra.mxu0 0.0
    %1061 = vmatpush.xpose.msra.mxu0 0.0
    %1062 = vmatpush.xpose.msra.mxu0 0.0
    %1063 = vmatpush.xpose.msra.mxu0 0.0
    %1064 = vmatpush.xpose.msra.mxu0 0.0
    %1065 = vmatpush.xpose.msra.mxu0 0.0
    %1066 = vmatpush.xpose.msra.mxu0 %v269
    %1067 = vmatpush.xpose.msra.mxu0 %v209
    %1068 = vmatpush.xpose.msra.mxu0 %v149
    %1069 = vmatpush.xpose.msra.mxu0 %v89
    %1070 = vmatmul.f32.gmra.mxu0 %v357
    %v1071 = vpop.f32.mrf.mxu0
    %v1072 = vadd.f32 %v1052, %v1071
    %1073 = vdwg.mxu0
    %1074 = vmatpush.xpose.msra.mxu0 0.0
    %1075 = vmatpush.xpose.msra.mxu0 0.0
    %1076 = vmatpush.xpose.msra.mxu0 0.0
    %1077 = vmatpush.xpose.msra.mxu0 0.0
    %1078 = vmatpush.xpose.msra.mxu0 0.0
    %1079 = vmatpush.xpose.msra.mxu0 0.0
    %1080 = vmatpush.xpose.msra.mxu0 0.0
    %1081 = vmatpush.xpose.msra.mxu0 0.0
    %1082 = vmatpush.xpose.msra.mxu0 0.0
    %1083 = vmatpush.xpose.msra.mxu0 0.0
    %1084 = vmatpush.xpose.msra.mxu0 0.0
    %1085 = vmatpush.xpose.msra.mxu0 0.0
    %1086 = vmatpush.xpose.msra.mxu0 %v270
    %1087 = vmatpush.xpose.msra.mxu0 %v210
    %1088 = vmatpush.xpose.msra.mxu0 %v150
    %1089 = vmatpush.xpose.msra.mxu0 %v90
    %1090 = vmatmul.f32.gmra.mxu0 %v358
    %v1091 = vpop.f32.mrf.mxu0
    %v1092 = vadd.f32 %v1072, %v1091
    %1093 = vdwg.mxu0
    %1094 = vmatpush.xpose.msra.mxu0 0.0
    %1095 = vmatpush.xpose.msra.mxu0 0.0
    %1096 = vmatpush.xpose.msra.mxu0 0.0
    %1097 = vmatpush.xpose.msra.mxu0 0.0
    %1098 = vmatpush.xpose.msra.mxu0 0.0
    %1099 = vmatpush.xpose.msra.mxu0 0.0
    %1100 = vmatpush.xpose.msra.mxu0 0.0
    %1101 = vmatpush.xpose.msra.mxu0 0.0
    %1102 = vmatpush.xpose.msra.mxu0 0.0
    %1103 = vmatpush.xpose.msra.mxu0 0.0
    %1104 = vmatpush.xpose.msra.mxu0 0.0
    %1105 = vmatpush.xpose.msra.mxu0 0.0
    %1106 = vmatpush.xpose.msra.mxu0 %v271
    %1107 = vmatpush.xpose.msra.mxu0 %v211
    %1108 = vmatpush.xpose.msra.mxu0 %v151
    %1109 = vmatpush.xpose.msra.mxu0 %v91
    %1110 = vmatmul.f32.gmra.mxu0 %v361
    %v1111 = vpop.f32.mrf.mxu0
    %v1112 = vadd.f32 %v1092, %v1111
    %1113 = vdwg.mxu0
    %1114 = vmatpush.xpose.msra.mxu0 0.0
    %1115 = vmatpush.xpose.msra.mxu0 0.0
    %1116 = vmatpush.xpose.msra.mxu0 0.0
    %1117 = vmatpush.xpose.msra.mxu0 0.0
    %1118 = vmatpush.xpose.msra.mxu0 0.0
    %1119 = vmatpush.xpose.msra.mxu0 0.0
    %1120 = vmatpush.xpose.msra.mxu0 0.0
    %1121 = vmatpush.xpose.msra.mxu0 0.0
    %1122 = vmatpush.xpose.msra.mxu0 0.0
    %1123 = vmatpush.xpose.msra.mxu0 0.0
    %1124 = vmatpush.xpose.msra.mxu0 0.0
    %1125 = vmatpush.xpose.msra.mxu0 0.0
    %1126 = vmatpush.xpose.msra.mxu0 %v272
    %1127 = vmatpush.xpose.msra.mxu0 %v212
    %1128 = vmatpush.xpose.msra.mxu0 %v152
    %1129 = vmatpush.xpose.msra.mxu0 %v92
    %1130 = vmatmul.f32.gmra.mxu0 %v362
    %v1131 = vpop.f32.mrf.mxu0
    %v1132 = vadd.f32 %v1112, %v1131
    %1133 = vdwg.mxu0
    %1134 = vmatpush.xpose.msra.mxu0 0.0
    %1135 = vmatpush.xpose.msra.mxu0 0.0
    %1136 = vmatpush.xpose.msra.mxu0 0.0
    %1137 = vmatpush.xpose.msra.mxu0 0.0
    %1138 = vmatpush.xpose.msra.mxu0 0.0
    %1139 = vmatpush.xpose.msra.mxu0 0.0
    %1140 = vmatpush.xpose.msra.mxu0 0.0
    %1141 = vmatpush.xpose.msra.mxu0 0.0
    %1142 = vmatpush.xpose.msra.mxu0 0.0
    %1143 = vmatpush.xpose.msra.mxu0 0.0
    %1144 = vmatpush.xpose.msra.mxu0 0.0
    %1145 = vmatpush.xpose.msra.mxu0 0.0
    %1146 = vmatpush.xpose.msra.mxu0 %v273
    %1147 = vmatpush.xpose.msra.mxu0 %v213
    %1148 = vmatpush.xpose.msra.mxu0 %v153
    %1149 = vmatpush.xpose.msra.mxu0 %v93
    %1150 = vmatmul.f32.gmra.mxu0 %v363
    %v1151 = vpop.f32.mrf.mxu0
    %v1152 = vadd.f32 %v1132, %v1151
    %1153 = vdwg.mxu0
    %1154 = vmatpush.xpose.msra.mxu0 0.0
    %1155 = vmatpush.xpose.msra.mxu0 0.0
    %1156 = vmatpush.xpose.msra.mxu0 0.0
    %1157 = vmatpush.xpose.msra.mxu0 0.0
    %1158 = vmatpush.xpose.msra.mxu0 0.0
    %1159 = vmatpush.xpose.msra.mxu0 0.0
    %1160 = vmatpush.xpose.msra.mxu0 0.0
    %1161 = vmatpush.xpose.msra.mxu0 0.0
    %1162 = vmatpush.xpose.msra.mxu0 0.0
    %1163 = vmatpush.xpose.msra.mxu0 0.0
    %1164 = vmatpush.xpose.msra.mxu0 0.0
    %1165 = vmatpush.xpose.msra.mxu0 0.0
    %1166 = vmatpush.xpose.msra.mxu0 %v274
    %1167 = vmatpush.xpose.msra.mxu0 %v214
    %1168 = vmatpush.xpose.msra.mxu0 %v154
    %1169 = vmatpush.xpose.msra.mxu0 %v94
    %1170 = vmatmul.f32.gmra.mxu0 %v364
    %v1171 = vpop.f32.mrf.mxu0
    %v1172 = vadd.f32 %v1152, %v1171
    %1173 = vdwg.mxu0
    %1174 = vmatpush.xpose.msra.mxu0 0.0
    %1175 = vmatpush.xpose.msra.mxu0 0.0
    %1176 = vmatpush.xpose.msra.mxu0 0.0
    %1177 = vmatpush.xpose.msra.mxu0 0.0
    %1178 = vmatpush.xpose.msra.mxu0 0.0
    %1179 = vmatpush.xpose.msra.mxu0 0.0
    %1180 = vmatpush.xpose.msra.mxu0 0.0
    %1181 = vmatpush.xpose.msra.mxu0 0.0
    %1182 = vmatpush.xpose.msra.mxu0 0.0
    %1183 = vmatpush.xpose.msra.mxu0 0.0
    %1184 = vmatpush.xpose.msra.mxu0 0.0
    %1185 = vmatpush.xpose.msra.mxu0 0.0
    %1186 = vmatpush.xpose.msra.mxu0 %v275
    %1187 = vmatpush.xpose.msra.mxu0 %v215
    %1188 = vmatpush.xpose.msra.mxu0 %v155
    %1189 = vmatpush.xpose.msra.mxu0 %v95
    %1190 = vmatmul.f32.gmra.mxu0 %v365
    %v1191 = vpop.f32.mrf.mxu0
    %v1192 = vadd.f32 %v1172, %v1191
    %1193 = vdwg.mxu0
    %1194 = vmatpush.xpose.msra.mxu0 0.0
    %1195 = vmatpush.xpose.msra.mxu0 0.0
    %1196 = vmatpush.xpose.msra.mxu0 0.0
    %1197 = vmatpush.xpose.msra.mxu0 0.0
    %1198 = vmatpush.xpose.msra.mxu0 0.0
    %1199 = vmatpush.xpose.msra.mxu0 0.0
    %1200 = vmatpush.xpose.msra.mxu0 0.0
    %1201 = vmatpush.xpose.msra.mxu0 0.0
    %1202 = vmatpush.xpose.msra.mxu0 0.0
    %1203 = vmatpush.xpose.msra.mxu0 0.0
    %1204 = vmatpush.xpose.msra.mxu0 0.0
    %1205 = vmatpush.xpose.msra.mxu0 0.0
    %1206 = vmatpush.xpose.msra.mxu0 %v276
    %1207 = vmatpush.xpose.msra.mxu0 %v216
    %1208 = vmatpush.xpose.msra.mxu0 %v156
    %1209 = vmatpush.xpose.msra.mxu0 %v96
    %1210 = vmatmul.f32.gmra.mxu0 %v366
    %v1211 = vpop.f32.mrf.mxu0
    %v1212 = vadd.f32 %v1192, %v1211
    %1213 = vdwg.mxu0
    %1214 = vmatpush.xpose.msra.mxu0 0.0
    %1215 = vmatpush.xpose.msra.mxu0 0.0
    %1216 = vmatpush.xpose.msra.mxu0 0.0
    %1217 = vmatpush.xpose.msra.mxu0 0.0
    %1218 = vmatpush.xpose.msra.mxu0 0.0
    %1219 = vmatpush.xpose.msra.mxu0 0.0
    %1220 = vmatpush.xpose.msra.mxu0 0.0
    %1221 = vmatpush.xpose.msra.mxu0 0.0
    %1222 = vmatpush.xpose.msra.mxu0 0.0
    %1223 = vmatpush.xpose.msra.mxu0 0.0
    %1224 = vmatpush.xpose.msra.mxu0 0.0
    %1225 = vmatpush.xpose.msra.mxu0 0.0
    %1226 = vmatpush.xpose.msra.mxu0 %v277
    %1227 = vmatpush.xpose.msra.mxu0 %v217
    %1228 = vmatpush.xpose.msra.mxu0 %v157
    %1229 = vmatpush.xpose.msra.mxu0 %v97
    %1230 = vmatmul.f32.gmra.mxu0 %v367
    %v1231 = vpop.f32.mrf.mxu0
    %v1232 = vadd.f32 %v1212, %v1231
    %1233 = vdwg.mxu0
    %1234 = vmatpush.xpose.msra.mxu0 0.0
    %1235 = vmatpush.xpose.msra.mxu0 0.0
    %1236 = vmatpush.xpose.msra.mxu0 0.0
    %1237 = vmatpush.xpose.msra.mxu0 0.0
    %1238 = vmatpush.xpose.msra.mxu0 0.0
    %1239 = vmatpush.xpose.msra.mxu0 0.0
    %1240 = vmatpush.xpose.msra.mxu0 0.0
    %1241 = vmatpush.xpose.msra.mxu0 0.0
    %1242 = vmatpush.xpose.msra.mxu0 0.0
    %1243 = vmatpush.xpose.msra.mxu0 0.0
    %1244 = vmatpush.xpose.msra.mxu0 0.0
    %1245 = vmatpush.xpose.msra.mxu0 0.0
    %1246 = vmatpush.xpose.msra.mxu0 %v278
    %1247 = vmatpush.xpose.msra.mxu0 %v218
    %1248 = vmatpush.xpose.msra.mxu0 %v158
    %1249 = vmatpush.xpose.msra.mxu0 %v98
    %1250 = vmatmul.f32.gmra.mxu0 %v368
    %v1251 = vpop.f32.mrf.mxu0
    %v1252 = vadd.f32 %v1232, %v1251
    %1253 = vdwg.mxu0
    %1254 = vmatpush.xpose.msra.mxu0 0.0
    %1255 = vmatpush.xpose.msra.mxu0 0.0
    %1256 = vmatpush.xpose.msra.mxu0 0.0
    %1257 = vmatpush.xpose.msra.mxu0 0.0
    %1258 = vmatpush.xpose.msra.mxu0 0.0
    %1259 = vmatpush.xpose.msra.mxu0 0.0
    %1260 = vmatpush.xpose.msra.mxu0 0.0
    %1261 = vmatpush.xpose.msra.mxu0 0.0
    %1262 = vmatpush.xpose.msra.mxu0 0.0
    %1263 = vmatpush.xpose.msra.mxu0 0.0
    %1264 = vmatpush.xpose.msra.mxu0 0.0
    %1265 = vmatpush.xpose.msra.mxu0 0.0
    %1266 = vmatpush.xpose.msra.mxu0 %v279
    %1267 = vmatpush.xpose.msra.mxu0 %v219
    %1268 = vmatpush.xpose.msra.mxu0 %v159
    %1269 = vmatpush.xpose.msra.mxu0 %v99
    %1270 = vmatmul.f32.gmra.mxu0 %v371
    %v1271 = vpop.f32.mrf.mxu0
    %v1272 = vadd.f32 %v1252, %v1271
    %1273 = vdwg.mxu0
    %1274 = vmatpush.xpose.msra.mxu0 0.0
    %1275 = vmatpush.xpose.msra.mxu0 0.0
    %1276 = vmatpush.xpose.msra.mxu0 0.0
    %1277 = vmatpush.xpose.msra.mxu0 0.0
    %1278 = vmatpush.xpose.msra.mxu0 0.0
    %1279 = vmatpush.xpose.msra.mxu0 0.0
    %1280 = vmatpush.xpose.msra.mxu0 0.0
    %1281 = vmatpush.xpose.msra.mxu0 0.0
    %1282 = vmatpush.xpose.msra.mxu0 0.0
    %1283 = vmatpush.xpose.msra.mxu0 0.0
    %1284 = vmatpush.xpose.msra.mxu0 0.0
    %1285 = vmatpush.xpose.msra.mxu0 0.0
    %1286 = vmatpush.xpose.msra.mxu0 %v280
    %1287 = vmatpush.xpose.msra.mxu0 %v220
    %1288 = vmatpush.xpose.msra.mxu0 %v160
    %1289 = vmatpush.xpose.msra.mxu0 %v100
    %1290 = vmatmul.f32.gmra.mxu0 %v372
    %v1291 = vpop.f32.mrf.mxu0
    %v1292 = vadd.f32 %v1272, %v1291
    %1293 = vdwg.mxu0
    %1294 = vmatpush.xpose.msra.mxu0 0.0
    %1295 = vmatpush.xpose.msra.mxu0 0.0
    %1296 = vmatpush.xpose.msra.mxu0 0.0
    %1297 = vmatpush.xpose.msra.mxu0 0.0
    %1298 = vmatpush.xpose.msra.mxu0 0.0
    %1299 = vmatpush.xpose.msra.mxu0 0.0
    %1300 = vmatpush.xpose.msra.mxu0 0.0
    %1301 = vmatpush.xpose.msra.mxu0 0.0
    %1302 = vmatpush.xpose.msra.mxu0 0.0
    %1303 = vmatpush.xpose.msra.mxu0 0.0
    %1304 = vmatpush.xpose.msra.mxu0 0.0
    %1305 = vmatpush.xpose.msra.mxu0 0.0
    %1306 = vmatpush.xpose.msra.mxu0 %v281
    %1307 = vmatpush.xpose.msra.mxu0 %v221
    %1308 = vmatpush.xpose.msra.mxu0 %v161
    %1309 = vmatpush.xpose.msra.mxu0 %v101
    %1310 = vmatmul.f32.gmra.mxu0 %v373
    %v1311 = vpop.f32.mrf.mxu0
    %v1312 = vadd.f32 %v1292, %v1311
    %1313 = vdwg.mxu0
    %1314 = vmatpush.xpose.msra.mxu0 0.0
    %1315 = vmatpush.xpose.msra.mxu0 0.0
    %1316 = vmatpush.xpose.msra.mxu0 0.0
    %1317 = vmatpush.xpose.msra.mxu0 0.0
    %1318 = vmatpush.xpose.msra.mxu0 0.0
    %1319 = vmatpush.xpose.msra.mxu0 0.0
    %1320 = vmatpush.xpose.msra.mxu0 0.0
    %1321 = vmatpush.xpose.msra.mxu0 0.0
    %1322 = vmatpush.xpose.msra.mxu0 0.0
    %1323 = vmatpush.xpose.msra.mxu0 0.0
    %1324 = vmatpush.xpose.msra.mxu0 0.0
    %1325 = vmatpush.xpose.msra.mxu0 0.0
    %1326 = vmatpush.xpose.msra.mxu0 %v282
    %1327 = vmatpush.xpose.msra.mxu0 %v222
    %1328 = vmatpush.xpose.msra.mxu0 %v162
    %1329 = vmatpush.xpose.msra.mxu0 %v102
    %1330 = vmatmul.f32.gmra.mxu0 %v374
    %v1331 = vpop.f32.mrf.mxu0
    %v1332 = vadd.f32 %v1312, %v1331
    %1333 = vdwg.mxu0
    %1334 = vmatpush.xpose.msra.mxu0 0.0
    %1335 = vmatpush.xpose.msra.mxu0 0.0
    %1336 = vmatpush.xpose.msra.mxu0 0.0
    %1337 = vmatpush.xpose.msra.mxu0 0.0
    %1338 = vmatpush.xpose.msra.mxu0 0.0
    %1339 = vmatpush.xpose.msra.mxu0 0.0
    %1340 = vmatpush.xpose.msra.mxu0 0.0
    %1341 = vmatpush.xpose.msra.mxu0 0.0
    %1342 = vmatpush.xpose.msra.mxu0 0.0
    %1343 = vmatpush.xpose.msra.mxu0 0.0
    %1344 = vmatpush.xpose.msra.mxu0 0.0
    %1345 = vmatpush.xpose.msra.mxu0 0.0
    %1346 = vmatpush.xpose.msra.mxu0 %v283
    %1347 = vmatpush.xpose.msra.mxu0 %v223
    %1348 = vmatpush.xpose.msra.mxu0 %v163
    %1349 = vmatpush.xpose.msra.mxu0 %v103
    %1350 = vmatmul.f32.gmra.mxu0 %v375
    %v1351 = vpop.f32.mrf.mxu0
    %v1352 = vadd.f32 %v1332, %v1351
    %1353 = vdwg.mxu0
    %1354 = vmatpush.xpose.msra.mxu0 0.0
    %1355 = vmatpush.xpose.msra.mxu0 0.0
    %1356 = vmatpush.xpose.msra.mxu0 0.0
    %1357 = vmatpush.xpose.msra.mxu0 0.0
    %1358 = vmatpush.xpose.msra.mxu0 0.0
    %1359 = vmatpush.xpose.msra.mxu0 0.0
    %1360 = vmatpush.xpose.msra.mxu0 0.0
    %1361 = vmatpush.xpose.msra.mxu0 0.0
    %1362 = vmatpush.xpose.msra.mxu0 0.0
    %1363 = vmatpush.xpose.msra.mxu0 0.0
    %1364 = vmatpush.xpose.msra.mxu0 0.0
    %1365 = vmatpush.xpose.msra.mxu0 0.0
    %1366 = vmatpush.xpose.msra.mxu0 %v284
    %1367 = vmatpush.xpose.msra.mxu0 %v224
    %1368 = vmatpush.xpose.msra.mxu0 %v164
    %1369 = vmatpush.xpose.msra.mxu0 %v104
    %1370 = vmatmul.f32.gmra.mxu0 %v376
    %v1371 = vpop.f32.mrf.mxu0
    %v1372 = vadd.f32 %v1352, %v1371
    %1373 = vdwg.mxu0
    %1374 = vmatpush.xpose.msra.mxu0 0.0
    %1375 = vmatpush.xpose.msra.mxu0 0.0
    %1376 = vmatpush.xpose.msra.mxu0 0.0
    %1377 = vmatpush.xpose.msra.mxu0 0.0
    %1378 = vmatpush.xpose.msra.mxu0 0.0
    %1379 = vmatpush.xpose.msra.mxu0 0.0
    %1380 = vmatpush.xpose.msra.mxu0 0.0
    %1381 = vmatpush.xpose.msra.mxu0 0.0
    %1382 = vmatpush.xpose.msra.mxu0 0.0
    %1383 = vmatpush.xpose.msra.mxu0 0.0
    %1384 = vmatpush.xpose.msra.mxu0 0.0
    %1385 = vmatpush.xpose.msra.mxu0 0.0
    %1386 = vmatpush.xpose.msra.mxu0 %v285
    %1387 = vmatpush.xpose.msra.mxu0 %v225
    %1388 = vmatpush.xpose.msra.mxu0 %v165
    %1389 = vmatpush.xpose.msra.mxu0 %v105
    %1390 = vmatmul.f32.gmra.mxu0 %v377
    %v1391 = vpop.f32.mrf.mxu0
    %v1392 = vadd.f32 %v1372, %v1391
    %1393 = vdwg.mxu0
    %1394 = vmatpush.xpose.msra.mxu0 0.0
    %1395 = vmatpush.xpose.msra.mxu0 0.0
    %1396 = vmatpush.xpose.msra.mxu0 0.0
    %1397 = vmatpush.xpose.msra.mxu0 0.0
    %1398 = vmatpush.xpose.msra.mxu0 0.0
    %1399 = vmatpush.xpose.msra.mxu0 0.0
    %1400 = vmatpush.xpose.msra.mxu0 0.0
    %1401 = vmatpush.xpose.msra.mxu0 0.0
    %1402 = vmatpush.xpose.msra.mxu0 0.0
    %1403 = vmatpush.xpose.msra.mxu0 0.0
    %1404 = vmatpush.xpose.msra.mxu0 0.0
    %1405 = vmatpush.xpose.msra.mxu0 0.0
    %1406 = vmatpush.xpose.msra.mxu0 %v286
    %1407 = vmatpush.xpose.msra.mxu0 %v226
    %1408 = vmatpush.xpose.msra.mxu0 %v166
    %1409 = vmatpush.xpose.msra.mxu0 %v106
    %1410 = vmatmul.f32.gmra.mxu0 %v378
    %v1411 = vpop.f32.mrf.mxu0
    %v1412 = vadd.f32 %v1392, %v1411
    %1413 = vdwg.mxu0
    %1414 = vmatpush.xpose.msra.mxu0 0.0
    %1415 = vmatpush.xpose.msra.mxu0 0.0
    %1416 = vmatpush.xpose.msra.mxu0 0.0
    %1417 = vmatpush.xpose.msra.mxu0 0.0
    %1418 = vmatpush.xpose.msra.mxu0 0.0
    %1419 = vmatpush.xpose.msra.mxu0 0.0
    %1420 = vmatpush.xpose.msra.mxu0 0.0
    %1421 = vmatpush.xpose.msra.mxu0 0.0
    %1422 = vmatpush.xpose.msra.mxu0 0.0
    %1423 = vmatpush.xpose.msra.mxu0 0.0
    %1424 = vmatpush.xpose.msra.mxu0 0.0
    %1425 = vmatpush.xpose.msra.mxu0 0.0
    %1426 = vmatpush.xpose.msra.mxu0 %v287
    %1427 = vmatpush.xpose.msra.mxu0 %v227
    %1428 = vmatpush.xpose.msra.mxu0 %v167
    %1429 = vmatpush.xpose.msra.mxu0 %v107
    %1430 = vmatmul.f32.gmra.mxu0 %v381
    %v1431 = vpop.f32.mrf.mxu0
    %v1432 = vadd.f32 %v1412, %v1431
    %1433 = vdwg.mxu0
    %1434 = vmatpush.xpose.msra.mxu0 0.0
    %1435 = vmatpush.xpose.msra.mxu0 0.0
    %1436 = vmatpush.xpose.msra.mxu0 0.0
    %1437 = vmatpush.xpose.msra.mxu0 0.0
    %1438 = vmatpush.xpose.msra.mxu0 0.0
    %1439 = vmatpush.xpose.msra.mxu0 0.0
    %1440 = vmatpush.xpose.msra.mxu0 0.0
    %1441 = vmatpush.xpose.msra.mxu0 0.0
    %1442 = vmatpush.xpose.msra.mxu0 0.0
    %1443 = vmatpush.xpose.msra.mxu0 0.0
    %1444 = vmatpush.xpose.msra.mxu0 0.0
    %1445 = vmatpush.xpose.msra.mxu0 0.0
    %1446 = vmatpush.xpose.msra.mxu0 %v288
    %1447 = vmatpush.xpose.msra.mxu0 %v228
    %1448 = vmatpush.xpose.msra.mxu0 %v168
    %1449 = vmatpush.xpose.msra.mxu0 %v108
    %1450 = vmatmul.f32.gmra.mxu0 %v382
    %v1451 = vpop.f32.mrf.mxu0
    %v1452 = vadd.f32 %v1432, %v1451
    %1453 = vdwg.mxu0
    %1454 = vmatpush.xpose.msra.mxu0 0.0
    %1455 = vmatpush.xpose.msra.mxu0 0.0
    %1456 = vmatpush.xpose.msra.mxu0 0.0
    %1457 = vmatpush.xpose.msra.mxu0 0.0
    %1458 = vmatpush.xpose.msra.mxu0 0.0
    %1459 = vmatpush.xpose.msra.mxu0 0.0
    %1460 = vmatpush.xpose.msra.mxu0 0.0
    %1461 = vmatpush.xpose.msra.mxu0 0.0
    %1462 = vmatpush.xpose.msra.mxu0 0.0
    %1463 = vmatpush.xpose.msra.mxu0 0.0
    %1464 = vmatpush.xpose.msra.mxu0 0.0
    %1465 = vmatpush.xpose.msra.mxu0 0.0
    %1466 = vmatpush.xpose.msra.mxu0 %v289
    %1467 = vmatpush.xpose.msra.mxu0 %v229
    %1468 = vmatpush.xpose.msra.mxu0 %v169
    %1469 = vmatpush.xpose.msra.mxu0 %v109
    %1470 = vmatmul.f32.gmra.mxu0 %v383
    %v1471 = vpop.f32.mrf.mxu0
    %v1472 = vadd.f32 %v1452, %v1471
    %1473 = vdwg.mxu0
    %1474 = vmatpush.xpose.msra.mxu0 0.0
    %1475 = vmatpush.xpose.msra.mxu0 0.0
    %1476 = vmatpush.xpose.msra.mxu0 0.0
    %1477 = vmatpush.xpose.msra.mxu0 0.0
    %1478 = vmatpush.xpose.msra.mxu0 0.0
    %1479 = vmatpush.xpose.msra.mxu0 0.0
    %1480 = vmatpush.xpose.msra.mxu0 0.0
    %1481 = vmatpush.xpose.msra.mxu0 0.0
    %1482 = vmatpush.xpose.msra.mxu0 0.0
    %1483 = vmatpush.xpose.msra.mxu0 0.0
    %1484 = vmatpush.xpose.msra.mxu0 0.0
    %1485 = vmatpush.xpose.msra.mxu0 0.0
    %1486 = vmatpush.xpose.msra.mxu0 %v290
    %1487 = vmatpush.xpose.msra.mxu0 %v230
    %1488 = vmatpush.xpose.msra.mxu0 %v170
    %1489 = vmatpush.xpose.msra.mxu0 %v110
    %1490 = vmatmul.f32.gmra.mxu0 %v384
    %v1491 = vpop.f32.mrf.mxu0
    %v1492 = vadd.f32 %v1472, %v1491
    %1493 = vdwg.mxu0
    %1494 = vmatpush.xpose.msra.mxu0 0.0
    %1495 = vmatpush.xpose.msra.mxu0 0.0
    %1496 = vmatpush.xpose.msra.mxu0 0.0
    %1497 = vmatpush.xpose.msra.mxu0 0.0
    %1498 = vmatpush.xpose.msra.mxu0 0.0
    %1499 = vmatpush.xpose.msra.mxu0 0.0
    %1500 = vmatpush.xpose.msra.mxu0 0.0
    %1501 = vmatpush.xpose.msra.mxu0 0.0
    %1502 = vmatpush.xpose.msra.mxu0 0.0
    %1503 = vmatpush.xpose.msra.mxu0 0.0
    %1504 = vmatpush.xpose.msra.mxu0 0.0
    %1505 = vmatpush.xpose.msra.mxu0 0.0
    %1506 = vmatpush.xpose.msra.mxu0 %v291
    %1507 = vmatpush.xpose.msra.mxu0 %v231
    %1508 = vmatpush.xpose.msra.mxu0 %v171
    %1509 = vmatpush.xpose.msra.mxu0 %v111
    %1510 = vmatmul.f32.gmra.mxu0 %v385
    %v1511 = vpop.f32.mrf.mxu0
    %v1512 = vadd.f32 %v1492, %v1511
    %1513 = vdwg.mxu0
    %1514 = vmatpush.xpose.msra.mxu0 0.0
    %1515 = vmatpush.xpose.msra.mxu0 0.0
    %1516 = vmatpush.xpose.msra.mxu0 0.0
    %1517 = vmatpush.xpose.msra.mxu0 0.0
    %1518 = vmatpush.xpose.msra.mxu0 0.0
    %1519 = vmatpush.xpose.msra.mxu0 0.0
    %1520 = vmatpush.xpose.msra.mxu0 0.0
    %1521 = vmatpush.xpose.msra.mxu0 0.0
    %1522 = vmatpush.xpose.msra.mxu0 0.0
    %1523 = vmatpush.xpose.msra.mxu0 0.0
    %1524 = vmatpush.xpose.msra.mxu0 0.0
    %1525 = vmatpush.xpose.msra.mxu0 0.0
    %1526 = vmatpush.xpose.msra.mxu0 %v292
    %1527 = vmatpush.xpose.msra.mxu0 %v232
    %1528 = vmatpush.xpose.msra.mxu0 %v172
    %1529 = vmatpush.xpose.msra.mxu0 %v112
    %1530 = vmatmul.f32.gmra.mxu0 %v386
    %v1531 = vpop.f32.mrf.mxu0
    %v1532 = vadd.f32 %v1512, %v1531
    %1533 = vdwg.mxu0
    %1534 = vmatpush.xpose.msra.mxu0 0.0
    %1535 = vmatpush.xpose.msra.mxu0 0.0
    %1536 = vmatpush.xpose.msra.mxu0 0.0
    %1537 = vmatpush.xpose.msra.mxu0 0.0
    %1538 = vmatpush.xpose.msra.mxu0 0.0
    %1539 = vmatpush.xpose.msra.mxu0 0.0
    %1540 = vmatpush.xpose.msra.mxu0 0.0
    %1541 = vmatpush.xpose.msra.mxu0 0.0
    %1542 = vmatpush.xpose.msra.mxu0 0.0
    %1543 = vmatpush.xpose.msra.mxu0 0.0
    %1544 = vmatpush.xpose.msra.mxu0 0.0
    %1545 = vmatpush.xpose.msra.mxu0 0.0
    %1546 = vmatpush.xpose.msra.mxu0 %v293
    %1547 = vmatpush.xpose.msra.mxu0 %v233
    %1548 = vmatpush.xpose.msra.mxu0 %v173
    %1549 = vmatpush.xpose.msra.mxu0 %v113
    %1550 = vmatmul.f32.gmra.mxu0 %v387
    %v1551 = vpop.f32.mrf.mxu0
    %v1552 = vadd.f32 %v1532, %v1551
    %1553 = vdwg.mxu0
    %1554 = vmatpush.xpose.msra.mxu0 0.0
    %1555 = vmatpush.xpose.msra.mxu0 0.0
    %1556 = vmatpush.xpose.msra.mxu0 0.0
    %1557 = vmatpush.xpose.msra.mxu0 0.0
    %1558 = vmatpush.xpose.msra.mxu0 0.0
    %1559 = vmatpush.xpose.msra.mxu0 0.0
    %1560 = vmatpush.xpose.msra.mxu0 0.0
    %1561 = vmatpush.xpose.msra.mxu0 0.0
    %1562 = vmatpush.xpose.msra.mxu0 0.0
    %1563 = vmatpush.xpose.msra.mxu0 0.0
    %1564 = vmatpush.xpose.msra.mxu0 0.0
    %1565 = vmatpush.xpose.msra.mxu0 0.0
    %1566 = vmatpush.xpose.msra.mxu0 %v294
    %1567 = vmatpush.xpose.msra.mxu0 %v234
    %1568 = vmatpush.xpose.msra.mxu0 %v174
    %1569 = vmatpush.xpose.msra.mxu0 %v114
    %1570 = vmatmul.f32.gmra.mxu0 %v388
    %v1571 = vpop.f32.mrf.mxu0
    %v1572 = vadd.f32 %v1552, %v1571
    %1573 = vdwg.mxu0
    %1574 = vmatpush.xpose.msra.mxu0 0.0
    %1575 = vmatpush.xpose.msra.mxu0 0.0
    %1576 = vmatpush.xpose.msra.mxu0 0.0
    %1577 = vmatpush.xpose.msra.mxu0 0.0
    %1578 = vmatpush.xpose.msra.mxu0 0.0
    %1579 = vmatpush.xpose.msra.mxu0 0.0
    %1580 = vmatpush.xpose.msra.mxu0 0.0
    %1581 = vmatpush.xpose.msra.mxu0 0.0
    %1582 = vmatpush.xpose.msra.mxu0 0.0
    %1583 = vmatpush.xpose.msra.mxu0 0.0
    %1584 = vmatpush.xpose.msra.mxu0 0.0
    %1585 = vmatpush.xpose.msra.mxu0 0.0
    %1586 = vmatpush.xpose.msra.mxu0 %v295
    %1587 = vmatpush.xpose.msra.mxu0 %v235
    %1588 = vmatpush.xpose.msra.mxu0 %v175
    %1589 = vmatpush.xpose.msra.mxu0 %v115
    %1590 = vmatmul.f32.gmra.mxu0 %v390
    %v1591 = vpop.f32.mrf.mxu0
    %v1592 = vadd.f32 %v1572, %v1591
    %1593 = vdwg.mxu0
    %1594 = vmatpush.xpose.msra.mxu0 0.0
    %1595 = vmatpush.xpose.msra.mxu0 0.0
    %1596 = vmatpush.xpose.msra.mxu0 0.0
    %1597 = vmatpush.xpose.msra.mxu0 0.0
    %1598 = vmatpush.xpose.msra.mxu0 0.0
    %1599 = vmatpush.xpose.msra.mxu0 0.0
    %1600 = vmatpush.xpose.msra.mxu0 0.0
    %1601 = vmatpush.xpose.msra.mxu0 0.0
    %1602 = vmatpush.xpose.msra.mxu0 0.0
    %1603 = vmatpush.xpose.msra.mxu0 0.0
    %1604 = vmatpush.xpose.msra.mxu0 0.0
    %1605 = vmatpush.xpose.msra.mxu0 0.0
    %1606 = vmatpush.xpose.msra.mxu0 %v296
    %1607 = vmatpush.xpose.msra.mxu0 %v236
    %1608 = vmatpush.xpose.msra.mxu0 %v176
    %1609 = vmatpush.xpose.msra.mxu0 %v116
    %1610 = vmatmul.f32.gmra.mxu0 %v391
    %v1611 = vpop.f32.mrf.mxu0
    %v1612 = vadd.f32 %v1592, %v1611
    %1613 = vdwg.mxu0
    %1614 = vmatpush.xpose.msra.mxu0 0.0
    %1615 = vmatpush.xpose.msra.mxu0 0.0
    %1616 = vmatpush.xpose.msra.mxu0 0.0
    %1617 = vmatpush.xpose.msra.mxu0 0.0
    %1618 = vmatpush.xpose.msra.mxu0 0.0
    %1619 = vmatpush.xpose.msra.mxu0 0.0
    %1620 = vmatpush.xpose.msra.mxu0 0.0
    %1621 = vmatpush.xpose.msra.mxu0 0.0
    %1622 = vmatpush.xpose.msra.mxu0 0.0
    %1623 = vmatpush.xpose.msra.mxu0 0.0
    %1624 = vmatpush.xpose.msra.mxu0 0.0
    %1625 = vmatpush.xpose.msra.mxu0 0.0
    %1626 = vmatpush.xpose.msra.mxu0 %v297
    %1627 = vmatpush.xpose.msra.mxu0 %v237
    %1628 = vmatpush.xpose.msra.mxu0 %v177
    %1629 = vmatpush.xpose.msra.mxu0 %v117
    %1630 = vmatmul.f32.gmra.mxu0 %v392
    %v1631 = vpop.f32.mrf.mxu0
    %v1632 = vadd.f32 %v1612, %v1631
    %1633 = vdwg.mxu0
    %1634 = vmatpush.xpose.msra.mxu0 0.0
    %1635 = vmatpush.xpose.msra.mxu0 0.0
    %1636 = vmatpush.xpose.msra.mxu0 0.0
    %1637 = vmatpush.xpose.msra.mxu0 0.0
    %1638 = vmatpush.xpose.msra.mxu0 0.0
    %1639 = vmatpush.xpose.msra.mxu0 0.0
    %1640 = vmatpush.xpose.msra.mxu0 0.0
    %1641 = vmatpush.xpose.msra.mxu0 0.0
    %1642 = vmatpush.xpose.msra.mxu0 0.0
    %1643 = vmatpush.xpose.msra.mxu0 0.0
    %1644 = vmatpush.xpose.msra.mxu0 0.0
    %1645 = vmatpush.xpose.msra.mxu0 0.0
    %1646 = vmatpush.xpose.msra.mxu0 %v298
    %1647 = vmatpush.xpose.msra.mxu0 %v238
    %1648 = vmatpush.xpose.msra.mxu0 %v178
    %1649 = vmatpush.xpose.msra.mxu0 %v118
    %1650 = vmatmul.f32.gmra.mxu0 %v393
    %v1651 = vpop.f32.mrf.mxu0
    %v1652 = vadd.f32 %v1632, %v1651
    %1653 = vdwg.mxu0
    %v1654 = vmax.f32 %v1652, 0.0
    %v1655 = vld [vmem:[%s3] sm:$0xff]
    %v1656 = vld [vmem:[%s3 + $0x8] sm:$0xff]
    %v1657 = vld [vmem:[%s3 + $0x10] sm:$0xff]
    %v1658 = vld [vmem:[%s3 + $0x18] sm:$0xff]
    %v1659 = vld [vmem:[%s4] sm:$0x1]
    %v1661 = vperm.slane %v1659, 0
    %vm1663 = vcmask 261120
    %v1665 = vsel %vm1663, %v1654, 0
    %1667 = vmatpush.msra.mxu0 0.0
    %1668 = vmatpush.msra.mxu0 0.0
    %1669 = vmatpush.msra.mxu0 0.0
    %1670 = vmatpush.msra.mxu0 0.0
    %1671 = vmatpush.msra.mxu0 0.0
    %1672 = vmatpush.msra.mxu0 0.0
    %1673 = vmatpush.msra.mxu0 0.0
    %1674 = vmatpush.msra.mxu0 0.0
    %1675 = vmatpush.msra.mxu0 0.0
    %1676 = vmatpush.msra.mxu0 0.0
    %1677 = vmatpush.msra.mxu0 0.0
    %1678 = vmatpush.msra.mxu0 0.0
    %1679 = vmatpush.msra.mxu0 %v1658
    %1680 = vmatpush.msra.mxu0 %v1657
    %1681 = vmatpush.msra.mxu0 %v1656
    %1682 = vmatpush.msra.mxu0 %v1655
    %1683 = vmatmul.f32.gmra.mxu0 %v1665
    %v1684 = vpop.f32.mrf.mxu0
    %v1685 = vadd.f32 %v1661, %v1684
    %1686 = vdwg.mxu0
    %v1687 = vtanh.pop %v1685
    %v1688 = vld [vmem:[%s5] sm:$0x1]
    %v1690 = vperm.slane %v1688, 0
    %v1692 = vmul.f32 %v1687, %v1690
    %vm1693 = vcmask 254976
    %v1694 = vsel %vm1693, %v1692, 0.0
    %1695 = vadd.xlane.f32.xlu0 %v1694
    %v1696 = vpop.xlane.xlu0 %1695
    %v1697 = vld [vmem:[#allocation2] sm:$0x1]
    %v1699 = vperm.slane %v1697, 0
    %v1701 = vadd.f32 %v1696, %v1699
    %vm1702 = vcmask 1024
    %1703 = vst.msk [vmem:[%s7] sm:$0x3] %vm1702, %v1701
    // Predicated region
    $region34: #{cnn_forward.3} parent=1 // pred_check
      _
    $region35: #{cnn_forward.3} parent=1 // pred_check_branch
      %1705 = sbr.rel (0) target = $region37
    $region36: #{cnn_forward.3} parent=1 // pred_region
      _
    $region37: #{cnn_forward.3} parent=1 // pred_fallthru
      _
    // Predicated region
    $region38: #{cnn_forward.3} parent=1 // pred_check
      _
    $region39: #{cnn_forward.3} parent=1 // pred_check_branch
      %1707 = sbr.rel (0) target = $region41
    $region40: #{cnn_forward.3} parent=1 // pred_region
      _
    $region41: #{cnn_forward.3} parent=1 // pred_fallthru
      _
    %1708 = vsyncpa [#allocation4], 1

// kernel: cnn_forward.2
$region0: #{cnn_forward.2}
  #allocation0 [shape = 'u32[]', space=smem, size = 0x4, offset = 0x4, fixed_abs, tag = 'smem constant byte address 0x4 - core index']
  #allocation1 [shape = 'u32[72,128]{1,0:T(1,128)}', space=vmem, size = 0x9000, scoped, tag = 'internal scratch']
  #allocation2 [shape = 'f32[576,128]{1,0:T(8,128)}', space=vmem, size = 0x48000, scoped, tag = 'scratch operand']
  #allocation3 [shape = 'f32[64,128]{1,0:T(8,128)}', space=vmem, size = 0x8000, scoped, tag = 'scratch operand']
  %s0 = inlined_call_operand.vmem [shape: f32[2,32,128], index: 0, kind: input, shape index: {}]
  %s1 = inlined_call_operand.vmem [shape: f32[64,288], index: 1, kind: input, shape index: {}]
  %s2 = inlined_call_operand.vmem [shape: f32[64,1], index: 2, kind: input, shape index: {}]
  %s3 = inlined_call_operand.hbm [shape: f32[64,576], index: 3, kind: input, shape index: {}]
  %s4 = inlined_call_operand.vmem [shape: f32[64,1], index: 4, kind: input, shape index: {}]
  %s5 = inlined_call_operand.vmem [shape: f32[2,64,120], index: 5, kind: output, shape index: {}]
  %s6 = sld [smem:[#allocation0]]
  $region34: #{cnn_forward.2} parent=0
    _
  %s8 = ssub.s32 1, %s6
  %s9 = scalar_select 0, %s8, %s6
  $region1: #{cnn_forward.2} parent=0
    #allocation4 [shape = 'u8[163840]{0}', space=vmem, size = 0x28000, scoped, tag = 'input window, operand 3, single buffered']
    #allocation5 [shape = 's32[1]{0}', space=sflag, size = 0x4, scoped, tag = 'scoped memory for cnn_forward.2']
    %10 = vsyncpa [#allocation5], 0
    // Predicated region
    $region2: #{cnn_forward.2} parent=1 // pred_check
      _
    $region3: #{cnn_forward.2} parent=1 // pred_check_branch
      %12 = sbr.rel (0) target = $region5
    $region4: #{cnn_forward.2} parent=1 // pred_region
      _
    $region5: #{cnn_forward.2} parent=1 // pred_fallthru
      _
    // Predicated region
    $region6: #{cnn_forward.2} parent=1 // pred_check
      _
    $region7: #{cnn_forward.2} parent=1 // pred_check_branch
      %14 = sbr.rel (0) target = $region9
    $region8: #{cnn_forward.2} parent=1 // pred_region
      _
    $region9: #{cnn_forward.2} parent=1 // pred_fallthru
      _
    // Predicated region
    $region10: #{cnn_forward.2} parent=1 // pred_check
      _
    $region11: #{cnn_forward.2} parent=1 // pred_check_branch
      %16 = sbr.rel (0) target = $region13
    $region12: #{cnn_forward.2} parent=1 // pred_region
      _
    $region13: #{cnn_forward.2} parent=1 // pred_fallthru
      _
    // Predicated region
    $region14: #{cnn_forward.2} parent=1 // pred_check
      _
    $region15: #{cnn_forward.2} parent=1 // pred_check_branch
      %18 = sbr.rel (0) target = $region17
    $region16: #{cnn_forward.2} parent=1 // pred_region
      %20 = vsyncadd [#allocation5], 0
      %s21 = sshll.u32 %s3, 4
      %s22 = int_to_ptr.hbm [resolvable:$true] %s21
      %s23 = sshll.u32 [#allocation4], 4
      %s24 = int_to_ptr.vmem [resolvable:$true] %s23
      %29 = dma.hbm_to_vmem [thread:$0]  %s22, 5120, %s24, [#allocation5], 640, 640, 40
    $region17: #{cnn_forward.2} parent=1 // pred_fallthru
      _
    // Predicated region
    $region18: #{cnn_forward.2} parent=1 // pred_check
      _
    $region19: #{cnn_forward.2} parent=1 // pred_check_branch
      %31 = sbr.rel (0) target = $region21
    $region20: #{cnn_forward.2} parent=1 // pred_region
      _
    $region21: #{cnn_forward.2} parent=1 // pred_fallthru
      _
    // Predicated region
    $region22: #{cnn_forward.2} parent=1 // pred_check
      _
    $region23: #{cnn_forward.2} parent=1 // pred_check_branch
      %33 = sbr.rel (0) target = $region25
    $region24: #{cnn_forward.2} parent=1 // pred_region
      %35 = dma.done [#allocation5], 5120
    $region25: #{cnn_forward.2} parent=1 // pred_fallthru
      _
    %36 = vst [vmem:[#allocation3] sm:$0xff] 0.0
    %37 = vst [vmem:[#allocation3 + $0x8] sm:$0xff] 0.0
    %38 = vst [vmem:[#allocation3 + $0x10] sm:$0xff] 0.0
    %39 = vst [vmem:[#allocation3 + $0x18] sm:$0xff] 0.0
    %40 = vst [vmem:[#allocation3 + $0x20] sm:$0xff] 0.0
    %41 = vst [vmem:[#allocation3 + $0x28] sm:$0xff] 0.0
    %42 = vst [vmem:[#allocation3 + $0x30] sm:$0xff] 0.0
    %43 = vst [vmem:[#allocation3 + $0x38] sm:$0xff] 0.0
    %v44 = vld [vmem:[%s0] sm:$0xff]
    %v45 = vld [vmem:[%s0 + $0x8] sm:$0xff]
    %v46 = vld [vmem:[%s0 + $0x10] sm:$0xff]
    %v47 = vld [vmem:[%s0 + $0x18] sm:$0xff]
    %vm48 = vcmask 982016
    %49 = vst.msk [vmem:[#allocation2] sm:$0xff] %vm48, %v44
    %50 = vst.msk [vmem:[#allocation2 + $0x8] sm:$0xff] %vm48, %v45
    %51 = vst.msk [vmem:[#allocation2 + $0x10] sm:$0xff] %vm48, %v46
    %52 = vst.msk [vmem:[#allocation2 + $0x18] sm:$0xff] %vm48, %v47
    %57 = vrot.lane.b32.xlu0 %v44, 127
    %v58 = vpop.permute.xlu0 %57
    %59 = vrot.lane.b32.xlu0 %v45, 127
    %v60 = vpop.permute.xlu0 %59
    %61 = vrot.lane.b32.xlu0 %v46, 127
    %v62 = vpop.permute.xlu0 %61
    %63 = vrot.lane.b32.xlu0 %v47, 127
    %v64 = vpop.permute.xlu0 %63
    %69 = vst.msk [vmem:[#allocation2 + $0x20] sm:$0xff] %vm48, %v58
    %70 = vst.msk [vmem:[#allocation2 + $0x28] sm:$0xff] %vm48, %v60
    %71 = vst.msk [vmem:[#allocation2 + $0x30] sm:$0xff] %vm48, %v62
    %72 = vst.msk [vmem:[#allocation2 + $0x38] sm:$0xff] %vm48, %v64
    %73 = vrot.lane.b32.xlu0 %v44, 126
    %v74 = vpop.permute.xlu0 %73
    %75 = vrot.lane.b32.xlu0 %v45, 126
    %v76 = vpop.permute.xlu0 %75
    %77 = vrot.lane.b32.xlu0 %v46, 126
    %v78 = vpop.permute.xlu0 %77
    %79 = vrot.lane.b32.xlu0 %v47, 126
    %v80 = vpop.permute.xlu0 %79
    %85 = vst.msk [vmem:[#allocation2 + $0x40] sm:$0xff] %vm48, %v74
    %86 = vst.msk [vmem:[#allocation2 + $0x48] sm:$0xff] %vm48, %v76
    %87 = vst.msk [vmem:[#allocation2 + $0x50] sm:$0xff] %vm48, %v78
    %88 = vst.msk [vmem:[#allocation2 + $0x58] sm:$0xff] %vm48, %v80
    %89 = vrot.lane.b32.xlu0 %v44, 125
    %v90 = vpop.permute.xlu0 %89
    %91 = vrot.lane.b32.xlu0 %v45, 125
    %v92 = vpop.permute.xlu0 %91
    %93 = vrot.lane.b32.xlu0 %v46, 125
    %v94 = vpop.permute.xlu0 %93
    %95 = vrot.lane.b32.xlu0 %v47, 125
    %v96 = vpop.permute.xlu0 %95
    %101 = vst.msk [vmem:[#allocation2 + $0x60] sm:$0xff] %vm48, %v90
    %102 = vst.msk [vmem:[#allocation2 + $0x68] sm:$0xff] %vm48, %v92
    %103 = vst.msk [vmem:[#allocation2 + $0x70] sm:$0xff] %vm48, %v94
    %104 = vst.msk [vmem:[#allocation2 + $0x78] sm:$0xff] %vm48, %v96
    %105 = vrot.lane.b32.xlu0 %v44, 124
    %v106 = vpop.permute.xlu0 %105
    %107 = vrot.lane.b32.xlu0 %v45, 124
    %v108 = vpop.permute.xlu0 %107
    %109 = vrot.lane.b32.xlu0 %v46, 124
    %v110 = vpop.permute.xlu0 %109
    %111 = vrot.lane.b32.xlu0 %v47, 124
    %v112 = vpop.permute.xlu0 %111
    %117 = vst.msk [vmem:[#allocation2 + $0x80] sm:$0xff] %vm48, %v106
    %118 = vst.msk [vmem:[#allocation2 + $0x88] sm:$0xff] %vm48, %v108
    %119 = vst.msk [vmem:[#allocation2 + $0x90] sm:$0xff] %vm48, %v110
    %120 = vst.msk [vmem:[#allocation2 + $0x98] sm:$0xff] %vm48, %v112
    %121 = vrot.lane.b32.xlu0 %v44, 123
    %v122 = vpop.permute.xlu0 %121
    %123 = vrot.lane.b32.xlu0 %v45, 123
    %v124 = vpop.permute.xlu0 %123
    %125 = vrot.lane.b32.xlu0 %v46, 123
    %v126 = vpop.permute.xlu0 %125
    %127 = vrot.lane.b32.xlu0 %v47, 123
    %v128 = vpop.permute.xlu0 %127
    %133 = vst.msk [vmem:[#allocation2 + $0xa0] sm:$0xff] %vm48, %v122
    %134 = vst.msk [vmem:[#allocation2 + $0xa8] sm:$0xff] %vm48, %v124
    %135 = vst.msk [vmem:[#allocation2 + $0xb0] sm:$0xff] %vm48, %v126
    %136 = vst.msk [vmem:[#allocation2 + $0xb8] sm:$0xff] %vm48, %v128
    %137 = vrot.lane.b32.xlu0 %v44, 122
    %v138 = vpop.permute.xlu0 %137
    %139 = vrot.lane.b32.xlu0 %v45, 122
    %v140 = vpop.permute.xlu0 %139
    %141 = vrot.lane.b32.xlu0 %v46, 122
    %v142 = vpop.permute.xlu0 %141
    %143 = vrot.lane.b32.xlu0 %v47, 122
    %v144 = vpop.permute.xlu0 %143
    %149 = vst.msk [vmem:[#allocation2 + $0xc0] sm:$0xff] %vm48, %v138
    %150 = vst.msk [vmem:[#allocation2 + $0xc8] sm:$0xff] %vm48, %v140
    %151 = vst.msk [vmem:[#allocation2 + $0xd0] sm:$0xff] %vm48, %v142
    %152 = vst.msk [vmem:[#allocation2 + $0xd8] sm:$0xff] %vm48, %v144
    %153 = vrot.lane.b32.xlu0 %v44, 121
    %v154 = vpop.permute.xlu0 %153
    %155 = vrot.lane.b32.xlu0 %v45, 121
    %v156 = vpop.permute.xlu0 %155
    %157 = vrot.lane.b32.xlu0 %v46, 121
    %v158 = vpop.permute.xlu0 %157
    %159 = vrot.lane.b32.xlu0 %v47, 121
    %v160 = vpop.permute.xlu0 %159
    %165 = vst.msk [vmem:[#allocation2 + $0xe0] sm:$0xff] %vm48, %v154
    %166 = vst.msk [vmem:[#allocation2 + $0xe8] sm:$0xff] %vm48, %v156
    %167 = vst.msk [vmem:[#allocation2 + $0xf0] sm:$0xff] %vm48, %v158
    %168 = vst.msk [vmem:[#allocation2 + $0xf8] sm:$0xff] %vm48, %v160
    %169 = vrot.lane.b32.xlu0 %v44, 120
    %v170 = vpop.permute.xlu0 %169
    %171 = vrot.lane.b32.xlu0 %v45, 120
    %v172 = vpop.permute.xlu0 %171
    %173 = vrot.lane.b32.xlu0 %v46, 120
    %v174 = vpop.permute.xlu0 %173
    %175 = vrot.lane.b32.xlu0 %v47, 120
    %v176 = vpop.permute.xlu0 %175
    %181 = vst.msk [vmem:[#allocation2 + $0x100] sm:$0xff] %vm48, %v170
    %182 = vst.msk [vmem:[#allocation2 + $0x108] sm:$0xff] %vm48, %v172
    %183 = vst.msk [vmem:[#allocation2 + $0x110] sm:$0xff] %vm48, %v174
    %184 = vst.msk [vmem:[#allocation2 + $0x118] sm:$0xff] %vm48, %v176
    %v185 = vld [vmem:[%s1] sm:$0xff]
    %v186 = vld [vmem:[%s1 + $0x8] sm:$0xff]
    %v187 = vld [vmem:[%s1 + $0x10] sm:$0xff]
    %v188 = vld [vmem:[%s1 + $0x18] sm:$0xff]
    %v189 = vld [vmem:[%s1 + $0x20] sm:$0xff]
    %v190 = vld [vmem:[%s1 + $0x28] sm:$0xff]
    %v191 = vld [vmem:[%s1 + $0x30] sm:$0xff]
    %v192 = vld [vmem:[%s1 + $0x38] sm:$0xff]
    %v193 = vld [vmem:[%s1 + $0x40] sm:$0xff]
    %v194 = vld [vmem:[%s1 + $0x48] sm:$0xff]
    %v195 = vld [vmem:[%s1 + $0x50] sm:$0xff]
    %v196 = vld [vmem:[%s1 + $0x58] sm:$0xff]
    %v197 = vld [vmem:[%s1 + $0x60] sm:$0xff]
    %v198 = vld [vmem:[%s1 + $0x68] sm:$0xff]
    %v199 = vld [vmem:[%s1 + $0x70] sm:$0xff]
    %v200 = vld [vmem:[%s1 + $0x78] sm:$0xff]
    %v201 = vld [vmem:[%s1 + $0x80] sm:$0xff]
    %v202 = vld [vmem:[%s1 + $0x88] sm:$0xff]
    %v203 = vld [vmem:[%s1 + $0x90] sm:$0xff]
    %v204 = vld [vmem:[%s1 + $0x98] sm:$0xff]
    %v205 = vld [vmem:[%s1 + $0xa0] sm:$0xff]
    %v206 = vld [vmem:[%s1 + $0xa8] sm:$0xff]
    %v207 = vld [vmem:[%s1 + $0xb0] sm:$0xff]
    %v208 = vld [vmem:[%s1 + $0xb8] sm:$0xff]
    %v209 = vld [vmem:[#allocation2] sm:$0xff]
    %v210 = vld [vmem:[#allocation2 + $0x8] sm:$0xff]
    %v211 = vld [vmem:[#allocation2 + $0x10] sm:$0xff]
    %v212 = vld [vmem:[#allocation2 + $0x18] sm:$0xff]
    %v213 = vld [vmem:[#allocation2 + $0x20] sm:$0xff]
    %v214 = vld [vmem:[#allocation2 + $0x28] sm:$0xff]
    %v215 = vld [vmem:[#allocation2 + $0x30] sm:$0xff]
    %v216 = vld [vmem:[#allocation2 + $0x38] sm:$0xff]
    %v217 = vld [vmem:[#allocation2 + $0x40] sm:$0xff]
    %v218 = vld [vmem:[#allocation2 + $0x48] sm:$0xff]
    %v219 = vld [vmem:[#allocation2 + $0x50] sm:$0xff]
    %v220 = vld [vmem:[#allocation2 + $0x58] sm:$0xff]
    %v221 = vld [vmem:[#allocation2 + $0x60] sm:$0xff]
    %v222 = vld [vmem:[#allocation2 + $0x68] sm:$0xff]
    %v223 = vld [vmem:[#allocation2 + $0x70] sm:$0xff]
    %v224 = vld [vmem:[#allocation2 + $0x78] sm:$0xff]
    %v225 = vld [vmem:[#allocation2 + $0x80] sm:$0xff]
    %v226 = vld [vmem:[#allocation2 + $0x88] sm:$0xff]
    %v227 = vld [vmem:[#allocation2 + $0x90] sm:$0xff]
    %v228 = vld [vmem:[#allocation2 + $0x98] sm:$0xff]
    %v229 = vld [vmem:[#allocation2 + $0xa0] sm:$0xff]
    %v230 = vld [vmem:[#allocation2 + $0xa8] sm:$0xff]
    %v231 = vld [vmem:[#allocation2 + $0xb0] sm:$0xff]
    %v232 = vld [vmem:[#allocation2 + $0xb8] sm:$0xff]
    %v233 = vld [vmem:[#allocation2 + $0xc0] sm:$0xff]
    %v234 = vld [vmem:[#allocation2 + $0xc8] sm:$0xff]
    %v235 = vld [vmem:[#allocation2 + $0xd0] sm:$0xff]
    %v236 = vld [vmem:[#allocation2 + $0xd8] sm:$0xff]
    %v237 = vld [vmem:[#allocation2 + $0xe0] sm:$0xff]
    %v238 = vld [vmem:[#allocation2 + $0xe8] sm:$0xff]
    %v239 = vld [vmem:[#allocation2 + $0xf0] sm:$0xff]
    %v240 = vld [vmem:[#allocation2 + $0xf8] sm:$0xff]
    %v241 = vld [vmem:[#allocation2 + $0x100] sm:$0xff]
    %v242 = vld [vmem:[#allocation2 + $0x108] sm:$0xff]
    %v243 = vld [vmem:[#allocation2 + $0x110] sm:$0xff]
    %v244 = vld [vmem:[#allocation2 + $0x118] sm:$0xff]
    %v245 = vld [vmem:[%s2] sm:$0xff]
    %v246 = vld [vmem:[%s2 + $0x8] sm:$0xff]
    %v247 = vld [vmem:[%s2 + $0x10] sm:$0xff]
    %v248 = vld [vmem:[%s2 + $0x18] sm:$0xff]
    %v249 = vld [vmem:[%s2 + $0x20] sm:$0xff]
    %v250 = vld [vmem:[%s2 + $0x28] sm:$0xff]
    %v251 = vld [vmem:[%s2 + $0x30] sm:$0xff]
    %v252 = vld [vmem:[%s2 + $0x38] sm:$0xff]
    %254 = vset.pattern.permute.xlu0 0
    %255 = vperm.xlu0 %254, %v245
    %v256 = vpop.permute.xlu0 %255
    %259 = vset.pattern.permute.xlu0 0
    %260 = vperm.xlu0 %259, %v246
    %v261 = vpop.permute.xlu0 %260
    %264 = vset.pattern.permute.xlu0 0
    %265 = vperm.xlu0 %264, %v247
    %v266 = vpop.permute.xlu0 %265
    %269 = vset.pattern.permute.xlu0 0
    %270 = vperm.xlu0 %269, %v248
    %v271 = vpop.permute.xlu0 %270
    %274 = vset.pattern.permute.xlu0 0
    %275 = vperm.xlu0 %274, %v249
    %v276 = vpop.permute.xlu0 %275
    %279 = vset.pattern.permute.xlu0 0
    %280 = vperm.xlu0 %279, %v250
    %v281 = vpop.permute.xlu0 %280
    %284 = vset.pattern.permute.xlu0 0
    %285 = vperm.xlu0 %284, %v251
    %v286 = vpop.permute.xlu0 %285
    %289 = vset.pattern.permute.xlu0 0
    %290 = vperm.xlu0 %289, %v252
    %v291 = vpop.permute.xlu0 %290
    %vm293 = vcmask 261120
    %v295 = vsel %vm293, %v187, 0
    %v298 = vsel %vm293, %v190, 0
    %v301 = vsel %vm293, %v193, 0
    %v304 = vsel %vm293, %v196, 0
    %v307 = vsel %vm293, %v199, 0
    %v310 = vsel %vm293, %v202, 0
    %v313 = vsel %vm293, %v205, 0
    %v316 = vsel %vm293, %v208, 0
    %318 = vmatpush.msra.mxu0 %v224
    %319 = vmatpush.msra.mxu0 %v223
    %320 = vmatpush.msra.mxu0 %v222
    %321 = vmatpush.msra.mxu0 %v221
    %322 = vmatpush.msra.mxu0 %v220
    %323 = vmatpush.msra.mxu0 %v219
    %324 = vmatpush.msra.mxu0 %v218
    %325 = vmatpush.msra.mxu0 %v217
    %326 = vmatpush.msra.mxu0 %v216
    %327 = vmatpush.msra.mxu0 %v215
    %328 = vmatpush.msra.mxu0 %v214
    %329 = vmatpush.msra.mxu0 %v213
    %330 = vmatpush.msra.mxu0 %v212
    %331 = vmatpush.msra.mxu0 %v211
    %332 = vmatpush.msra.mxu0 %v210
    %333 = vmatpush.msra.mxu0 %v209
    %334 = vmatmul.f32.gmra.mxu0 %v185
    %v335 = vpop.f32.mrf.mxu0
    %v336 = vadd.f32 %v256, %v335
    %337 = vmatmul.f32.gmra.mxu0 %v188
    %v338 = vpop.f32.mrf.mxu0
    %v339 = vadd.f32 %v261, %v338
    %340 = vmatmul.f32.gmra.mxu0 %v191
    %v341 = vpop.f32.mrf.mxu0
    %v342 = vadd.f32 %v266, %v341
    %343 = vmatmul.f32.gmra.mxu0 %v194
    %v344 = vpop.f32.mrf.mxu0
    %v345 = vadd.f32 %v271, %v344
    %346 = vmatmul.f32.gmra.mxu0 %v197
    %v347 = vpop.f32.mrf.mxu0
    %v348 = vadd.f32 %v276, %v347
    %349 = vmatmul.f32.gmra.mxu0 %v200
    %v350 = vpop.f32.mrf.mxu0
    %v351 = vadd.f32 %v281, %v350
    %352 = vmatmul.f32.gmra.mxu0 %v203
    %v353 = vpop.f32.mrf.mxu0
    %v354 = vadd.f32 %v286, %v353
    %355 = vmatmul.f32.gmra.mxu0 %v206
    %v356 = vpop.f32.mrf.mxu0
    %v357 = vadd.f32 %v291, %v356
    %358 = vdwg.mxu0
    %359 = vmatpush.msra.mxu0 %v240
    %360 = vmatpush.msra.mxu0 %v239
    %361 = vmatpush.msra.mxu0 %v238
    %362 = vmatpush.msra.mxu0 %v237
    %363 = vmatpush.msra.mxu0 %v236
    %364 = vmatpush.msra.mxu0 %v235
    %365 = vmatpush.msra.mxu0 %v234
    %366 = vmatpush.msra.mxu0 %v233
    %367 = vmatpush.msra.mxu0 %v232
    %368 = vmatpush.msra.mxu0 %v231
    %369 = vmatpush.msra.mxu0 %v230
    %370 = vmatpush.msra.mxu0 %v229
    %371 = vmatpush.msra.mxu0 %v228
    %372 = vmatpush.msra.mxu0 %v227
    %373 = vmatpush.msra.mxu0 %v226
    %374 = vmatpush.msra.mxu0 %v225
    %375 = vmatmul.f32.gmra.mxu0 %v186
    %v376 = vpop.f32.mrf.mxu0
    %v377 = vadd.f32 %v336, %v376
    %378 = vmatmul.f32.gmra.mxu0 %v189
    %v379 = vpop.f32.mrf.mxu0
    %v380 = vadd.f32 %v339, %v379
    %381 = vmatmul.f32.gmra.mxu0 %v192
    %v382 = vpop.f32.mrf.mxu0
    %v383 = vadd.f32 %v342, %v382
    %384 = vmatmul.f32.gmra.mxu0 %v195
    %v385 = vpop.f32.mrf.mxu0
    %v386 = vadd.f32 %v345, %v385
    %387 = vmatmul.f32.gmra.mxu0 %v198
    %v388 = vpop.f32.mrf.mxu0
    %v389 = vadd.f32 %v348, %v388
    %390 = vmatmul.f32.gmra.mxu0 %v201
    %v391 = vpop.f32.mrf.mxu0
    %v392 = vadd.f32 %v351, %v391
    %393 = vmatmul.f32.gmra.mxu0 %v204
    %v394 = vpop.f32.mrf.mxu0
    %v395 = vadd.f32 %v354, %v394
    %396 = vmatmul.f32.gmra.mxu0 %v207
    %v397 = vpop.f32.mrf.mxu0
    %v398 = vadd.f32 %v357, %v397
    %399 = vdwg.mxu0
    %400 = vmatpush.msra.mxu0 0.0
    %401 = vmatpush.msra.mxu0 0.0
    %402 = vmatpush.msra.mxu0 0.0
    %403 = vmatpush.msra.mxu0 0.0
    %404 = vmatpush.msra.mxu0 0.0
    %405 = vmatpush.msra.mxu0 0.0
    %406 = vmatpush.msra.mxu0 0.0
    %407 = vmatpush.msra.mxu0 0.0
    %408 = vmatpush.msra.mxu0 0.0
    %409 = vmatpush.msra.mxu0 0.0
    %410 = vmatpush.msra.mxu0 0.0
    %411 = vmatpush.msra.mxu0 0.0
    %412 = vmatpush.msra.mxu0 %v244
    %413 = vmatpush.msra.mxu0 %v243
    %414 = vmatpush.msra.mxu0 %v242
    %415 = vmatpush.msra.mxu0 %v241
    %416 = vmatmul.f32.gmra.mxu0 %v295
    %v417 = vpop.f32.mrf.mxu0
    %v418 = vadd.f32 %v377, %v417
    %419 = vmatmul.f32.gmra.mxu0 %v298
    %v420 = vpop.f32.mrf.mxu0
    %v421 = vadd.f32 %v380, %v420
    %422 = vmatmul.f32.gmra.mxu0 %v301
    %v423 = vpop.f32.mrf.mxu0
    %v424 = vadd.f32 %v383, %v423
    %425 = vmatmul.f32.gmra.mxu0 %v304
    %v426 = vpop.f32.mrf.mxu0
    %v427 = vadd.f32 %v386, %v426
    %428 = vmatmul.f32.gmra.mxu0 %v307
    %v429 = vpop.f32.mrf.mxu0
    %v430 = vadd.f32 %v389, %v429
    %431 = vmatmul.f32.gmra.mxu0 %v310
    %v432 = vpop.f32.mrf.mxu0
    %v433 = vadd.f32 %v392, %v432
    %434 = vmatmul.f32.gmra.mxu0 %v313
    %v435 = vpop.f32.mrf.mxu0
    %v436 = vadd.f32 %v395, %v435
    %437 = vmatmul.f32.gmra.mxu0 %v316
    %v438 = vpop.f32.mrf.mxu0
    %v439 = vadd.f32 %v398, %v438
    %440 = vdwg.mxu0
    %v441 = vmax.f32 %v418, 0.0
    %v442 = vmax.f32 %v421, 0.0
    %v443 = vmax.f32 %v424, 0.0
    %v444 = vmax.f32 %v427, 0.0
    %v445 = vmax.f32 %v430, 0.0
    %v446 = vmax.f32 %v433, 0.0
    %v447 = vmax.f32 %v436, 0.0
    %v448 = vmax.f32 %v439, 0.0
    %457 = vrot.lane.b32.xlu0 %v441, 4
    %v458 = vpop.permute.xlu0 %457
    %459 = vrot.lane.b32.xlu0 %v442, 4
    %v460 = vpop.permute.xlu0 %459
    %461 = vrot.lane.b32.xlu0 %v443, 4
    %v462 = vpop.permute.xlu0 %461
    %463 = vrot.lane.b32.xlu0 %v444, 4
    %v464 = vpop.permute.xlu0 %463
    %465 = vrot.lane.b32.xlu0 %v445, 4
    %v466 = vpop.permute.xlu0 %465
    %467 = vrot.lane.b32.xlu0 %v446, 4
    %v468 = vpop.permute.xlu0 %467
    %469 = vrot.lane.b32.xlu0 %v447, 4
    %v470 = vpop.permute.xlu0 %469
    %471 = vrot.lane.b32.xlu0 %v448, 4
    %v472 = vpop.permute.xlu0 %471
    %vm481 = vcmask 1014816
    %482 = vst.msk [vmem:[#allocation3] sm:$0xff] %vm481, %v458
    %483 = vst.msk [vmem:[#allocation3 + $0x8] sm:$0xff] %vm481, %v460
    %484 = vst.msk [vmem:[#allocation3 + $0x10] sm:$0xff] %vm481, %v462
    %485 = vst.msk [vmem:[#allocation3 + $0x18] sm:$0xff] %vm481, %v464
    %486 = vst.msk [vmem:[#allocation3 + $0x20] sm:$0xff] %vm481, %v466
    %487 = vst.msk [vmem:[#allocation3 + $0x28] sm:$0xff] %vm481, %v468
    %488 = vst.msk [vmem:[#allocation3 + $0x30] sm:$0xff] %vm481, %v470
    %489 = vst.msk [vmem:[#allocation3 + $0x38] sm:$0xff] %vm481, %v472
    %v490 = vld [vmem:[#allocation3] sm:$0xff]
    %v491 = vld [vmem:[#allocation3 + $0x8] sm:$0xff]
    %v492 = vld [vmem:[#allocation3 + $0x10] sm:$0xff]
    %v493 = vld [vmem:[#allocation3 + $0x18] sm:$0xff]
    %v494 = vld [vmem:[#allocation3 + $0x20] sm:$0xff]
    %v495 = vld [vmem:[#allocation3 + $0x28] sm:$0xff]
    %v496 = vld [vmem:[#allocation3 + $0x30] sm:$0xff]
    %v497 = vld [vmem:[#allocation3 + $0x38] sm:$0xff]
    %498 = vst.msk [vmem:[#allocation2] sm:$0xff] %vm48, %v490
    %499 = vst.msk [vmem:[#allocation2 + $0x8] sm:$0xff] %vm48, %v491
    %500 = vst.msk [vmem:[#allocation2 + $0x10] sm:$0xff] %vm48, %v492
    %501 = vst.msk [vmem:[#allocation2 + $0x18] sm:$0xff] %vm48, %v493
    %502 = vst.msk [vmem:[#allocation2 + $0x20] sm:$0xff] %vm48, %v494
    %503 = vst.msk [vmem:[#allocation2 + $0x28] sm:$0xff] %vm48, %v495
    %504 = vst.msk [vmem:[#allocation2 + $0x30] sm:$0xff] %vm48, %v496
    %505 = vst.msk [vmem:[#allocation2 + $0x38] sm:$0xff] %vm48, %v497
    %514 = vrot.lane.b32.xlu0 %v490, 127
    %v515 = vpop.permute.xlu0 %514
    %516 = vrot.lane.b32.xlu0 %v491, 127
    %v517 = vpop.permute.xlu0 %516
    %518 = vrot.lane.b32.xlu0 %v492, 127
    %v519 = vpop.permute.xlu0 %518
    %520 = vrot.lane.b32.xlu0 %v493, 127
    %v521 = vpop.permute.xlu0 %520
    %522 = vrot.lane.b32.xlu0 %v494, 127
    %v523 = vpop.permute.xlu0 %522
    %524 = vrot.lane.b32.xlu0 %v495, 127
    %v525 = vpop.permute.xlu0 %524
    %526 = vrot.lane.b32.xlu0 %v496, 127
    %v527 = vpop.permute.xlu0 %526
    %528 = vrot.lane.b32.xlu0 %v497, 127
    %v529 = vpop.permute.xlu0 %528
    %538 = vst.msk [vmem:[#allocation2 + $0x40] sm:$0xff] %vm48, %v515
    %539 = vst.msk [vmem:[#allocation2 + $0x48] sm:$0xff] %vm48, %v517
    %540 = vst.msk [vmem:[#allocation2 + $0x50] sm:$0xff] %vm48, %v519
    %541 = vst.msk [vmem:[#allocation2 + $0x58] sm:$0xff] %vm48, %v521
    %542 = vst.msk [vmem:[#allocation2 + $0x60] sm:$0xff] %vm48, %v523
    %543 = vst.msk [vmem:[#allocation2 + $0x68] sm:$0xff] %vm48, %v525
    %544 = vst.msk [vmem:[#allocation2 + $0x70] sm:$0xff] %vm48, %v527
    %545 = vst.msk [vmem:[#allocation2 + $0x78] sm:$0xff] %vm48, %v529
    %546 = vrot.lane.b32.xlu0 %v490, 126
    %v547 = vpop.permute.xlu0 %546
    %548 = vrot.lane.b32.xlu0 %v491, 126
    %v549 = vpop.permute.xlu0 %548
    %550 = vrot.lane.b32.xlu0 %v492, 126
    %v551 = vpop.permute.xlu0 %550
    %552 = vrot.lane.b32.xlu0 %v493, 126
    %v553 = vpop.permute.xlu0 %552
    %554 = vrot.lane.b32.xlu0 %v494, 126
    %v555 = vpop.permute.xlu0 %554
    %556 = vrot.lane.b32.xlu0 %v495, 126
    %v557 = vpop.permute.xlu0 %556
    %558 = vrot.lane.b32.xlu0 %v496, 126
    %v559 = vpop.permute.xlu0 %558
    %560 = vrot.lane.b32.xlu0 %v497, 126
    %v561 = vpop.permute.xlu0 %560
    %570 = vst.msk [vmem:[#allocation2 + $0x80] sm:$0xff] %vm48, %v547
    %571 = vst.msk [vmem:[#allocation2 + $0x88] sm:$0xff] %vm48, %v549
    %572 = vst.msk [vmem:[#allocation2 + $0x90] sm:$0xff] %vm48, %v551
    %573 = vst.msk [vmem:[#allocation2 + $0x98] sm:$0xff] %vm48, %v553
    %574 = vst.msk [vmem:[#allocation2 + $0xa0] sm:$0xff] %vm48, %v555
    %575 = vst.msk [vmem:[#allocation2 + $0xa8] sm:$0xff] %vm48, %v557
    %576 = vst.msk [vmem:[#allocation2 + $0xb0] sm:$0xff] %vm48, %v559
    %577 = vst.msk [vmem:[#allocation2 + $0xb8] sm:$0xff] %vm48, %v561
    %578 = vrot.lane.b32.xlu0 %v490, 125
    %v579 = vpop.permute.xlu0 %578
    %580 = vrot.lane.b32.xlu0 %v491, 125
    %v581 = vpop.permute.xlu0 %580
    %582 = vrot.lane.b32.xlu0 %v492, 125
    %v583 = vpop.permute.xlu0 %582
    %584 = vrot.lane.b32.xlu0 %v493, 125
    %v585 = vpop.permute.xlu0 %584
    %586 = vrot.lane.b32.xlu0 %v494, 125
    %v587 = vpop.permute.xlu0 %586
    %588 = vrot.lane.b32.xlu0 %v495, 125
    %v589 = vpop.permute.xlu0 %588
    %590 = vrot.lane.b32.xlu0 %v496, 125
    %v591 = vpop.permute.xlu0 %590
    %592 = vrot.lane.b32.xlu0 %v497, 125
    %v593 = vpop.permute.xlu0 %592
    %602 = vst.msk [vmem:[#allocation2 + $0xc0] sm:$0xff] %vm48, %v579
    %603 = vst.msk [vmem:[#allocation2 + $0xc8] sm:$0xff] %vm48, %v581
    %604 = vst.msk [vmem:[#allocation2 + $0xd0] sm:$0xff] %vm48, %v583
    %605 = vst.msk [vmem:[#allocation2 + $0xd8] sm:$0xff] %vm48, %v585
    %606 = vst.msk [vmem:[#allocation2 + $0xe0] sm:$0xff] %vm48, %v587
    %607 = vst.msk [vmem:[#allocation2 + $0xe8] sm:$0xff] %vm48, %v589
    %608 = vst.msk [vmem:[#allocation2 + $0xf0] sm:$0xff] %vm48, %v591
    %609 = vst.msk [vmem:[#allocation2 + $0xf8] sm:$0xff] %vm48, %v593
    %610 = vrot.lane.b32.xlu0 %v490, 124
    %v611 = vpop.permute.xlu0 %610
    %612 = vrot.lane.b32.xlu0 %v491, 124
    %v613 = vpop.permute.xlu0 %612
    %614 = vrot.lane.b32.xlu0 %v492, 124
    %v615 = vpop.permute.xlu0 %614
    %616 = vrot.lane.b32.xlu0 %v493, 124
    %v617 = vpop.permute.xlu0 %616
    %618 = vrot.lane.b32.xlu0 %v494, 124
    %v619 = vpop.permute.xlu0 %618
    %620 = vrot.lane.b32.xlu0 %v495, 124
    %v621 = vpop.permute.xlu0 %620
    %622 = vrot.lane.b32.xlu0 %v496, 124
    %v623 = vpop.permute.xlu0 %622
    %624 = vrot.lane.b32.xlu0 %v497, 124
    %v625 = vpop.permute.xlu0 %624
    %634 = vst.msk [vmem:[#allocation2 + $0x100] sm:$0xff] %vm48, %v611
    %635 = vst.msk [vmem:[#allocation2 + $0x108] sm:$0xff] %vm48, %v613
    %636 = vst.msk [vmem:[#allocation2 + $0x110] sm:$0xff] %vm48, %v615
    %637 = vst.msk [vmem:[#allocation2 + $0x118] sm:$0xff] %vm48, %v617
    %638 = vst.msk [vmem:[#allocation2 + $0x120] sm:$0xff] %vm48, %v619
    %639 = vst.msk [vmem:[#allocation2 + $0x128] sm:$0xff] %vm48, %v621
    %640 = vst.msk [vmem:[#allocation2 + $0x130] sm:$0xff] %vm48, %v623
    %641 = vst.msk [vmem:[#allocation2 + $0x138] sm:$0xff] %vm48, %v625
    %642 = vrot.lane.b32.xlu0 %v490, 123
    %v643 = vpop.permute.xlu0 %642
    %644 = vrot.lane.b32.xlu0 %v491, 123
    %v645 = vpop.permute.xlu0 %644
    %646 = vrot.lane.b32.xlu0 %v492, 123
    %v647 = vpop.permute.xlu0 %646
    %648 = vrot.lane.b32.xlu0 %v493, 123
    %v649 = vpop.permute.xlu0 %648
    %650 = vrot.lane.b32.xlu0 %v494, 123
    %v651 = vpop.permute.xlu0 %650
    %652 = vrot.lane.b32.xlu0 %v495, 123
    %v653 = vpop.permute.xlu0 %652
    %654 = vrot.lane.b32.xlu0 %v496, 123
    %v655 = vpop.permute.xlu0 %654
    %656 = vrot.lane.b32.xlu0 %v497, 123
    %v657 = vpop.permute.xlu0 %656
    %666 = vst.msk [vmem:[#allocation2 + $0x140] sm:$0xff] %vm48, %v643
    %667 = vst.msk [vmem:[#allocation2 + $0x148] sm:$0xff] %vm48, %v645
    %668 = vst.msk [vmem:[#allocation2 + $0x150] sm:$0xff] %vm48, %v647
    %669 = vst.msk [vmem:[#allocation2 + $0x158] sm:$0xff] %vm48, %v649
    %670 = vst.msk [vmem:[#allocation2 + $0x160] sm:$0xff] %vm48, %v651
    %671 = vst.msk [vmem:[#allocation2 + $0x168] sm:$0xff] %vm48, %v653
    %672 = vst.msk [vmem:[#allocation2 + $0x170] sm:$0xff] %vm48, %v655
    %673 = vst.msk [vmem:[#allocation2 + $0x178] sm:$0xff] %vm48, %v657
    %674 = vrot.lane.b32.xlu0 %v490, 122
    %v675 = vpop.permute.xlu0 %674
    %676 = vrot.lane.b32.xlu0 %v491, 122
    %v677 = vpop.permute.xlu0 %676
    %678 = vrot.lane.b32.xlu0 %v492, 122
    %v679 = vpop.permute.xlu0 %678
    %680 = vrot.lane.b32.xlu0 %v493, 122
    %v681 = vpop.permute.xlu0 %680
    %682 = vrot.lane.b32.xlu0 %v494, 122
    %v683 = vpop.permute.xlu0 %682
    %684 = vrot.lane.b32.xlu0 %v495, 122
    %v685 = vpop.permute.xlu0 %684
    %686 = vrot.lane.b32.xlu0 %v496, 122
    %v687 = vpop.permute.xlu0 %686
    %688 = vrot.lane.b32.xlu0 %v497, 122
    %v689 = vpop.permute.xlu0 %688
    %698 = vst.msk [vmem:[#allocation2 + $0x180] sm:$0xff] %vm48, %v675
    %699 = vst.msk [vmem:[#allocation2 + $0x188] sm:$0xff] %vm48, %v677
    %700 = vst.msk [vmem:[#allocation2 + $0x190] sm:$0xff] %vm48, %v679
    %701 = vst.msk [vmem:[#allocation2 + $0x198] sm:$0xff] %vm48, %v681
    %702 = vst.msk [vmem:[#allocation2 + $0x1a0] sm:$0xff] %vm48, %v683
    %703 = vst.msk [vmem:[#allocation2 + $0x1a8] sm:$0xff] %vm48, %v685
    %704 = vst.msk [vmem:[#allocation2 + $0x1b0] sm:$0xff] %vm48, %v687
    %705 = vst.msk [vmem:[#allocation2 + $0x1b8] sm:$0xff] %vm48, %v689
    %706 = vrot.lane.b32.xlu0 %v490, 121
    %v707 = vpop.permute.xlu0 %706
    %708 = vrot.lane.b32.xlu0 %v491, 121
    %v709 = vpop.permute.xlu0 %708
    %710 = vrot.lane.b32.xlu0 %v492, 121
    %v711 = vpop.permute.xlu0 %710
    %712 = vrot.lane.b32.xlu0 %v493, 121
    %v713 = vpop.permute.xlu0 %712
    %714 = vrot.lane.b32.xlu0 %v494, 121
    %v715 = vpop.permute.xlu0 %714
    %716 = vrot.lane.b32.xlu0 %v495, 121
    %v717 = vpop.permute.xlu0 %716
    %718 = vrot.lane.b32.xlu0 %v496, 121
    %v719 = vpop.permute.xlu0 %718
    %720 = vrot.lane.b32.xlu0 %v497, 121
    %v721 = vpop.permute.xlu0 %720
    %730 = vst.msk [vmem:[#allocation2 + $0x1c0] sm:$0xff] %vm48, %v707
    %731 = vst.msk [vmem:[#allocation2 + $0x1c8] sm:$0xff] %vm48, %v709
    %732 = vst.msk [vmem:[#allocation2 + $0x1d0] sm:$0xff] %vm48, %v711
    %733 = vst.msk [vmem:[#allocation2 + $0x1d8] sm:$0xff] %vm48, %v713
    %734 = vst.msk [vmem:[#allocation2 + $0x1e0] sm:$0xff] %vm48, %v715
    %735 = vst.msk [vmem:[#allocation2 + $0x1e8] sm:$0xff] %vm48, %v717
    %736 = vst.msk [vmem:[#allocation2 + $0x1f0] sm:$0xff] %vm48, %v719
    %737 = vst.msk [vmem:[#allocation2 + $0x1f8] sm:$0xff] %vm48, %v721
    %738 = vrot.lane.b32.xlu0 %v490, 120
    %v739 = vpop.permute.xlu0 %738
    %740 = vrot.lane.b32.xlu0 %v491, 120
    %v741 = vpop.permute.xlu0 %740
    %742 = vrot.lane.b32.xlu0 %v492, 120
    %v743 = vpop.permute.xlu0 %742
    %744 = vrot.lane.b32.xlu0 %v493, 120
    %v745 = vpop.permute.xlu0 %744
    %746 = vrot.lane.b32.xlu0 %v494, 120
    %v747 = vpop.permute.xlu0 %746
    %748 = vrot.lane.b32.xlu0 %v495, 120
    %v749 = vpop.permute.xlu0 %748
    %750 = vrot.lane.b32.xlu0 %v496, 120
    %v751 = vpop.permute.xlu0 %750
    %752 = vrot.lane.b32.xlu0 %v497, 120
    %v753 = vpop.permute.xlu0 %752
    %762 = vst.msk [vmem:[#allocation2 + $0x200] sm:$0xff] %vm48, %v739
    %763 = vst.msk [vmem:[#allocation2 + $0x208] sm:$0xff] %vm48, %v741
    %764 = vst.msk [vmem:[#allocation2 + $0x210] sm:$0xff] %vm48, %v743
    %765 = vst.msk [vmem:[#allocation2 + $0x218] sm:$0xff] %vm48, %v745
    %766 = vst.msk [vmem:[#allocation2 + $0x220] sm:$0xff] %vm48, %v747
    %767 = vst.msk [vmem:[#allocation2 + $0x228] sm:$0xff] %vm48, %v749
    %768 = vst.msk [vmem:[#allocation2 + $0x230] sm:$0xff] %vm48, %v751
    %769 = vst.msk [vmem:[#allocation2 + $0x238] sm:$0xff] %vm48, %v753
    %v770 = vld [vmem:[#allocation4] sm:$0xff]
    %v771 = vld [vmem:[#allocation4 + $0x8] sm:$0xff]
    %v772 = vld [vmem:[#allocation4 + $0x10] sm:$0xff]
    %v773 = vld [vmem:[#allocation4 + $0x18] sm:$0xff]
    %v774 = vld [vmem:[#allocation4 + $0x20] sm:$0xff]
    %v775 = vld [vmem:[#allocation4 + $0x28] sm:$0xff]
    %v776 = vld [vmem:[#allocation4 + $0x30] sm:$0xff]
    %v777 = vld [vmem:[#allocation4 + $0x38] sm:$0xff]
    %v778 = vld [vmem:[#allocation4 + $0x40] sm:$0xff]
    %v779 = vld [vmem:[#allocation4 + $0x48] sm:$0xff]
    %v780 = vld [vmem:[#allocation4 + $0x50] sm:$0xff]
    %v781 = vld [vmem:[#allocation4 + $0x58] sm:$0xff]
    %v782 = vld [vmem:[#allocation4 + $0x60] sm:$0xff]
    %v783 = vld [vmem:[#allocation4 + $0x68] sm:$0xff]
    %v784 = vld [vmem:[#allocation4 + $0x70] sm:$0xff]
    %v785 = vld [vmem:[#allocation4 + $0x78] sm:$0xff]
    %v786 = vld [vmem:[#allocation4 + $0x80] sm:$0xff]
    %v787 = vld [vmem:[#allocation4 + $0x88] sm:$0xff]
    %v788 = vld [vmem:[#allocation4 + $0x90] sm:$0xff]
    %v789 = vld [vmem:[#allocation4 + $0x98] sm:$0xff]
    %v790 = vld [vmem:[#allocation4 + $0xa0] sm:$0xff]
    %v791 = vld [vmem:[#allocation4 + $0xa8] sm:$0xff]
    %v792 = vld [vmem:[#allocation4 + $0xb0] sm:$0xff]
    %v793 = vld [vmem:[#allocation4 + $0xb8] sm:$0xff]
    %v794 = vld [vmem:[#allocation4 + $0xc0] sm:$0xff]
    %v795 = vld [vmem:[#allocation4 + $0xc8] sm:$0xff]
    %v796 = vld [vmem:[#allocation4 + $0xd0] sm:$0xff]
    %v797 = vld [vmem:[#allocation4 + $0xd8] sm:$0xff]
    %v798 = vld [vmem:[#allocation4 + $0xe0] sm:$0xff]
    %v799 = vld [vmem:[#allocation4 + $0xe8] sm:$0xff]
    %v800 = vld [vmem:[#allocation4 + $0xf0] sm:$0xff]
    %v801 = vld [vmem:[#allocation4 + $0xf8] sm:$0xff]
    %v802 = vld [vmem:[#allocation4 + $0x100] sm:$0xff]
    %v803 = vld [vmem:[#allocation4 + $0x108] sm:$0xff]
    %v804 = vld [vmem:[#allocation4 + $0x110] sm:$0xff]
    %v805 = vld [vmem:[#allocation4 + $0x118] sm:$0xff]
    %v806 = vld [vmem:[#allocation4 + $0x120] sm:$0xff]
    %v807 = vld [vmem:[#allocation4 + $0x128] sm:$0xff]
    %v808 = vld [vmem:[#allocation4 + $0x130] sm:$0xff]
    %v809 = vld [vmem:[#allocation4 + $0x138] sm:$0xff]
    %v810 = vld [vmem:[#allocation2] sm:$0xff]
    %v811 = vld [vmem:[#allocation2 + $0x8] sm:$0xff]
    %v812 = vld [vmem:[#allocation2 + $0x10] sm:$0xff]
    %v813 = vld [vmem:[#allocation2 + $0x18] sm:$0xff]
    %v814 = vld [vmem:[#allocation2 + $0x20] sm:$0xff]
    %v815 = vld [vmem:[#allocation2 + $0x28] sm:$0xff]
    %v816 = vld [vmem:[#allocation2 + $0x30] sm:$0xff]
    %v817 = vld [vmem:[#allocation2 + $0x38] sm:$0xff]
    %v818 = vld [vmem:[#allocation2 + $0x40] sm:$0xff]
    %v819 = vld [vmem:[#allocation2 + $0x48] sm:$0xff]
    %v820 = vld [vmem:[#allocation2 + $0x50] sm:$0xff]
    %v821 = vld [vmem:[#allocation2 + $0x58] sm:$0xff]
    %v822 = vld [vmem:[#allocation2 + $0x60] sm:$0xff]
    %v823 = vld [vmem:[#allocation2 + $0x68] sm:$0xff]
    %v824 = vld [vmem:[#allocation2 + $0x70] sm:$0xff]
    %v825 = vld [vmem:[#allocation2 + $0x78] sm:$0xff]
    %v826 = vld [vmem:[#allocation2 + $0x80] sm:$0xff]
    %v827 = vld [vmem:[#allocation2 + $0x88] sm:$0xff]
    %v828 = vld [vmem:[#allocation2 + $0x90] sm:$0xff]
    %v829 = vld [vmem:[#allocation2 + $0x98] sm:$0xff]
    %v830 = vld [vmem:[#allocation2 + $0xa0] sm:$0xff]
    %v831 = vld [vmem:[#allocation2 + $0xa8] sm:$0xff]
    %v832 = vld [vmem:[#allocation2 + $0xb0] sm:$0xff]
    %v833 = vld [vmem:[#allocation2 + $0xb8] sm:$0xff]
    %v834 = vld [vmem:[#allocation2 + $0xc0] sm:$0xff]
    %v835 = vld [vmem:[#allocation2 + $0xc8] sm:$0xff]
    %v836 = vld [vmem:[#allocation2 + $0xd0] sm:$0xff]
    %v837 = vld [vmem:[#allocation2 + $0xd8] sm:$0xff]
    %v838 = vld [vmem:[#allocation2 + $0xe0] sm:$0xff]
    %v839 = vld [vmem:[#allocation2 + $0xe8] sm:$0xff]
    %v840 = vld [vmem:[#allocation2 + $0xf0] sm:$0xff]
    %v841 = vld [vmem:[#allocation2 + $0xf8] sm:$0xff]
    %v842 = vld [vmem:[#allocation2 + $0x100] sm:$0xff]
    %v843 = vld [vmem:[#allocation2 + $0x108] sm:$0xff]
    %v844 = vld [vmem:[#allocation2 + $0x110] sm:$0xff]
    %v845 = vld [vmem:[#allocation2 + $0x118] sm:$0xff]
    %v846 = vld [vmem:[#allocation2 + $0x120] sm:$0xff]
    %v847 = vld [vmem:[#allocation2 + $0x128] sm:$0xff]
    %v848 = vld [vmem:[#allocation2 + $0x130] sm:$0xff]
    %v849 = vld [vmem:[#allocation2 + $0x138] sm:$0xff]
    %v850 = vld [vmem:[#allocation2 + $0x140] sm:$0xff]
    %v851 = vld [vmem:[#allocation2 + $0x148] sm:$0xff]
    %v852 = vld [vmem:[#allocation2 + $0x150] sm:$0xff]
    %v853 = vld [vmem:[#allocation2 + $0x158] sm:$0xff]
    %v854 = vld [vmem:[#allocation2 + $0x160] sm:$0xff]
    %v855 = vld [vmem:[#allocation2 + $0x168] sm:$0xff]
    %v856 = vld [vmem:[#allocation2 + $0x170] sm:$0xff]
    %v857 = vld [vmem:[#allocation2 + $0x178] sm:$0xff]
    %v858 = vld [vmem:[#allocation2 + $0x180] sm:$0xff]
    %v859 = vld [vmem:[#allocation2 + $0x188] sm:$0xff]
    %v860 = vld [vmem:[#allocation2 + $0x190] sm:$0xff]
    %v861 = vld [vmem:[#allocation2 + $0x198] sm:$0xff]
    %v862 = vld [vmem:[#allocation2 + $0x1a0] sm:$0xff]
    %v863 = vld [vmem:[#allocation2 + $0x1a8] sm:$0xff]
    %v864 = vld [vmem:[#allocation2 + $0x1b0] sm:$0xff]
    %v865 = vld [vmem:[#allocation2 + $0x1b8] sm:$0xff]
    %v866 = vld [vmem:[#allocation2 + $0x1c0] sm:$0xff]
    %v867 = vld [vmem:[#allocation2 + $0x1c8] sm:$0xff]
    %v868 = vld [vmem:[#allocation2 + $0x1d0] sm:$0xff]
    %v869 = vld [vmem:[#allocation2 + $0x1d8] sm:$0xff]
    %v870 = vld [vmem:[#allocation2 + $0x1e0] sm:$0xff]
    %v871 = vld [vmem:[#allocation2 + $0x1e8] sm:$0xff]
    %v872 = vld [vmem:[#allocation2 + $0x1f0] sm:$0xff]
    %v873 = vld [vmem:[#allocation2 + $0x1f8] sm:$0xff]
    %v874 = vld [vmem:[#allocation2 + $0x200] sm:$0xff]
    %v875 = vld [vmem:[#allocation2 + $0x208] sm:$0xff]
    %v876 = vld [vmem:[#allocation2 + $0x210] sm:$0xff]
    %v877 = vld [vmem:[#allocation2 + $0x218] sm:$0xff]
    %v878 = vld [vmem:[#allocation2 + $0x220] sm:$0xff]
    %v879 = vld [vmem:[#allocation2 + $0x228] sm:$0xff]
    %v880 = vld [vmem:[#allocation2 + $0x230] sm:$0xff]
    %v881 = vld [vmem:[#allocation2 + $0x238] sm:$0xff]
    %v882 = vld [vmem:[%s4] sm:$0xff]
    %v883 = vld [vmem:[%s4 + $0x8] sm:$0xff]
    %v884 = vld [vmem:[%s4 + $0x10] sm:$0xff]
    %v885 = vld [vmem:[%s4 + $0x18] sm:$0xff]
    %v886 = vld [vmem:[%s4 + $0x20] sm:$0xff]
    %v887 = vld [vmem:[%s4 + $0x28] sm:$0xff]
    %v888 = vld [vmem:[%s4 + $0x30] sm:$0xff]
    %v889 = vld [vmem:[%s4 + $0x38] sm:$0xff]
    %891 = vset.pattern.permute.xlu0 0
    %892 = vperm.xlu0 %891, %v882
    %v893 = vpop.permute.xlu0 %892
    %896 = vset.pattern.permute.xlu0 0
    %897 = vperm.xlu0 %896, %v883
    %v898 = vpop.permute.xlu0 %897
    %901 = vset.pattern.permute.xlu0 0
    %902 = vperm.xlu0 %901, %v884
    %v903 = vpop.permute.xlu0 %902
    %906 = vset.pattern.permute.xlu0 0
    %907 = vperm.xlu0 %906, %v885
    %v908 = vpop.permute.xlu0 %907
    %911 = vset.pattern.permute.xlu0 0
    %912 = vperm.xlu0 %911, %v886
    %v913 = vpop.permute.xlu0 %912
    %916 = vset.pattern.permute.xlu0 0
    %917 = vperm.xlu0 %916, %v887
    %v918 = vpop.permute.xlu0 %917
    %921 = vset.pattern.permute.xlu0 0
    %922 = vperm.xlu0 %921, %v888
    %v923 = vpop.permute.xlu0 %922
    %926 = vset.pattern.permute.xlu0 0
    %927 = vperm.xlu0 %926, %v889
    %v928 = vpop.permute.xlu0 %927
    %vm930 = vcmask 523264
    %v932 = vsel %vm930, %v774, 0
    %v935 = vsel %vm930, %v779, 0
    %v938 = vsel %vm930, %v784, 0
    %v941 = vsel %vm930, %v789, 0
    %v944 = vsel %vm930, %v794, 0
    %v947 = vsel %vm930, %v799, 0
    %v950 = vsel %vm930, %v804, 0
    %v953 = vsel %vm930, %v809, 0
    %955 = vmatpush.msra.mxu0 %v825
    %956 = vmatpush.msra.mxu0 %v824
    %957 = vmatpush.msra.mxu0 %v823
    %958 = vmatpush.msra.mxu0 %v822
    %959 = vmatpush.msra.mxu0 %v821
    %960 = vmatpush.msra.mxu0 %v820
    %961 = vmatpush.msra.mxu0 %v819
    %962 = vmatpush.msra.mxu0 %v818
    %963 = vmatpush.msra.mxu0 %v817
    %964 = vmatpush.msra.mxu0 %v816
    %965 = vmatpush.msra.mxu0 %v815
    %966 = vmatpush.msra.mxu0 %v814
    %967 = vmatpush.msra.mxu0 %v813
    %968 = vmatpush.msra.mxu0 %v812
    %969 = vmatpush.msra.mxu0 %v811
    %970 = vmatpush.msra.mxu0 %v810
    %971 = vmatmul.f32.gmra.mxu0 %v770
    %v972 = vpop.f32.mrf.mxu0
    %v973 = vadd.f32 %v893, %v972
    %974 = vmatmul.f32.gmra.mxu0 %v775
    %v975 = vpop.f32.mrf.mxu0
    %v976 = vadd.f32 %v898, %v975
    %977 = vmatmul.f32.gmra.mxu0 %v780
    %v978 = vpop.f32.mrf.mxu0
    %v979 = vadd.f32 %v903, %v978
    %980 = vmatmul.f32.gmra.mxu0 %v785
    %v981 = vpop.f32.mrf.mxu0
    %v982 = vadd.f32 %v908, %v981
    %983 = vmatmul.f32.gmra.mxu0 %v790
    %v984 = vpop.f32.mrf.mxu0
    %v985 = vadd.f32 %v913, %v984
    %986 = vmatmul.f32.gmra.mxu0 %v795
    %v987 = vpop.f32.mrf.mxu0
    %v988 = vadd.f32 %v918, %v987
    %989 = vmatmul.f32.gmra.mxu0 %v800
    %v990 = vpop.f32.mrf.mxu0
    %v991 = vadd.f32 %v923, %v990
    %992 = vmatmul.f32.gmra.mxu0 %v805
    %v993 = vpop.f32.mrf.mxu0
    %v994 = vadd.f32 %v928, %v993
    %995 = vdwg.mxu0
    %996 = vmatpush.msra.mxu0 %v841
    %997 = vmatpush.msra.mxu0 %v840
    %998 = vmatpush.msra.mxu0 %v839
    %999 = vmatpush.msra.mxu0 %v838
    %1000 = vmatpush.msra.mxu0 %v837
    %1001 = vmatpush.msra.mxu0 %v836
    %1002 = vmatpush.msra.mxu0 %v835
    %1003 = vmatpush.msra.mxu0 %v834
    %1004 = vmatpush.msra.mxu0 %v833
    %1005 = vmatpush.msra.mxu0 %v832
    %1006 = vmatpush.msra.mxu0 %v831
    %1007 = vmatpush.msra.mxu0 %v830
    %1008 = vmatpush.msra.mxu0 %v829
    %1009 = vmatpush.msra.mxu0 %v828
    %1010 = vmatpush.msra.mxu0 %v827
    %1011 = vmatpush.msra.mxu0 %v826
    %1012 = vmatmul.f32.gmra.mxu0 %v771
    %v1013 = vpop.f32.mrf.mxu0
    %v1014 = vadd.f32 %v973, %v1013
    %1015 = vmatmul.f32.gmra.mxu0 %v776
    %v1016 = vpop.f32.mrf.mxu0
    %v1017 = vadd.f32 %v976, %v1016
    %1018 = vmatmul.f32.gmra.mxu0 %v781
    %v1019 = vpop.f32.mrf.mxu0
    %v1020 = vadd.f32 %v979, %v1019
    %1021 = vmatmul.f32.gmra.mxu0 %v786
    %v1022 = vpop.f32.mrf.mxu0
    %v1023 = vadd.f32 %v982, %v1022
    %1024 = vmatmul.f32.gmra.mxu0 %v791
    %v1025 = vpop.f32.mrf.mxu0
    %v1026 = vadd.f32 %v985, %v1025
    %1027 = vmatmul.f32.gmra.mxu0 %v796
    %v1028 = vpop.f32.mrf.mxu0
    %v1029 = vadd.f32 %v988, %v1028
    %1030 = vmatmul.f32.gmra.mxu0 %v801
    %v1031 = vpop.f32.mrf.mxu0
    %v1032 = vadd.f32 %v991, %v1031
    %1033 = vmatmul.f32.gmra.mxu0 %v806
    %v1034 = vpop.f32.mrf.mxu0
    %v1035 = vadd.f32 %v994, %v1034
    %1036 = vdwg.mxu0
    %1037 = vmatpush.msra.mxu0 %v857
    %1038 = vmatpush.msra.mxu0 %v856
    %1039 = vmatpush.msra.mxu0 %v855
    %1040 = vmatpush.msra.mxu0 %v854
    %1041 = vmatpush.msra.mxu0 %v853
    %1042 = vmatpush.msra.mxu0 %v852
    %1043 = vmatpush.msra.mxu0 %v851
    %1044 = vmatpush.msra.mxu0 %v850
    %1045 = vmatpush.msra.mxu0 %v849
    %1046 = vmatpush.msra.mxu0 %v848
    %1047 = vmatpush.msra.mxu0 %v847
    %1048 = vmatpush.msra.mxu0 %v846
    %1049 = vmatpush.msra.mxu0 %v845
    %1050 = vmatpush.msra.mxu0 %v844
    %1051 = vmatpush.msra.mxu0 %v843
    %1052 = vmatpush.msra.mxu0 %v842
    %1053 = vmatmul.f32.gmra.mxu0 %v772
    %v1054 = vpop.f32.mrf.mxu0
    %v1055 = vadd.f32 %v1014, %v1054
    %1056 = vmatmul.f32.gmra.mxu0 %v777
    %v1057 = vpop.f32.mrf.mxu0
    %v1058 = vadd.f32 %v1017, %v1057
    %1059 = vmatmul.f32.gmra.mxu0 %v782
    %v1060 = vpop.f32.mrf.mxu0
    %v1061 = vadd.f32 %v1020, %v1060
    %1062 = vmatmul.f32.gmra.mxu0 %v787
    %v1063 = vpop.f32.mrf.mxu0
    %v1064 = vadd.f32 %v1023, %v1063
    %1065 = vmatmul.f32.gmra.mxu0 %v792
    %v1066 = vpop.f32.mrf.mxu0
    %v1067 = vadd.f32 %v1026, %v1066
    %1068 = vmatmul.f32.gmra.mxu0 %v797
    %v1069 = vpop.f32.mrf.mxu0
    %v1070 = vadd.f32 %v1029, %v1069
    %1071 = vmatmul.f32.gmra.mxu0 %v802
    %v1072 = vpop.f32.mrf.mxu0
    %v1073 = vadd.f32 %v1032, %v1072
    %1074 = vmatmul.f32.gmra.mxu0 %v807
    %v1075 = vpop.f32.mrf.mxu0
    %v1076 = vadd.f32 %v1035, %v1075
    %1077 = vdwg.mxu0
    %1078 = vmatpush.msra.mxu0 %v873
    %1079 = vmatpush.msra.mxu0 %v872
    %1080 = vmatpush.msra.mxu0 %v871
    %1081 = vmatpush.msra.mxu0 %v870
    %1082 = vmatpush.msra.mxu0 %v869
    %1083 = vmatpush.msra.mxu0 %v868
    %1084 = vmatpush.msra.mxu0 %v867
    %1085 = vmatpush.msra.mxu0 %v866
    %1086 = vmatpush.msra.mxu0 %v865
    %1087 = vmatpush.msra.mxu0 %v864
    %1088 = vmatpush.msra.mxu0 %v863
    %1089 = vmatpush.msra.mxu0 %v862
    %1090 = vmatpush.msra.mxu0 %v861
    %1091 = vmatpush.msra.mxu0 %v860
    %1092 = vmatpush.msra.mxu0 %v859
    %1093 = vmatpush.msra.mxu0 %v858
    %1094 = vmatmul.f32.gmra.mxu0 %v773
    %v1095 = vpop.f32.mrf.mxu0
    %v1096 = vadd.f32 %v1055, %v1095
    %1097 = vmatmul.f32.gmra.mxu0 %v778
    %v1098 = vpop.f32.mrf.mxu0
    %v1099 = vadd.f32 %v1058, %v1098
    %1100 = vmatmul.f32.gmra.mxu0 %v783
    %v1101 = vpop.f32.mrf.mxu0
    %v1102 = vadd.f32 %v1061, %v1101
    %1103 = vmatmul.f32.gmra.mxu0 %v788
    %v1104 = vpop.f32.mrf.mxu0
    %v1105 = vadd.f32 %v1064, %v1104
    %1106 = vmatmul.f32.gmra.mxu0 %v793
    %v1107 = vpop.f32.mrf.mxu0
    %v1108 = vadd.f32 %v1067, %v1107
    %1109 = vmatmul.f32.gmra.mxu0 %v798
    %v1110 = vpop.f32.mrf.mxu0
    %v1111 = vadd.f32 %v1070, %v1110
    %1112 = vmatmul.f32.gmra.mxu0 %v803
    %v1113 = vpop.f32.mrf.mxu0
    %v1114 = vadd.f32 %v1073, %v1113
    %1115 = vmatmul.f32.gmra.mxu0 %v808
    %v1116 = vpop.f32.mrf.mxu0
    %v1117 = vadd.f32 %v1076, %v1116
    %1118 = vdwg.mxu0
    %1119 = vmatpush.msra.mxu0 0.0
    %1120 = vmatpush.msra.mxu0 0.0
    %1121 = vmatpush.msra.mxu0 0.0
    %1122 = vmatpush.msra.mxu0 0.0
    %1123 = vmatpush.msra.mxu0 0.0
    %1124 = vmatpush.msra.mxu0 0.0
    %1125 = vmatpush.msra.mxu0 0.0
    %1126 = vmatpush.msra.mxu0 0.0
    %1127 = vmatpush.msra.mxu0 %v881
    %1128 = vmatpush.msra.mxu0 %v880
    %1129 = vmatpush.msra.mxu0 %v879
    %1130 = vmatpush.msra.mxu0 %v878
    %1131 = vmatpush.msra.mxu0 %v877
    %1132 = vmatpush.msra.mxu0 %v876
    %1133 = vmatpush.msra.mxu0 %v875
    %1134 = vmatpush.msra.mxu0 %v874
    %1135 = vmatmul.f32.gmra.mxu0 %v932
    %v1136 = vpop.f32.mrf.mxu0
    %v1137 = vadd.f32 %v1096, %v1136
    %1138 = vmatmul.f32.gmra.mxu0 %v935
    %v1139 = vpop.f32.mrf.mxu0
    %v1140 = vadd.f32 %v1099, %v1139
    %1141 = vmatmul.f32.gmra.mxu0 %v938
    %v1142 = vpop.f32.mrf.mxu0
    %v1143 = vadd.f32 %v1102, %v1142
    %1144 = vmatmul.f32.gmra.mxu0 %v941
    %v1145 = vpop.f32.mrf.mxu0
    %v1146 = vadd.f32 %v1105, %v1145
    %1147 = vmatmul.f32.gmra.mxu0 %v944
    %v1148 = vpop.f32.mrf.mxu0
    %v1149 = vadd.f32 %v1108, %v1148
    %1150 = vmatmul.f32.gmra.mxu0 %v947
    %v1151 = vpop.f32.mrf.mxu0
    %v1152 = vadd.f32 %v1111, %v1151
    %1153 = vmatmul.f32.gmra.mxu0 %v950
    %v1154 = vpop.f32.mrf.mxu0
    %v1155 = vadd.f32 %v1114, %v1154
    %1156 = vmatmul.f32.gmra.mxu0 %v953
    %v1157 = vpop.f32.mrf.mxu0
    %v1158 = vadd.f32 %v1117, %v1157
    %1159 = vdwg.mxu0
    %v1160 = vmax.f32 %v1137, 0.0
    %v1161 = vmax.f32 %v1140, 0.0
    %v1162 = vmax.f32 %v1143, 0.0
    %v1163 = vmax.f32 %v1146, 0.0
    %v1164 = vmax.f32 %v1149, 0.0
    %v1165 = vmax.f32 %v1152, 0.0
    %v1166 = vmax.f32 %v1155, 0.0
    %v1167 = vmax.f32 %v1158, 0.0
    %1168 = vst.msk [vmem:[%s5] sm:$0xff] %vm48, %v1160
    %1169 = vst.msk [vmem:[%s5 + $0x8] sm:$0xff] %vm48, %v1161
    %1170 = vst.msk [vmem:[%s5 + $0x10] sm:$0xff] %vm48, %v1162
    %1171 = vst.msk [vmem:[%s5 + $0x18] sm:$0xff] %vm48, %v1163
    %1172 = vst.msk [vmem:[%s5 + $0x20] sm:$0xff] %vm48, %v1164
    %1173 = vst.msk [vmem:[%s5 + $0x28] sm:$0xff] %vm48, %v1165
    %1174 = vst.msk [vmem:[%s5 + $0x30] sm:$0xff] %vm48, %v1166
    %1175 = vst.msk [vmem:[%s5 + $0x38] sm:$0xff] %vm48, %v1167
    %s1176 = scalar_lea.vmem %s0, 32
    %v1177 = vld [vmem:[%s1176] sm:$0xff]
    %v1178 = vld [vmem:[%s1176 + $0x8] sm:$0xff]
    %v1179 = vld [vmem:[%s1176 + $0x10] sm:$0xff]
    %v1180 = vld [vmem:[%s1176 + $0x18] sm:$0xff]
    %1181 = vst.msk [vmem:[#allocation2] sm:$0xff] %vm48, %v1177
    %1182 = vst.msk [vmem:[#allocation2 + $0x8] sm:$0xff] %vm48, %v1178
    %1183 = vst.msk [vmem:[#allocation2 + $0x10] sm:$0xff] %vm48, %v1179
    %1184 = vst.msk [vmem:[#allocation2 + $0x18] sm:$0xff] %vm48, %v1180
    %1189 = vrot.lane.b32.xlu0 %v1177, 127
    %v1190 = vpop.permute.xlu0 %1189
    %1191 = vrot.lane.b32.xlu0 %v1178, 127
    %v1192 = vpop.permute.xlu0 %1191
    %1193 = vrot.lane.b32.xlu0 %v1179, 127
    %v1194 = vpop.permute.xlu0 %1193
    %1195 = vrot.lane.b32.xlu0 %v1180, 127
    %v1196 = vpop.permute.xlu0 %1195
    %1201 = vst.msk [vmem:[#allocation2 + $0x20] sm:$0xff] %vm48, %v1190
    %1202 = vst.msk [vmem:[#allocation2 + $0x28] sm:$0xff] %vm48, %v1192
    %1203 = vst.msk [vmem:[#allocation2 + $0x30] sm:$0xff] %vm48, %v1194
    %1204 = vst.msk [vmem:[#allocation2 + $0x38] sm:$0xff] %vm48, %v1196
    %1205 = vrot.lane.b32.xlu0 %v1177, 126
    %v1206 = vpop.permute.xlu0 %1205
    %1207 = vrot.lane.b32.xlu0 %v1178, 126
    %v1208 = vpop.permute.xlu0 %1207
    %1209 = vrot.lane.b32.xlu0 %v1179, 126
    %v1210 = vpop.permute.xlu0 %1209
    %1211 = vrot.lane.b32.xlu0 %v1180, 126
    %v1212 = vpop.permute.xlu0 %1211
    %1217 = vst.msk [vmem:[#allocation2 + $0x40] sm:$0xff] %vm48, %v1206
    %1218 = vst.msk [vmem:[#allocation2 + $0x48] sm:$0xff] %vm48, %v1208
    %1219 = vst.msk [vmem:[#allocation2 + $0x50] sm:$0xff] %vm48, %v1210
    %1220 = vst.msk [vmem:[#allocation2 + $0x58] sm:$0xff] %vm48, %v1212
    %1221 = vrot.lane.b32.xlu0 %v1177, 125
    %v1222 = vpop.permute.xlu0 %1221
    %1223 = vrot.lane.b32.xlu0 %v1178, 125
    %v1224 = vpop.permute.xlu0 %1223
    %1225 = vrot.lane.b32.xlu0 %v1179, 125
    %v1226 = vpop.permute.xlu0 %1225
    %1227 = vrot.lane.b32.xlu0 %v1180, 125
    %v1228 = vpop.permute.xlu0 %1227
    %1233 = vst.msk [vmem:[#allocation2 + $0x60] sm:$0xff] %vm48, %v1222
    %1234 = vst.msk [vmem:[#allocation2 + $0x68] sm:$0xff] %vm48, %v1224
    %1235 = vst.msk [vmem:[#allocation2 + $0x70] sm:$0xff] %vm48, %v1226
    %1236 = vst.msk [vmem:[#allocation2 + $0x78] sm:$0xff] %vm48, %v1228
    %1237 = vrot.lane.b32.xlu0 %v1177, 124
    %v1238 = vpop.permute.xlu0 %1237
    %1239 = vrot.lane.b32.xlu0 %v1178, 124
    %v1240 = vpop.permute.xlu0 %1239
    %1241 = vrot.lane.b32.xlu0 %v1179, 124
    %v1242 = vpop.permute.xlu0 %1241
    %1243 = vrot.lane.b32.xlu0 %v1180, 124
    %v1244 = vpop.permute.xlu0 %1243
    %1249 = vst.msk [vmem:[#allocation2 + $0x80] sm:$0xff] %vm48, %v1238
    %1250 = vst.msk [vmem:[#allocation2 + $0x88] sm:$0xff] %vm48, %v1240
    %1251 = vst.msk [vmem:[#allocation2 + $0x90] sm:$0xff] %vm48, %v1242
    %1252 = vst.msk [vmem:[#allocation2 + $0x98] sm:$0xff] %vm48, %v1244
    %1253 = vrot.lane.b32.xlu0 %v1177, 123
    %v1254 = vpop.permute.xlu0 %1253
    %1255 = vrot.lane.b32.xlu0 %v1178, 123
    %v1256 = vpop.permute.xlu0 %1255
    %1257 = vrot.lane.b32.xlu0 %v1179, 123
    %v1258 = vpop.permute.xlu0 %1257
    %1259 = vrot.lane.b32.xlu0 %v1180, 123
    %v1260 = vpop.permute.xlu0 %1259
    %1265 = vst.msk [vmem:[#allocation2 + $0xa0] sm:$0xff] %vm48, %v1254
    %1266 = vst.msk [vmem:[#allocation2 + $0xa8] sm:$0xff] %vm48, %v1256
    %1267 = vst.msk [vmem:[#allocation2 + $0xb0] sm:$0xff] %vm48, %v1258
    %1268 = vst.msk [vmem:[#allocation2 + $0xb8] sm:$0xff] %vm48, %v1260
    %1269 = vrot.lane.b32.xlu0 %v1177, 122
    %v1270 = vpop.permute.xlu0 %1269
    %1271 = vrot.lane.b32.xlu0 %v1178, 122
    %v1272 = vpop.permute.xlu0 %1271
    %1273 = vrot.lane.b32.xlu0 %v1179, 122
    %v1274 = vpop.permute.xlu0 %1273
    %1275 = vrot.lane.b32.xlu0 %v1180, 122
    %v1276 = vpop.permute.xlu0 %1275
    %1281 = vst.msk [vmem:[#allocation2 + $0xc0] sm:$0xff] %vm48, %v1270
    %1282 = vst.msk [vmem:[#allocation2 + $0xc8] sm:$0xff] %vm48, %v1272
    %1283 = vst.msk [vmem:[#allocation2 + $0xd0] sm:$0xff] %vm48, %v1274
    %1284 = vst.msk [vmem:[#allocation2 + $0xd8] sm:$0xff] %vm48, %v1276
    %1285 = vrot.lane.b32.xlu0 %v1177, 121
    %v1286 = vpop.permute.xlu0 %1285
    %1287 = vrot.lane.b32.xlu0 %v1178, 121
    %v1288 = vpop.permute.xlu0 %1287
    %1289 = vrot.lane.b32.xlu0 %v1179, 121
    %v1290 = vpop.permute.xlu0 %1289
    %1291 = vrot.lane.b32.xlu0 %v1180, 121
    %v1292 = vpop.permute.xlu0 %1291
    %1297 = vst.msk [vmem:[#allocation2 + $0xe0] sm:$0xff] %vm48, %v1286
    %1298 = vst.msk [vmem:[#allocation2 + $0xe8] sm:$0xff] %vm48, %v1288
    %1299 = vst.msk [vmem:[#allocation2 + $0xf0] sm:$0xff] %vm48, %v1290
    %1300 = vst.msk [vmem:[#allocation2 + $0xf8] sm:$0xff] %vm48, %v1292
    %1301 = vrot.lane.b32.xlu0 %v1177, 120
    %v1302 = vpop.permute.xlu0 %1301
    %1303 = vrot.lane.b32.xlu0 %v1178, 120
    %v1304 = vpop.permute.xlu0 %1303
    %1305 = vrot.lane.b32.xlu0 %v1179, 120
    %v1306 = vpop.permute.xlu0 %1305
    %1307 = vrot.lane.b32.xlu0 %v1180, 120
    %v1308 = vpop.permute.xlu0 %1307
    %1313 = vst.msk [vmem:[#allocation2 + $0x100] sm:$0xff] %vm48, %v1302
    %1314 = vst.msk [vmem:[#allocation2 + $0x108] sm:$0xff] %vm48, %v1304
    %1315 = vst.msk [vmem:[#allocation2 + $0x110] sm:$0xff] %vm48, %v1306
    %1316 = vst.msk [vmem:[#allocation2 + $0x118] sm:$0xff] %vm48, %v1308
    %v1317 = vld [vmem:[%s1] sm:$0xff]
    %v1318 = vld [vmem:[%s1 + $0x8] sm:$0xff]
    %v1319 = vld [vmem:[%s1 + $0x10] sm:$0xff]
    %v1320 = vld [vmem:[%s1 + $0x18] sm:$0xff]
    %v1321 = vld [vmem:[%s1 + $0x20] sm:$0xff]
    %v1322 = vld [vmem:[%s1 + $0x28] sm:$0xff]
    %v1323 = vld [vmem:[%s1 + $0x30] sm:$0xff]
    %v1324 = vld [vmem:[%s1 + $0x38] sm:$0xff]
    %v1325 = vld [vmem:[%s1 + $0x40] sm:$0xff]
    %v1326 = vld [vmem:[%s1 + $0x48] sm:$0xff]
    %v1327 = vld [vmem:[%s1 + $0x50] sm:$0xff]
    %v1328 = vld [vmem:[%s1 + $0x58] sm:$0xff]
    %v1329 = vld [vmem:[%s1 + $0x60] sm:$0xff]
    %v1330 = vld [vmem:[%s1 + $0x68] sm:$0xff]
    %v1331 = vld [vmem:[%s1 + $0x70] sm:$0xff]
    %v1332 = vld [vmem:[%s1 + $0x78] sm:$0xff]
    %v1333 = vld [vmem:[%s1 + $0x80] sm:$0xff]
    %v1334 = vld [vmem:[%s1 + $0x88] sm:$0xff]
    %v1335 = vld [vmem:[%s1 + $0x90] sm:$0xff]
    %v1336 = vld [vmem:[%s1 + $0x98] sm:$0xff]
    %v1337 = vld [vmem:[%s1 + $0xa0] sm:$0xff]
    %v1338 = vld [vmem:[%s1 + $0xa8] sm:$0xff]
    %v1339 = vld [vmem:[%s1 + $0xb0] sm:$0xff]
    %v1340 = vld [vmem:[%s1 + $0xb8] sm:$0xff]
    %v1341 = vld [vmem:[#allocation2] sm:$0xff]
    %v1342 = vld [vmem:[#allocation2 + $0x8] sm:$0xff]
    %v1343 = vld [vmem:[#allocation2 + $0x10] sm:$0xff]
    %v1344 = vld [vmem:[#allocation2 + $0x18] sm:$0xff]
    %v1345 = vld [vmem:[#allocation2 + $0x20] sm:$0xff]
    %v1346 = vld [vmem:[#allocation2 + $0x28] sm:$0xff]
    %v1347 = vld [vmem:[#allocation2 + $0x30] sm:$0xff]
    %v1348 = vld [vmem:[#allocation2 + $0x38] sm:$0xff]
    %v1349 = vld [vmem:[#allocation2 + $0x40] sm:$0xff]
    %v1350 = vld [vmem:[#allocation2 + $0x48] sm:$0xff]
    %v1351 = vld [vmem:[#allocation2 + $0x50] sm:$0xff]
    %v1352 = vld [vmem:[#allocation2 + $0x58] sm:$0xff]
    %v1353 = vld [vmem:[#allocation2 + $0x60] sm:$0xff]
    %v1354 = vld [vmem:[#allocation2 + $0x68] sm:$0xff]
    %v1355 = vld [vmem:[#allocation2 + $0x70] sm:$0xff]
    %v1356 = vld [vmem:[#allocation2 + $0x78] sm:$0xff]
    %v1357 = vld [vmem:[#allocation2 + $0x80] sm:$0xff]
    %v1358 = vld [vmem:[#allocation2 + $0x88] sm:$0xff]
    %v1359 = vld [vmem:[#allocation2 + $0x90] sm:$0xff]
    %v1360 = vld [vmem:[#allocation2 + $0x98] sm:$0xff]
    %v1361 = vld [vmem:[#allocation2 + $0xa0] sm:$0xff]
    %v1362 = vld [vmem:[#allocation2 + $0xa8] sm:$0xff]
    %v1363 = vld [vmem:[#allocation2 + $0xb0] sm:$0xff]
    %v1364 = vld [vmem:[#allocation2 + $0xb8] sm:$0xff]
    %v1365 = vld [vmem:[#allocation2 + $0xc0] sm:$0xff]
    %v1366 = vld [vmem:[#allocation2 + $0xc8] sm:$0xff]
    %v1367 = vld [vmem:[#allocation2 + $0xd0] sm:$0xff]
    %v1368 = vld [vmem:[#allocation2 + $0xd8] sm:$0xff]
    %v1369 = vld [vmem:[#allocation2 + $0xe0] sm:$0xff]
    %v1370 = vld [vmem:[#allocation2 + $0xe8] sm:$0xff]
    %v1371 = vld [vmem:[#allocation2 + $0xf0] sm:$0xff]
    %v1372 = vld [vmem:[#allocation2 + $0xf8] sm:$0xff]
    %v1373 = vld [vmem:[#allocation2 + $0x100] sm:$0xff]
    %v1374 = vld [vmem:[#allocation2 + $0x108] sm:$0xff]
    %v1375 = vld [vmem:[#allocation2 + $0x110] sm:$0xff]
    %v1376 = vld [vmem:[#allocation2 + $0x118] sm:$0xff]
    %v1377 = vld [vmem:[%s2] sm:$0xff]
    %v1378 = vld [vmem:[%s2 + $0x8] sm:$0xff]
    %v1379 = vld [vmem:[%s2 + $0x10] sm:$0xff]
    %v1380 = vld [vmem:[%s2 + $0x18] sm:$0xff]
    %v1381 = vld [vmem:[%s2 + $0x20] sm:$0xff]
    %v1382 = vld [vmem:[%s2 + $0x28] sm:$0xff]
    %v1383 = vld [vmem:[%s2 + $0x30] sm:$0xff]
    %v1384 = vld [vmem:[%s2 + $0x38] sm:$0xff]
    %1386 = vset.pattern.permute.xlu0 0
    %1387 = vperm.xlu0 %1386, %v1377
    %v1388 = vpop.permute.xlu0 %1387
    %1391 = vset.pattern.permute.xlu0 0
    %1392 = vperm.xlu0 %1391, %v1378
    %v1393 = vpop.permute.xlu0 %1392
    %1396 = vset.pattern.permute.xlu0 0
    %1397 = vperm.xlu0 %1396, %v1379
    %v1398 = vpop.permute.xlu0 %1397
    %1401 = vset.pattern.permute.xlu0 0
    %1402 = vperm.xlu0 %1401, %v1380
    %v1403 = vpop.permute.xlu0 %1402
    %1406 = vset.pattern.permute.xlu0 0
    %1407 = vperm.xlu0 %1406, %v1381
    %v1408 = vpop.permute.xlu0 %1407
    %1411 = vset.pattern.permute.xlu0 0
    %1412 = vperm.xlu0 %1411, %v1382
    %v1413 = vpop.permute.xlu0 %1412
    %1416 = vset.pattern.permute.xlu0 0
    %1417 = vperm.xlu0 %1416, %v1383
    %v1418 = vpop.permute.xlu0 %1417
    %1421 = vset.pattern.permute.xlu0 0
    %1422 = vperm.xlu0 %1421, %v1384
    %v1423 = vpop.permute.xlu0 %1422
    %v1426 = vsel %vm293, %v1319, 0
    %v1429 = vsel %vm293, %v1322, 0
    %v1432 = vsel %vm293, %v1325, 0
    %v1435 = vsel %vm293, %v1328, 0
    %v1438 = vsel %vm293, %v1331, 0
    %v1441 = vsel %vm293, %v1334, 0
    %v1444 = vsel %vm293, %v1337, 0
    %v1447 = vsel %vm293, %v1340, 0
    %1449 = vmatpush.msra.mxu0 %v1356
    %1450 = vmatpush.msra.mxu0 %v1355
    %1451 = vmatpush.msra.mxu0 %v1354
    %1452 = vmatpush.msra.mxu0 %v1353
    %1453 = vmatpush.msra.mxu0 %v1352
    %1454 = vmatpush.msra.mxu0 %v1351
    %1455 = vmatpush.msra.mxu0 %v1350
    %1456 = vmatpush.msra.mxu0 %v1349
    %1457 = vmatpush.msra.mxu0 %v1348
    %1458 = vmatpush.msra.mxu0 %v1347
    %1459 = vmatpush.msra.mxu0 %v1346
    %1460 = vmatpush.msra.mxu0 %v1345
    %1461 = vmatpush.msra.mxu0 %v1344
    %1462 = vmatpush.msra.mxu0 %v1343
    %1463 = vmatpush.msra.mxu0 %v1342
    %1464 = vmatpush.msra.mxu0 %v1341
    %1465 = vmatmul.f32.gmra.mxu0 %v1317
    %v1466 = vpop.f32.mrf.mxu0
    %v1467 = vadd.f32 %v1388, %v1466
    %1468 = vmatmul.f32.gmra.mxu0 %v1320
    %v1469 = vpop.f32.mrf.mxu0
    %v1470 = vadd.f32 %v1393, %v1469
    %1471 = vmatmul.f32.gmra.mxu0 %v1323
    %v1472 = vpop.f32.mrf.mxu0
    %v1473 = vadd.f32 %v1398, %v1472
    %1474 = vmatmul.f32.gmra.mxu0 %v1326
    %v1475 = vpop.f32.mrf.mxu0
    %v1476 = vadd.f32 %v1403, %v1475
    %1477 = vmatmul.f32.gmra.mxu0 %v1329
    %v1478 = vpop.f32.mrf.mxu0
    %v1479 = vadd.f32 %v1408, %v1478
    %1480 = vmatmul.f32.gmra.mxu0 %v1332
    %v1481 = vpop.f32.mrf.mxu0
    %v1482 = vadd.f32 %v1413, %v1481
    %1483 = vmatmul.f32.gmra.mxu0 %v1335
    %v1484 = vpop.f32.mrf.mxu0
    %v1485 = vadd.f32 %v1418, %v1484
    %1486 = vmatmul.f32.gmra.mxu0 %v1338
    %v1487 = vpop.f32.mrf.mxu0
    %v1488 = vadd.f32 %v1423, %v1487
    %1489 = vdwg.mxu0
    %1490 = vmatpush.msra.mxu0 %v1372
    %1491 = vmatpush.msra.mxu0 %v1371
    %1492 = vmatpush.msra.mxu0 %v1370
    %1493 = vmatpush.msra.mxu0 %v1369
    %1494 = vmatpush.msra.mxu0 %v1368
    %1495 = vmatpush.msra.mxu0 %v1367
    %1496 = vmatpush.msra.mxu0 %v1366
    %1497 = vmatpush.msra.mxu0 %v1365
    %1498 = vmatpush.msra.mxu0 %v1364
    %1499 = vmatpush.msra.mxu0 %v1363
    %1500 = vmatpush.msra.mxu0 %v1362
    %1501 = vmatpush.msra.mxu0 %v1361
    %1502 = vmatpush.msra.mxu0 %v1360
    %1503 = vmatpush.msra.mxu0 %v1359
    %1504 = vmatpush.msra.mxu0 %v1358
    %1505 = vmatpush.msra.mxu0 %v1357
    %1506 = vmatmul.f32.gmra.mxu0 %v1318
    %v1507 = vpop.f32.mrf.mxu0
    %v1508 = vadd.f32 %v1467, %v1507
    %1509 = vmatmul.f32.gmra.mxu0 %v1321
    %v1510 = vpop.f32.mrf.mxu0
    %v1511 = vadd.f32 %v1470, %v1510
    %1512 = vmatmul.f32.gmra.mxu0 %v1324
    %v1513 = vpop.f32.mrf.mxu0
    %v1514 = vadd.f32 %v1473, %v1513
    %1515 = vmatmul.f32.gmra.mxu0 %v1327
    %v1516 = vpop.f32.mrf.mxu0
    %v1517 = vadd.f32 %v1476, %v1516
    %1518 = vmatmul.f32.gmra.mxu0 %v1330
    %v1519 = vpop.f32.mrf.mxu0
    %v1520 = vadd.f32 %v1479, %v1519
    %1521 = vmatmul.f32.gmra.mxu0 %v1333
    %v1522 = vpop.f32.mrf.mxu0
    %v1523 = vadd.f32 %v1482, %v1522
    %1524 = vmatmul.f32.gmra.mxu0 %v1336
    %v1525 = vpop.f32.mrf.mxu0
    %v1526 = vadd.f32 %v1485, %v1525
    %1527 = vmatmul.f32.gmra.mxu0 %v1339
    %v1528 = vpop.f32.mrf.mxu0
    %v1529 = vadd.f32 %v1488, %v1528
    %1530 = vdwg.mxu0
    %1531 = vmatpush.msra.mxu0 0.0
    %1532 = vmatpush.msra.mxu0 0.0
    %1533 = vmatpush.msra.mxu0 0.0
    %1534 = vmatpush.msra.mxu0 0.0
    %1535 = vmatpush.msra.mxu0 0.0
    %1536 = vmatpush.msra.mxu0 0.0
    %1537 = vmatpush.msra.mxu0 0.0
    %1538 = vmatpush.msra.mxu0 0.0
    %1539 = vmatpush.msra.mxu0 0.0
    %1540 = vmatpush.msra.mxu0 0.0
    %1541 = vmatpush.msra.mxu0 0.0
    %1542 = vmatpush.msra.mxu0 0.0
    %1543 = vmatpush.msra.mxu0 %v1376
    %1544 = vmatpush.msra.mxu0 %v1375
    %1545 = vmatpush.msra.mxu0 %v1374
    %1546 = vmatpush.msra.mxu0 %v1373
    %1547 = vmatmul.f32.gmra.mxu0 %v1426
    %v1548 = vpop.f32.mrf.mxu0
    %v1549 = vadd.f32 %v1508, %v1548
    %1550 = vmatmul.f32.gmra.mxu0 %v1429
    %v1551 = vpop.f32.mrf.mxu0
    %v1552 = vadd.f32 %v1511, %v1551
    %1553 = vmatmul.f32.gmra.mxu0 %v1432
    %v1554 = vpop.f32.mrf.mxu0
    %v1555 = vadd.f32 %v1514, %v1554
    %1556 = vmatmul.f32.gmra.mxu0 %v1435
    %v1557 = vpop.f32.mrf.mxu0
    %v1558 = vadd.f32 %v1517, %v1557
    %1559 = vmatmul.f32.gmra.mxu0 %v1438
    %v1560 = vpop.f32.mrf.mxu0
    %v1561 = vadd.f32 %v1520, %v1560
    %1562 = vmatmul.f32.gmra.mxu0 %v1441
    %v1563 = vpop.f32.mrf.mxu0
    %v1564 = vadd.f32 %v1523, %v1563
    %1565 = vmatmul.f32.gmra.mxu0 %v1444
    %v1566 = vpop.f32.mrf.mxu0
    %v1567 = vadd.f32 %v1526, %v1566
    %1568 = vmatmul.f32.gmra.mxu0 %v1447
    %v1569 = vpop.f32.mrf.mxu0
    %v1570 = vadd.f32 %v1529, %v1569
    %1571 = vdwg.mxu0
    %v1572 = vmax.f32 %v1549, 0.0
    %v1573 = vmax.f32 %v1552, 0.0
    %v1574 = vmax.f32 %v1555, 0.0
    %v1575 = vmax.f32 %v1558, 0.0
    %v1576 = vmax.f32 %v1561, 0.0
    %v1577 = vmax.f32 %v1564, 0.0
    %v1578 = vmax.f32 %v1567, 0.0
    %v1579 = vmax.f32 %v1570, 0.0
    %1588 = vrot.lane.b32.xlu0 %v1572, 4
    %v1589 = vpop.permute.xlu0 %1588
    %1590 = vrot.lane.b32.xlu0 %v1573, 4
    %v1591 = vpop.permute.xlu0 %1590
    %1592 = vrot.lane.b32.xlu0 %v1574, 4
    %v1593 = vpop.permute.xlu0 %1592
    %1594 = vrot.lane.b32.xlu0 %v1575, 4
    %v1595 = vpop.permute.xlu0 %1594
    %1596 = vrot.lane.b32.xlu0 %v1576, 4
    %v1597 = vpop.permute.xlu0 %1596
    %1598 = vrot.lane.b32.xlu0 %v1577, 4
    %v1599 = vpop.permute.xlu0 %1598
    %1600 = vrot.lane.b32.xlu0 %v1578, 4
    %v1601 = vpop.permute.xlu0 %1600
    %1602 = vrot.lane.b32.xlu0 %v1579, 4
    %v1603 = vpop.permute.xlu0 %1602
    %1612 = vst.msk [vmem:[#allocation3] sm:$0xff] %vm481, %v1589
    %1613 = vst.msk [vmem:[#allocation3 + $0x8] sm:$0xff] %vm481, %v1591
    %1614 = vst.msk [vmem:[#allocation3 + $0x10] sm:$0xff] %vm481, %v1593
    %1615 = vst.msk [vmem:[#allocation3 + $0x18] sm:$0xff] %vm481, %v1595
    %1616 = vst.msk [vmem:[#allocation3 + $0x20] sm:$0xff] %vm481, %v1597
    %1617 = vst.msk [vmem:[#allocation3 + $0x28] sm:$0xff] %vm481, %v1599
    %1618 = vst.msk [vmem:[#allocation3 + $0x30] sm:$0xff] %vm481, %v1601
    %1619 = vst.msk [vmem:[#allocation3 + $0x38] sm:$0xff] %vm481, %v1603
    %v1620 = vld [vmem:[#allocation3] sm:$0xff]
    %v1621 = vld [vmem:[#allocation3 + $0x8] sm:$0xff]
    %v1622 = vld [vmem:[#allocation3 + $0x10] sm:$0xff]
    %v1623 = vld [vmem:[#allocation3 + $0x18] sm:$0xff]
    %v1624 = vld [vmem:[#allocation3 + $0x20] sm:$0xff]
    %v1625 = vld [vmem:[#allocation3 + $0x28] sm:$0xff]
    %v1626 = vld [vmem:[#allocation3 + $0x30] sm:$0xff]
    %v1627 = vld [vmem:[#allocation3 + $0x38] sm:$0xff]
    %1628 = vst.msk [vmem:[#allocation2] sm:$0xff] %vm48, %v1620
    %1629 = vst.msk [vmem:[#allocation2 + $0x8] sm:$0xff] %vm48, %v1621
    %1630 = vst.msk [vmem:[#allocation2 + $0x10] sm:$0xff] %vm48, %v1622
    %1631 = vst.msk [vmem:[#allocation2 + $0x18] sm:$0xff] %vm48, %v1623
    %1632 = vst.msk [vmem:[#allocation2 + $0x20] sm:$0xff] %vm48, %v1624
    %1633 = vst.msk [vmem:[#allocation2 + $0x28] sm:$0xff] %vm48, %v1625
    %1634 = vst.msk [vmem:[#allocation2 + $0x30] sm:$0xff] %vm48, %v1626
    %1635 = vst.msk [vmem:[#allocation2 + $0x38] sm:$0xff] %vm48, %v1627
    %1644 = vrot.lane.b32.xlu0 %v1620, 127
    %v1645 = vpop.permute.xlu0 %1644
    %1646 = vrot.lane.b32.xlu0 %v1621, 127
    %v1647 = vpop.permute.xlu0 %1646
    %1648 = vrot.lane.b32.xlu0 %v1622, 127
    %v1649 = vpop.permute.xlu0 %1648
    %1650 = vrot.lane.b32.xlu0 %v1623, 127
    %v1651 = vpop.permute.xlu0 %1650
    %1652 = vrot.lane.b32.xlu0 %v1624, 127
    %v1653 = vpop.permute.xlu0 %1652
    %1654 = vrot.lane.b32.xlu0 %v1625, 127
    %v1655 = vpop.permute.xlu0 %1654
    %1656 = vrot.lane.b32.xlu0 %v1626, 127
    %v1657 = vpop.permute.xlu0 %1656
    %1658 = vrot.lane.b32.xlu0 %v1627, 127
    %v1659 = vpop.permute.xlu0 %1658
    %1668 = vst.msk [vmem:[#allocation2 + $0x40] sm:$0xff] %vm48, %v1645
    %1669 = vst.msk [vmem:[#allocation2 + $0x48] sm:$0xff] %vm48, %v1647
    %1670 = vst.msk [vmem:[#allocation2 + $0x50] sm:$0xff] %vm48, %v1649
    %1671 = vst.msk [vmem:[#allocation2 + $0x58] sm:$0xff] %vm48, %v1651
    %1672 = vst.msk [vmem:[#allocation2 + $0x60] sm:$0xff] %vm48, %v1653
    %1673 = vst.msk [vmem:[#allocation2 + $0x68] sm:$0xff] %vm48, %v1655
    %1674 = vst.msk [vmem:[#allocation2 + $0x70] sm:$0xff] %vm48, %v1657
    %1675 = vst.msk [vmem:[#allocation2 + $0x78] sm:$0xff] %vm48, %v1659
    %1676 = vrot.lane.b32.xlu0 %v1620, 126
    %v1677 = vpop.permute.xlu0 %1676
    %1678 = vrot.lane.b32.xlu0 %v1621, 126
    %v1679 = vpop.permute.xlu0 %1678
    %1680 = vrot.lane.b32.xlu0 %v1622, 126
    %v1681 = vpop.permute.xlu0 %1680
    %1682 = vrot.lane.b32.xlu0 %v1623, 126
    %v1683 = vpop.permute.xlu0 %1682
    %1684 = vrot.lane.b32.xlu0 %v1624, 126
    %v1685 = vpop.permute.xlu0 %1684
    %1686 = vrot.lane.b32.xlu0 %v1625, 126
    %v1687 = vpop.permute.xlu0 %1686
    %1688 = vrot.lane.b32.xlu0 %v1626, 126
    %v1689 = vpop.permute.xlu0 %1688
    %1690 = vrot.lane.b32.xlu0 %v1627, 126
    %v1691 = vpop.permute.xlu0 %1690
    %1700 = vst.msk [vmem:[#allocation2 + $0x80] sm:$0xff] %vm48, %v1677
    %1701 = vst.msk [vmem:[#allocation2 + $0x88] sm:$0xff] %vm48, %v1679
    %1702 = vst.msk [vmem:[#allocation2 + $0x90] sm:$0xff] %vm48, %v1681
    %1703 = vst.msk [vmem:[#allocation2 + $0x98] sm:$0xff] %vm48, %v1683
    %1704 = vst.msk [vmem:[#allocation2 + $0xa0] sm:$0xff] %vm48, %v1685
    %1705 = vst.msk [vmem:[#allocation2 + $0xa8] sm:$0xff] %vm48, %v1687
    %1706 = vst.msk [vmem:[#allocation2 + $0xb0] sm:$0xff] %vm48, %v1689
    %1707 = vst.msk [vmem:[#allocation2 + $0xb8] sm:$0xff] %vm48, %v1691
    %1708 = vrot.lane.b32.xlu0 %v1620, 125
    %v1709 = vpop.permute.xlu0 %1708
    %1710 = vrot.lane.b32.xlu0 %v1621, 125
    %v1711 = vpop.permute.xlu0 %1710
    %1712 = vrot.lane.b32.xlu0 %v1622, 125
    %v1713 = vpop.permute.xlu0 %1712
    %1714 = vrot.lane.b32.xlu0 %v1623, 125
    %v1715 = vpop.permute.xlu0 %1714
    %1716 = vrot.lane.b32.xlu0 %v1624, 125
    %v1717 = vpop.permute.xlu0 %1716
    %1718 = vrot.lane.b32.xlu0 %v1625, 125
    %v1719 = vpop.permute.xlu0 %1718
    %1720 = vrot.lane.b32.xlu0 %v1626, 125
    %v1721 = vpop.permute.xlu0 %1720
    %1722 = vrot.lane.b32.xlu0 %v1627, 125
    %v1723 = vpop.permute.xlu0 %1722
    %1732 = vst.msk [vmem:[#allocation2 + $0xc0] sm:$0xff] %vm48, %v1709
    %1733 = vst.msk [vmem:[#allocation2 + $0xc8] sm:$0xff] %vm48, %v1711
    %1734 = vst.msk [vmem:[#allocation2 + $0xd0] sm:$0xff] %vm48, %v1713
    %1735 = vst.msk [vmem:[#allocation2 + $0xd8] sm:$0xff] %vm48, %v1715
    %1736 = vst.msk [vmem:[#allocation2 + $0xe0] sm:$0xff] %vm48, %v1717
    %1737 = vst.msk [vmem:[#allocation2 + $0xe8] sm:$0xff] %vm48, %v1719
    %1738 = vst.msk [vmem:[#allocation2 + $0xf0] sm:$0xff] %vm48, %v1721
    %1739 = vst.msk [vmem:[#allocation2 + $0xf8] sm:$0xff] %vm48, %v1723
    %1740 = vrot.lane.b32.xlu0 %v1620, 124
    %v1741 = vpop.permute.xlu0 %1740
    %1742 = vrot.lane.b32.xlu0 %v1621, 124
    %v1743 = vpop.permute.xlu0 %1742
    %1744 = vrot.lane.b32.xlu0 %v1622, 124
    %v1745 = vpop.permute.xlu0 %1744
    %1746 = vrot.lane.b32.xlu0 %v1623, 124
    %v1747 = vpop.permute.xlu0 %1746
    %1748 = vrot.lane.b32.xlu0 %v1624, 124
    %v1749 = vpop.permute.xlu0 %1748
    %1750 = vrot.lane.b32.xlu0 %v1625, 124
    %v1751 = vpop.permute.xlu0 %1750
    %1752 = vrot.lane.b32.xlu0 %v1626, 124
    %v1753 = vpop.permute.xlu0 %1752
    %1754 = vrot.lane.b32.xlu0 %v1627, 124
    %v1755 = vpop.permute.xlu0 %1754
    %1764 = vst.msk [vmem:[#allocation2 + $0x100] sm:$0xff] %vm48, %v1741
    %1765 = vst.msk [vmem:[#allocation2 + $0x108] sm:$0xff] %vm48, %v1743
    %1766 = vst.msk [vmem:[#allocation2 + $0x110] sm:$0xff] %vm48, %v1745
    %1767 = vst.msk [vmem:[#allocation2 + $0x118] sm:$0xff] %vm48, %v1747
    %1768 = vst.msk [vmem:[#allocation2 + $0x120] sm:$0xff] %vm48, %v1749
    %1769 = vst.msk [vmem:[#allocation2 + $0x128] sm:$0xff] %vm48, %v1751
    %1770 = vst.msk [vmem:[#allocation2 + $0x130] sm:$0xff] %vm48, %v1753
    %1771 = vst.msk [vmem:[#allocation2 + $0x138] sm:$0xff] %vm48, %v1755
    %1772 = vrot.lane.b32.xlu0 %v1620, 123
    %v1773 = vpop.permute.xlu0 %1772
    %1774 = vrot.lane.b32.xlu0 %v1621, 123
    %v1775 = vpop.permute.xlu0 %1774
    %1776 = vrot.lane.b32.xlu0 %v1622, 123
    %v1777 = vpop.permute.xlu0 %1776
    %1778 = vrot.lane.b32.xlu0 %v1623, 123
    %v1779 = vpop.permute.xlu0 %1778
    %1780 = vrot.lane.b32.xlu0 %v1624, 123
    %v1781 = vpop.permute.xlu0 %1780
    %1782 = vrot.lane.b32.xlu0 %v1625, 123
    %v1783 = vpop.permute.xlu0 %1782
    %1784 = vrot.lane.b32.xlu0 %v1626, 123
    %v1785 = vpop.permute.xlu0 %1784
    %1786 = vrot.lane.b32.xlu0 %v1627, 123
    %v1787 = vpop.permute.xlu0 %1786
    %1796 = vst.msk [vmem:[#allocation2 + $0x140] sm:$0xff] %vm48, %v1773
    %1797 = vst.msk [vmem:[#allocation2 + $0x148] sm:$0xff] %vm48, %v1775
    %1798 = vst.msk [vmem:[#allocation2 + $0x150] sm:$0xff] %vm48, %v1777
    %1799 = vst.msk [vmem:[#allocation2 + $0x158] sm:$0xff] %vm48, %v1779
    %1800 = vst.msk [vmem:[#allocation2 + $0x160] sm:$0xff] %vm48, %v1781
    %1801 = vst.msk [vmem:[#allocation2 + $0x168] sm:$0xff] %vm48, %v1783
    %1802 = vst.msk [vmem:[#allocation2 + $0x170] sm:$0xff] %vm48, %v1785
    %1803 = vst.msk [vmem:[#allocation2 + $0x178] sm:$0xff] %vm48, %v1787
    %1804 = vrot.lane.b32.xlu0 %v1620, 122
    %v1805 = vpop.permute.xlu0 %1804
    %1806 = vrot.lane.b32.xlu0 %v1621, 122
    %v1807 = vpop.permute.xlu0 %1806
    %1808 = vrot.lane.b32.xlu0 %v1622, 122
    %v1809 = vpop.permute.xlu0 %1808
    %1810 = vrot.lane.b32.xlu0 %v1623, 122
    %v1811 = vpop.permute.xlu0 %1810
    %1812 = vrot.lane.b32.xlu0 %v1624, 122
    %v1813 = vpop.permute.xlu0 %1812
    %1814 = vrot.lane.b32.xlu0 %v1625, 122
    %v1815 = vpop.permute.xlu0 %1814
    %1816 = vrot.lane.b32.xlu0 %v1626, 122
    %v1817 = vpop.permute.xlu0 %1816
    %1818 = vrot.lane.b32.xlu0 %v1627, 122
    %v1819 = vpop.permute.xlu0 %1818
    %1828 = vst.msk [vmem:[#allocation2 + $0x180] sm:$0xff] %vm48, %v1805
    %1829 = vst.msk [vmem:[#allocation2 + $0x188] sm:$0xff] %vm48, %v1807
    %1830 = vst.msk [vmem:[#allocation2 + $0x190] sm:$0xff] %vm48, %v1809
    %1831 = vst.msk [vmem:[#allocation2 + $0x198] sm:$0xff] %vm48, %v1811
    %1832 = vst.msk [vmem:[#allocation2 + $0x1a0] sm:$0xff] %vm48, %v1813
    %1833 = vst.msk [vmem:[#allocation2 + $0x1a8] sm:$0xff] %vm48, %v1815
    %1834 = vst.msk [vmem:[#allocation2 + $0x1b0] sm:$0xff] %vm48, %v1817
    %1835 = vst.msk [vmem:[#allocation2 + $0x1b8] sm:$0xff] %vm48, %v1819
    %1836 = vrot.lane.b32.xlu0 %v1620, 121
    %v1837 = vpop.permute.xlu0 %1836
    %1838 = vrot.lane.b32.xlu0 %v1621, 121
    %v1839 = vpop.permute.xlu0 %1838
    %1840 = vrot.lane.b32.xlu0 %v1622, 121
    %v1841 = vpop.permute.xlu0 %1840
    %1842 = vrot.lane.b32.xlu0 %v1623, 121
    %v1843 = vpop.permute.xlu0 %1842
    %1844 = vrot.lane.b32.xlu0 %v1624, 121
    %v1845 = vpop.permute.xlu0 %1844
    %1846 = vrot.lane.b32.xlu0 %v1625, 121
    %v1847 = vpop.permute.xlu0 %1846
    %1848 = vrot.lane.b32.xlu0 %v1626, 121
    %v1849 = vpop.permute.xlu0 %1848
    %1850 = vrot.lane.b32.xlu0 %v1627, 121
    %v1851 = vpop.permute.xlu0 %1850
    %1860 = vst.msk [vmem:[#allocation2 + $0x1c0] sm:$0xff] %vm48, %v1837
    %1861 = vst.msk [vmem:[#allocation2 + $0x1c8] sm:$0xff] %vm48, %v1839
    %1862 = vst.msk [vmem:[#allocation2 + $0x1d0] sm:$0xff] %vm48, %v1841
    %1863 = vst.msk [vmem:[#allocation2 + $0x1d8] sm:$0xff] %vm48, %v1843
    %1864 = vst.msk [vmem:[#allocation2 + $0x1e0] sm:$0xff] %vm48, %v1845
    %1865 = vst.msk [vmem:[#allocation2 + $0x1e8] sm:$0xff] %vm48, %v1847
    %1866 = vst.msk [vmem:[#allocation2 + $0x1f0] sm:$0xff] %vm48, %v1849
    %1867 = vst.msk [vmem:[#allocation2 + $0x1f8] sm:$0xff] %vm48, %v1851
    %1868 = vrot.lane.b32.xlu0 %v1620, 120
    %v1869 = vpop.permute.xlu0 %1868
    %1870 = vrot.lane.b32.xlu0 %v1621, 120
    %v1871 = vpop.permute.xlu0 %1870
    %1872 = vrot.lane.b32.xlu0 %v1622, 120
    %v1873 = vpop.permute.xlu0 %1872
    %1874 = vrot.lane.b32.xlu0 %v1623, 120
    %v1875 = vpop.permute.xlu0 %1874
    %1876 = vrot.lane.b32.xlu0 %v1624, 120
    %v1877 = vpop.permute.xlu0 %1876
    %1878 = vrot.lane.b32.xlu0 %v1625, 120
    %v1879 = vpop.permute.xlu0 %1878
    %1880 = vrot.lane.b32.xlu0 %v1626, 120
    %v1881 = vpop.permute.xlu0 %1880
    %1882 = vrot.lane.b32.xlu0 %v1627, 120
    %v1883 = vpop.permute.xlu0 %1882
    %1892 = vst.msk [vmem:[#allocation2 + $0x200] sm:$0xff] %vm48, %v1869
    %1893 = vst.msk [vmem:[#allocation2 + $0x208] sm:$0xff] %vm48, %v1871
    %1894 = vst.msk [vmem:[#allocation2 + $0x210] sm:$0xff] %vm48, %v1873
    %1895 = vst.msk [vmem:[#allocation2 + $0x218] sm:$0xff] %vm48, %v1875
    %1896 = vst.msk [vmem:[#allocation2 + $0x220] sm:$0xff] %vm48, %v1877
    %1897 = vst.msk [vmem:[#allocation2 + $0x228] sm:$0xff] %vm48, %v1879
    %1898 = vst.msk [vmem:[#allocation2 + $0x230] sm:$0xff] %vm48, %v1881
    %1899 = vst.msk [vmem:[#allocation2 + $0x238] sm:$0xff] %vm48, %v1883
    %v1900 = vld [vmem:[#allocation4] sm:$0xff]
    %v1901 = vld [vmem:[#allocation4 + $0x8] sm:$0xff]
    %v1902 = vld [vmem:[#allocation4 + $0x10] sm:$0xff]
    %v1903 = vld [vmem:[#allocation4 + $0x18] sm:$0xff]
    %v1904 = vld [vmem:[#allocation4 + $0x20] sm:$0xff]
    %v1905 = vld [vmem:[#allocation4 + $0x28] sm:$0xff]
    %v1906 = vld [vmem:[#allocation4 + $0x30] sm:$0xff]
    %v1907 = vld [vmem:[#allocation4 + $0x38] sm:$0xff]
    %v1908 = vld [vmem:[#allocation4 + $0x40] sm:$0xff]
    %v1909 = vld [vmem:[#allocation4 + $0x48] sm:$0xff]
    %v1910 = vld [vmem:[#allocation4 + $0x50] sm:$0xff]
    %v1911 = vld [vmem:[#allocation4 + $0x58] sm:$0xff]
    %v1912 = vld [vmem:[#allocation4 + $0x60] sm:$0xff]
    %v1913 = vld [vmem:[#allocation4 + $0x68] sm:$0xff]
    %v1914 = vld [vmem:[#allocation4 + $0x70] sm:$0xff]
    %v1915 = vld [vmem:[#allocation4 + $0x78] sm:$0xff]
    %v1916 = vld [vmem:[#allocation4 + $0x80] sm:$0xff]
    %v1917 = vld [vmem:[#allocation4 + $0x88] sm:$0xff]
    %v1918 = vld [vmem:[#allocation4 + $0x90] sm:$0xff]
    %v1919 = vld [vmem:[#allocation4 + $0x98] sm:$0xff]
    %v1920 = vld [vmem:[#allocation4 + $0xa0] sm:$0xff]
    %v1921 = vld [vmem:[#allocation4 + $0xa8] sm:$0xff]
    %v1922 = vld [vmem:[#allocation4 + $0xb0] sm:$0xff]
    %v1923 = vld [vmem:[#allocation4 + $0xb8] sm:$0xff]
    %v1924 = vld [vmem:[#allocation4 + $0xc0] sm:$0xff]
    %v1925 = vld [vmem:[#allocation4 + $0xc8] sm:$0xff]
    %v1926 = vld [vmem:[#allocation4 + $0xd0] sm:$0xff]
    %v1927 = vld [vmem:[#allocation4 + $0xd8] sm:$0xff]
    %v1928 = vld [vmem:[#allocation4 + $0xe0] sm:$0xff]
    %v1929 = vld [vmem:[#allocation4 + $0xe8] sm:$0xff]
    %v1930 = vld [vmem:[#allocation4 + $0xf0] sm:$0xff]
    %v1931 = vld [vmem:[#allocation4 + $0xf8] sm:$0xff]
    %v1932 = vld [vmem:[#allocation4 + $0x100] sm:$0xff]
    %v1933 = vld [vmem:[#allocation4 + $0x108] sm:$0xff]
    %v1934 = vld [vmem:[#allocation4 + $0x110] sm:$0xff]
    %v1935 = vld [vmem:[#allocation4 + $0x118] sm:$0xff]
    %v1936 = vld [vmem:[#allocation4 + $0x120] sm:$0xff]
    %v1937 = vld [vmem:[#allocation4 + $0x128] sm:$0xff]
    %v1938 = vld [vmem:[#allocation4 + $0x130] sm:$0xff]
    %v1939 = vld [vmem:[#allocation4 + $0x138] sm:$0xff]
    %v1940 = vld [vmem:[#allocation2] sm:$0xff]
    %v1941 = vld [vmem:[#allocation2 + $0x8] sm:$0xff]
    %v1942 = vld [vmem:[#allocation2 + $0x10] sm:$0xff]
    %v1943 = vld [vmem:[#allocation2 + $0x18] sm:$0xff]
    %v1944 = vld [vmem:[#allocation2 + $0x20] sm:$0xff]
    %v1945 = vld [vmem:[#allocation2 + $0x28] sm:$0xff]
    %v1946 = vld [vmem:[#allocation2 + $0x30] sm:$0xff]
    %v1947 = vld [vmem:[#allocation2 + $0x38] sm:$0xff]
    %v1948 = vld [vmem:[#allocation2 + $0x40] sm:$0xff]
    %v1949 = vld [vmem:[#allocation2 + $0x48] sm:$0xff]
    %v1950 = vld [vmem:[#allocation2 + $0x50] sm:$0xff]
    %v1951 = vld [vmem:[#allocation2 + $0x58] sm:$0xff]
    %v1952 = vld [vmem:[#allocation2 + $0x60] sm:$0xff]
    %v1953 = vld [vmem:[#allocation2 + $0x68] sm:$0xff]
    %v1954 = vld [vmem:[#allocation2 + $0x70] sm:$0xff]
    %v1955 = vld [vmem:[#allocation2 + $0x78] sm:$0xff]
    %v1956 = vld [vmem:[#allocation2 + $0x80] sm:$0xff]
    %v1957 = vld [vmem:[#allocation2 + $0x88] sm:$0xff]
    %v1958 = vld [vmem:[#allocation2 + $0x90] sm:$0xff]
    %v1959 = vld [vmem:[#allocation2 + $0x98] sm:$0xff]
    %v1960 = vld [vmem:[#allocation2 + $0xa0] sm:$0xff]
    %v1961 = vld [vmem:[#allocation2 + $0xa8] sm:$0xff]
    %v1962 = vld [vmem:[#allocation2 + $0xb0] sm:$0xff]
    %v1963 = vld [vmem:[#allocation2 + $0xb8] sm:$0xff]
    %v1964 = vld [vmem:[#allocation2 + $0xc0] sm:$0xff]
    %v1965 = vld [vmem:[#allocation2 + $0xc8] sm:$0xff]
    %v1966 = vld [vmem:[#allocation2 + $0xd0] sm:$0xff]
    %v1967 = vld [vmem:[#allocation2 + $0xd8] sm:$0xff]
    %v1968 = vld [vmem:[#allocation2 + $0xe0] sm:$0xff]
    %v1969 = vld [vmem:[#allocation2 + $0xe8] sm:$0xff]
    %v1970 = vld [vmem:[#allocation2 + $0xf0] sm:$0xff]
    %v1971 = vld [vmem:[#allocation2 + $0xf8] sm:$0xff]
    %v1972 = vld [vmem:[#allocation2 + $0x100] sm:$0xff]
    %v1973 = vld [vmem:[#allocation2 + $0x108] sm:$0xff]
    %v1974 = vld [vmem:[#allocation2 + $0x110] sm:$0xff]
    %v1975 = vld [vmem:[#allocation2 + $0x118] sm:$0xff]
    %v1976 = vld [vmem:[#allocation2 + $0x120] sm:$0xff]
    %v1977 = vld [vmem:[#allocation2 + $0x128] sm:$0xff]
    %v1978 = vld [vmem:[#allocation2 + $0x130] sm:$0xff]
    %v1979 = vld [vmem:[#allocation2 + $0x138] sm:$0xff]
    %v1980 = vld [vmem:[#allocation2 + $0x140] sm:$0xff]
    %v1981 = vld [vmem:[#allocation2 + $0x148] sm:$0xff]
    %v1982 = vld [vmem:[#allocation2 + $0x150] sm:$0xff]
    %v1983 = vld [vmem:[#allocation2 + $0x158] sm:$0xff]
    %v1984 = vld [vmem:[#allocation2 + $0x160] sm:$0xff]
    %v1985 = vld [vmem:[#allocation2 + $0x168] sm:$0xff]
    %v1986 = vld [vmem:[#allocation2 + $0x170] sm:$0xff]
    %v1987 = vld [vmem:[#allocation2 + $0x178] sm:$0xff]
    %v1988 = vld [vmem:[#allocation2 + $0x180] sm:$0xff]
    %v1989 = vld [vmem:[#allocation2 + $0x188] sm:$0xff]
    %v1990 = vld [vmem:[#allocation2 + $0x190] sm:$0xff]
    %v1991 = vld [vmem:[#allocation2 + $0x198] sm:$0xff]
    %v1992 = vld [vmem:[#allocation2 + $0x1a0] sm:$0xff]
    %v1993 = vld [vmem:[#allocation2 + $0x1a8] sm:$0xff]
    %v1994 = vld [vmem:[#allocation2 + $0x1b0] sm:$0xff]
    %v1995 = vld [vmem:[#allocation2 + $0x1b8] sm:$0xff]
    %v1996 = vld [vmem:[#allocation2 + $0x1c0] sm:$0xff]
    %v1997 = vld [vmem:[#allocation2 + $0x1c8] sm:$0xff]
    %v1998 = vld [vmem:[#allocation2 + $0x1d0] sm:$0xff]
    %v1999 = vld [vmem:[#allocation2 + $0x1d8] sm:$0xff]
    %v2000 = vld [vmem:[#allocation2 + $0x1e0] sm:$0xff]
    %v2001 = vld [vmem:[#allocation2 + $0x1e8] sm:$0xff]
    %v2002 = vld [vmem:[#allocation2 + $0x1f0] sm:$0xff]
    %v2003 = vld [vmem:[#allocation2 + $0x1f8] sm:$0xff]
    %v2004 = vld [vmem:[#allocation2 + $0x200] sm:$0xff]
    %v2005 = vld [vmem:[#allocation2 + $0x208] sm:$0xff]
    %v2006 = vld [vmem:[#allocation2 + $0x210] sm:$0xff]
    %v2007 = vld [vmem:[#allocation2 + $0x218] sm:$0xff]
    %v2008 = vld [vmem:[#allocation2 + $0x220] sm:$0xff]
    %v2009 = vld [vmem:[#allocation2 + $0x228] sm:$0xff]
    %v2010 = vld [vmem:[#allocation2 + $0x230] sm:$0xff]
    %v2011 = vld [vmem:[#allocation2 + $0x238] sm:$0xff]
    %v2012 = vld [vmem:[%s4] sm:$0xff]
    %v2013 = vld [vmem:[%s4 + $0x8] sm:$0xff]
    %v2014 = vld [vmem:[%s4 + $0x10] sm:$0xff]
    %v2015 = vld [vmem:[%s4 + $0x18] sm:$0xff]
    %v2016 = vld [vmem:[%s4 + $0x20] sm:$0xff]
    %v2017 = vld [vmem:[%s4 + $0x28] sm:$0xff]
    %v2018 = vld [vmem:[%s4 + $0x30] sm:$0xff]
    %v2019 = vld [vmem:[%s4 + $0x38] sm:$0xff]
    %2021 = vset.pattern.permute.xlu0 0
    %2022 = vperm.xlu0 %2021, %v2012
    %v2023 = vpop.permute.xlu0 %2022
    %2026 = vset.pattern.permute.xlu0 0
    %2027 = vperm.xlu0 %2026, %v2013
    %v2028 = vpop.permute.xlu0 %2027
    %2031 = vset.pattern.permute.xlu0 0
    %2032 = vperm.xlu0 %2031, %v2014
    %v2033 = vpop.permute.xlu0 %2032
    %2036 = vset.pattern.permute.xlu0 0
    %2037 = vperm.xlu0 %2036, %v2015
    %v2038 = vpop.permute.xlu0 %2037
    %2041 = vset.pattern.permute.xlu0 0
    %2042 = vperm.xlu0 %2041, %v2016
    %v2043 = vpop.permute.xlu0 %2042
    %2046 = vset.pattern.permute.xlu0 0
    %2047 = vperm.xlu0 %2046, %v2017
    %v2048 = vpop.permute.xlu0 %2047
    %2051 = vset.pattern.permute.xlu0 0
    %2052 = vperm.xlu0 %2051, %v2018
    %v2053 = vpop.permute.xlu0 %2052
    %2056 = vset.pattern.permute.xlu0 0
    %2057 = vperm.xlu0 %2056, %v2019
    %v2058 = vpop.permute.xlu0 %2057
    %v2061 = vsel %vm930, %v1904, 0
    %v2064 = vsel %vm930, %v1909, 0
    %v2067 = vsel %vm930, %v1914, 0
    %v2070 = vsel %vm930, %v1919, 0
    %v2073 = vsel %vm930, %v1924, 0
    %v2076 = vsel %vm930, %v1929, 0
    %v2079 = vsel %vm930, %v1934, 0
    %v2082 = vsel %vm930, %v1939, 0
    %2084 = vmatpush.msra.mxu0 %v1955
    %2085 = vmatpush.msra.mxu0 %v1954
    %2086 = vmatpush.msra.mxu0 %v1953
    %2087 = vmatpush.msra.mxu0 %v1952
    %2088 = vmatpush.msra.mxu0 %v1951
    %2089 = vmatpush.msra.mxu0 %v1950
    %2090 = vmatpush.msra.mxu0 %v1949
    %2091 = vmatpush.msra.mxu0 %v1948
    %2092 = vmatpush.msra.mxu0 %v1947
    %2093 = vmatpush.msra.mxu0 %v1946
    %2094 = vmatpush.msra.mxu0 %v1945
    %2095 = vmatpush.msra.mxu0 %v1944
    %2096 = vmatpush.msra.mxu0 %v1943
    %2097 = vmatpush.msra.mxu0 %v1942
    %2098 = vmatpush.msra.mxu0 %v1941
    %2099 = vmatpush.msra.mxu0 %v1940
    %2100 = vmatmul.f32.gmra.mxu0 %v1900
    %v2101 = vpop.f32.mrf.mxu0
    %v2102 = vadd.f32 %v2023, %v2101
    %2103 = vmatmul.f32.gmra.mxu0 %v1905
    %v2104 = vpop.f32.mrf.mxu0
    %v2105 = vadd.f32 %v2028, %v2104
    %2106 = vmatmul.f32.gmra.mxu0 %v1910
    %v2107 = vpop.f32.mrf.mxu0
    %v2108 = vadd.f32 %v2033, %v2107
    %2109 = vmatmul.f32.gmra.mxu0 %v1915
    %v2110 = vpop.f32.mrf.mxu0
    %v2111 = vadd.f32 %v2038, %v2110
    %2112 = vmatmul.f32.gmra.mxu0 %v1920
    %v2113 = vpop.f32.mrf.mxu0
    %v2114 = vadd.f32 %v2043, %v2113
    %2115 = vmatmul.f32.gmra.mxu0 %v1925
    %v2116 = vpop.f32.mrf.mxu0
    %v2117 = vadd.f32 %v2048, %v2116
    %2118 = vmatmul.f32.gmra.mxu0 %v1930
    %v2119 = vpop.f32.mrf.mxu0
    %v2120 = vadd.f32 %v2053, %v2119
    %2121 = vmatmul.f32.gmra.mxu0 %v1935
    %v2122 = vpop.f32.mrf.mxu0
    %v2123 = vadd.f32 %v2058, %v2122
    %2124 = vdwg.mxu0
    %2125 = vmatpush.msra.mxu0 %v1971
    %2126 = vmatpush.msra.mxu0 %v1970
    %2127 = vmatpush.msra.mxu0 %v1969
    %2128 = vmatpush.msra.mxu0 %v1968
    %2129 = vmatpush.msra.mxu0 %v1967
    %2130 = vmatpush.msra.mxu0 %v1966
    %2131 = vmatpush.msra.mxu0 %v1965
    %2132 = vmatpush.msra.mxu0 %v1964
    %2133 = vmatpush.msra.mxu0 %v1963
    %2134 = vmatpush.msra.mxu0 %v1962
    %2135 = vmatpush.msra.mxu0 %v1961
    %2136 = vmatpush.msra.mxu0 %v1960
    %2137 = vmatpush.msra.mxu0 %v1959
    %2138 = vmatpush.msra.mxu0 %v1958
    %2139 = vmatpush.msra.mxu0 %v1957
    %2140 = vmatpush.msra.mxu0 %v1956
    %2141 = vmatmul.f32.gmra.mxu0 %v1901
    %v2142 = vpop.f32.mrf.mxu0
    %v2143 = vadd.f32 %v2102, %v2142
    %2144 = vmatmul.f32.gmra.mxu0 %v1906
    %v2145 = vpop.f32.mrf.mxu0
    %v2146 = vadd.f32 %v2105, %v2145
    %2147 = vmatmul.f32.gmra.mxu0 %v1911
    %v2148 = vpop.f32.mrf.mxu0
    %v2149 = vadd.f32 %v2108, %v2148
    %2150 = vmatmul.f32.gmra.mxu0 %v1916
    %v2151 = vpop.f32.mrf.mxu0
    %v2152 = vadd.f32 %v2111, %v2151
    %2153 = vmatmul.f32.gmra.mxu0 %v1921
    %v2154 = vpop.f32.mrf.mxu0
    %v2155 = vadd.f32 %v2114, %v2154
    %2156 = vmatmul.f32.gmra.mxu0 %v1926
    %v2157 = vpop.f32.mrf.mxu0
    %v2158 = vadd.f32 %v2117, %v2157
    %2159 = vmatmul.f32.gmra.mxu0 %v1931
    %v2160 = vpop.f32.mrf.mxu0
    %v2161 = vadd.f32 %v2120, %v2160
    %2162 = vmatmul.f32.gmra.mxu0 %v1936
    %v2163 = vpop.f32.mrf.mxu0
    %v2164 = vadd.f32 %v2123, %v2163
    %2165 = vdwg.mxu0
    %2166 = vmatpush.msra.mxu0 %v1987
    %2167 = vmatpush.msra.mxu0 %v1986
    %2168 = vmatpush.msra.mxu0 %v1985
    %2169 = vmatpush.msra.mxu0 %v1984
    %2170 = vmatpush.msra.mxu0 %v1983
    %2171 = vmatpush.msra.mxu0 %v1982
    %2172 = vmatpush.msra.mxu0 %v1981
    %2173 = vmatpush.msra.mxu0 %v1980
    %2174 = vmatpush.msra.mxu0 %v1979
    %2175 = vmatpush.msra.mxu0 %v1978
    %2176 = vmatpush.msra.mxu0 %v1977
    %2177 = vmatpush.msra.mxu0 %v1976
    %2178 = vmatpush.msra.mxu0 %v1975
    %2179 = vmatpush.msra.mxu0 %v1974
    %2180 = vmatpush.msra.mxu0 %v1973
    %2181 = vmatpush.msra.mxu0 %v1972
    %2182 = vmatmul.f32.gmra.mxu0 %v1902
    %v2183 = vpop.f32.mrf.mxu0
    %v2184 = vadd.f32 %v2143, %v2183
    %2185 = vmatmul.f32.gmra.mxu0 %v1907
    %v2186 = vpop.f32.mrf.mxu0
    %v2187 = vadd.f32 %v2146, %v2186
    %2188 = vmatmul.f32.gmra.mxu0 %v1912
    %v2189 = vpop.f32.mrf.mxu0
    %v2190 = vadd.f32 %v2149, %v2189
    %2191 = vmatmul.f32.gmra.mxu0 %v1917
    %v2192 = vpop.f32.mrf.mxu0
    %v2193 = vadd.f32 %v2152, %v2192
    %2194 = vmatmul.f32.gmra.mxu0 %v1922
    %v2195 = vpop.f32.mrf.mxu0
    %v2196 = vadd.f32 %v2155, %v2195
    %2197 = vmatmul.f32.gmra.mxu0 %v1927
    %v2198 = vpop.f32.mrf.mxu0
    %v2199 = vadd.f32 %v2158, %v2198
    %2200 = vmatmul.f32.gmra.mxu0 %v1932
    %v2201 = vpop.f32.mrf.mxu0
    %v2202 = vadd.f32 %v2161, %v2201
    %2203 = vmatmul.f32.gmra.mxu0 %v1937
    %v2204 = vpop.f32.mrf.mxu0
    %v2205 = vadd.f32 %v2164, %v2204
    %2206 = vdwg.mxu0
    %2207 = vmatpush.msra.mxu0 %v2003
    %2208 = vmatpush.msra.mxu0 %v2002
    %2209 = vmatpush.msra.mxu0 %v2001
    %2210 = vmatpush.msra.mxu0 %v2000
    %2211 = vmatpush.msra.mxu0 %v1999
    %2212 = vmatpush.msra.mxu0 %v1998
    %2213 = vmatpush.msra.mxu0 %v1997
    %2214 = vmatpush.msra.mxu0 %v1996
    %2215 = vmatpush.msra.mxu0 %v1995
    %2216 = vmatpush.msra.mxu0 %v1994
    %2217 = vmatpush.msra.mxu0 %v1993
    %2218 = vmatpush.msra.mxu0 %v1992
    %2219 = vmatpush.msra.mxu0 %v1991
    %2220 = vmatpush.msra.mxu0 %v1990
    %2221 = vmatpush.msra.mxu0 %v1989
    %2222 = vmatpush.msra.mxu0 %v1988
    %2223 = vmatmul.f32.gmra.mxu0 %v1903
    %v2224 = vpop.f32.mrf.mxu0
    %v2225 = vadd.f32 %v2184, %v2224
    %2226 = vmatmul.f32.gmra.mxu0 %v1908
    %v2227 = vpop.f32.mrf.mxu0
    %v2228 = vadd.f32 %v2187, %v2227
    %2229 = vmatmul.f32.gmra.mxu0 %v1913
    %v2230 = vpop.f32.mrf.mxu0
    %v2231 = vadd.f32 %v2190, %v2230
    %2232 = vmatmul.f32.gmra.mxu0 %v1918
    %v2233 = vpop.f32.mrf.mxu0
    %v2234 = vadd.f32 %v2193, %v2233
    %2235 = vmatmul.f32.gmra.mxu0 %v1923
    %v2236 = vpop.f32.mrf.mxu0
    %v2237 = vadd.f32 %v2196, %v2236
    %2238 = vmatmul.f32.gmra.mxu0 %v1928
    %v2239 = vpop.f32.mrf.mxu0
    %v2240 = vadd.f32 %v2199, %v2239
    %2241 = vmatmul.f32.gmra.mxu0 %v1933
    %v2242 = vpop.f32.mrf.mxu0
    %v2243 = vadd.f32 %v2202, %v2242
    %2244 = vmatmul.f32.gmra.mxu0 %v1938
    %v2245 = vpop.f32.mrf.mxu0
    %v2246 = vadd.f32 %v2205, %v2245
    %2247 = vdwg.mxu0
    %2248 = vmatpush.msra.mxu0 0.0
    %2249 = vmatpush.msra.mxu0 0.0
    %2250 = vmatpush.msra.mxu0 0.0
    %2251 = vmatpush.msra.mxu0 0.0
    %2252 = vmatpush.msra.mxu0 0.0
    %2253 = vmatpush.msra.mxu0 0.0
    %2254 = vmatpush.msra.mxu0 0.0
    %2255 = vmatpush.msra.mxu0 0.0
    %2256 = vmatpush.msra.mxu0 %v2011
    %2257 = vmatpush.msra.mxu0 %v2010
    %2258 = vmatpush.msra.mxu0 %v2009
    %2259 = vmatpush.msra.mxu0 %v2008
    %2260 = vmatpush.msra.mxu0 %v2007
    %2261 = vmatpush.msra.mxu0 %v2006
    %2262 = vmatpush.msra.mxu0 %v2005
    %2263 = vmatpush.msra.mxu0 %v2004
    %2264 = vmatmul.f32.gmra.mxu0 %v2061
    %v2265 = vpop.f32.mrf.mxu0
    %v2266 = vadd.f32 %v2225, %v2265
    %2267 = vmatmul.f32.gmra.mxu0 %v2064
    %v2268 = vpop.f32.mrf.mxu0
    %v2269 = vadd.f32 %v2228, %v2268
    %2270 = vmatmul.f32.gmra.mxu0 %v2067
    %v2271 = vpop.f32.mrf.mxu0
    %v2272 = vadd.f32 %v2231, %v2271
    %2273 = vmatmul.f32.gmra.mxu0 %v2070
    %v2274 = vpop.f32.mrf.mxu0
    %v2275 = vadd.f32 %v2234, %v2274
    %2276 = vmatmul.f32.gmra.mxu0 %v2073
    %v2277 = vpop.f32.mrf.mxu0
    %v2278 = vadd.f32 %v2237, %v2277
    %2279 = vmatmul.f32.gmra.mxu0 %v2076
    %v2280 = vpop.f32.mrf.mxu0
    %v2281 = vadd.f32 %v2240, %v2280
    %2282 = vmatmul.f32.gmra.mxu0 %v2079
    %v2283 = vpop.f32.mrf.mxu0
    %v2284 = vadd.f32 %v2243, %v2283
    %2285 = vmatmul.f32.gmra.mxu0 %v2082
    %v2286 = vpop.f32.mrf.mxu0
    %v2287 = vadd.f32 %v2246, %v2286
    %2288 = vdwg.mxu0
    %v2289 = vmax.f32 %v2266, 0.0
    %v2290 = vmax.f32 %v2269, 0.0
    %v2291 = vmax.f32 %v2272, 0.0
    %v2292 = vmax.f32 %v2275, 0.0
    %v2293 = vmax.f32 %v2278, 0.0
    %v2294 = vmax.f32 %v2281, 0.0
    %v2295 = vmax.f32 %v2284, 0.0
    %v2296 = vmax.f32 %v2287, 0.0
    %s2297 = scalar_lea.vmem %s5, 64
    %2298 = vst.msk [vmem:[%s2297] sm:$0xff] %vm48, %v2289
    %2299 = vst.msk [vmem:[%s2297 + $0x8] sm:$0xff] %vm48, %v2290
    %2300 = vst.msk [vmem:[%s2297 + $0x10] sm:$0xff] %vm48, %v2291
    %2301 = vst.msk [vmem:[%s2297 + $0x18] sm:$0xff] %vm48, %v2292
    %2302 = vst.msk [vmem:[%s2297 + $0x20] sm:$0xff] %vm48, %v2293
    %2303 = vst.msk [vmem:[%s2297 + $0x28] sm:$0xff] %vm48, %v2294
    %2304 = vst.msk [vmem:[%s2297 + $0x30] sm:$0xff] %vm48, %v2295
    %2305 = vst.msk [vmem:[%s2297 + $0x38] sm:$0xff] %vm48, %v2296
    // Predicated region
    $region26: #{cnn_forward.2} parent=1 // pred_check
      _
    $region27: #{cnn_forward.2} parent=1 // pred_check_branch
      %2307 = sbr.rel (0) target = $region29
    $region28: #{cnn_forward.2} parent=1 // pred_region
      _
    $region29: #{cnn_forward.2} parent=1 // pred_fallthru
      _
    // Predicated region
    $region30: #{cnn_forward.2} parent=1 // pred_check
      _
    $region31: #{cnn_forward.2} parent=1 // pred_check_branch
      %2309 = sbr.rel (0) target = $region33
    $region32: #{cnn_forward.2} parent=1 // pred_region
      _
    $region33: #{cnn_forward.2} parent=1 // pred_fallthru
      _
    %2310 = vsyncpa [#allocation5], 1

</llo_original>
